<compile_context>
chip_gen: v6e
topology: v6e:2x2x1
jax: 0.10.0
libtpu: 0.0.40
codegen_flags: <defaults>
</compile_context>

<pallas_src>
import functools

import jax
import jax.numpy as jnp
from jax import lax
from jax.experimental import pallas as pl
from jax.experimental.pallas import tpu as pltpu


def _tent_weights(gf, size):
    """gf: (..., 1, T) fractional grid coordinate -> (..., size, T) edge-clamped tent weights."""
    f32 = jnp.float32
    out_shape = gf.shape[:-2] + (size, gf.shape[-1])
    cells = lax.broadcasted_iota(jnp.int32, out_shape, len(out_shape) - 2)
    fidx = jnp.floor(gf - 0.5)
    w = jnp.zeros(out_shape, f32)
    for d in (0, 1):  # the two tent taps, clamped to the grid edge (matches the CUDA op)
        idx = fidx + d
        wd = jnp.maximum(1.0 - jnp.abs(idx + 0.5 - gf), 0.0)        # (..., 1, T)
        cell = jnp.clip(idx.astype(jnp.int32), 0, size - 1)         # (..., 1, T)
        w = w + jnp.where(cell == cells, wd, 0.0)                   # (..., size, T)
    return w


def _bsa_kernel(grid_ref, coords_ref, guide_ref, image_ref, out_ref, *,
                B, GH, GW, GD, GC_pad, NOUT_pad, J_pad, TILE, precision, mxu_dtype):
    f32 = jnp.float32

    # ---- separable spatial tent weights, computed once per tile, shared by all batches
    gy = coords_ref[0:1, :]                                          # (1, TILE) fractional y
    gx = coords_ref[1:2, :]                                          # (1, TILE) fractional x
    wy = _tent_weights(gy, GH)                                       # (GH, TILE) f32
    wx = _tent_weights(gx, GW)                                       # (GW, TILE) f32
    # outer product -> dense spatial weights feeding the MXU: (GH*GW, TILE)
    w_sp = (wy[:, None, :] * wx[None, :, :]).reshape(GH * GW, TILE)

    # ---- MXU hot path: batch folded into M.  [B*GD*GC_pad, GH*GW] @ [GH*GW, TILE]
    coeff_zc = jnp.dot(grid_ref[...], w_sp.astype(mxu_dtype),
                       preferred_element_type=f32, precision=precision)
    # GC_pad % 8 == 0, so this split is sublane-aligned (no relayout).
    c4 = coeff_zc.reshape(B, GD, GC_pad, TILE)

    # ---- data-dependent depth tent weights from the guide
    gz = guide_ref[...].astype(f32) * GD                              # (B, 1, TILE)
    wz = _tent_weights(gz, GD)                                        # (B, GD, TILE)

    # ---- depth collapse: full-sublane block MACs, wz row sublane-broadcast over GC_pad
    coeff = c4[:, 0] * wz[:, 0:1, :]                                  # (B, GC_pad, TILE)
    for z in range(1, GD):
        coeff = coeff + c4[:, z] * wz[:, z:z + 1, :]

    # ---- affine apply with the ones-extended image: out[b,i] = sum_j coeff[b,i,j]*img1[b,j]
    img1 = image_ref[...].astype(f32)                                 # (B, J_pad, TILE)
    cij = coeff.reshape(B, NOUT_pad, J_pad, TILE)
    out = jnp.sum(cij * img1[:, None, :, :], axis=2)                  # (B, NOUT_pad, TILE)

    # single lane-dense store of the whole output block
    out_ref[...] = out.astype(out_ref.dtype)


def bilateral_slice_apply(grid, guide, image, *, tile_p=4096, precision=None,
                          vmem_budget_bytes=None, vmem_limit_bytes=None):
    B, GC, GD, GH, GW = grid.shape
    Bi, NIN, H, W = image.shape
    assert Bi == B and guide.shape == (B, H, W)
    assert GC % (NIN + 1) == 0
    NOUT = GC // (NIN + 1)
    J_pad = NIN + 1
    # Pad the output-channel count so GC_pad = NOUT_pad*J_pad is a multiple of 8:
    # keeps every in-kernel reshape/slice sublane-aligned (pad rows are zero -> no-op).
    NOUT_pad = NOUT
    while (NOUT_pad * J_pad) % 8:
        NOUT_pad += 1
    GC_pad = NOUT_pad * J_pad
    P = H * W
    lane = 128

    # ---- MXU operand staging: bf16 when the default single-pass MXU path is used anyway.
    default_prec = precision in (None, lax.Precision.DEFAULT, "default")
    mxu_dtype = jnp.bfloat16 if (default_prec and grid.dtype == jnp.float32) else jnp.float32

    # ---- pick the pixel-tile size (lane dimension of every block) from a VMEM budget.
    itm = 4
    per_lane = itm * (1.6 * GH * GW                # w_sp (+ bf16 staging copy)
                      + 2.3 * B * GD * GC_pad      # coeff_zc + depth-collapse temporaries
                      + 2.0 * B * GC_pad           # coeff + apply temporaries
                      + 3.0 * B * GD               # wz + tent scratch
                      + 2.0 * (GH + GW) + 16)      # wy/wx + misc
    per_lane += 2 * itm * (2 + B * (1 + J_pad + NOUT_pad))   # double-buffered I/O blocks
    budget = float(vmem_budget_bytes if vmem_budget_bytes is not None else 20 * 2**20)
    tile_mem_cap = max(lane, int(budget / per_lane) // lane * lane)
    TILE = min(int(tile_p), tile_mem_cap)
    if P > lane:
        # keep >= 2 tiles so both TensorCores get work on dual-core parts (v7x)
        TILE = min(TILE, pl.cdiv(pl.cdiv(P, 2), lane) * lane)
    TILE = max(lane, min(TILE, pl.cdiv(P, lane) * lane))
    TILE = (TILE // lane) * lane
    P_pad = pl.cdiv(P, TILE) * TILE
    n_tiles = P_pad // TILE
    if vmem_limit_bytes is None:
        vmem_limit_bytes = 48 * 2**20   # explicit scoped-VMEM limit (safe on v5e/v6e/v7x)

    # ---- layout glue (plain JAX, outside the kernel) ------------------------------------
    # bilateral grid rows ordered (b, z, i, j), zero-padded to (NOUT_pad, J_pad):
    g = jnp.transpose(grid, (0, 2, 1, 3, 4)).reshape(B, GD, NOUT, NIN + 1, GH * GW)
    g = jnp.pad(g, ((0, 0), (0, 0), (0, NOUT_pad - NOUT), (0, J_pad - (NIN + 1)), (0, 0)))
    grid_k = g.reshape(B * GD * GC_pad, GH * GW).astype(mxu_dtype)

    # per-pixel fractional grid coordinates (removes in-kernel int div/mod)
    p_i = jnp.arange(P_pad, dtype=jnp.int32)
    gy_f = ((p_i // W).astype(jnp.float32) + 0.5) * (GH / H)
    gx_f = ((p_i % W).astype(jnp.float32) + 0.5) * (GW / W)
    coords = jnp.stack([gy_f, gx_f], axis=0)                         # (2, P_pad) f32

    # guide and ones-extended image, NCHW memory order preserved (pure reshape)
    guide_k = guide.reshape(B, 1, P).astype(jnp.float32)
    img_rows = [image.reshape(B, NIN, P).astype(jnp.float32),
                jnp.ones((B, 1, P), jnp.float32)]
    if J_pad > NIN + 1:
        img_rows.append(jnp.zeros((B, J_pad - NIN - 1, P), jnp.float32))
    img1 = jnp.concatenate(img_rows, axis=1)                         # (B, J_pad, P)
    if P_pad != P:
        pad = ((0, 0), (0, 0), (0, P_pad - P))
        guide_k = jnp.pad(guide_k, pad)
        img1 = jnp.pad(img1, pad)

    kernel = functools.partial(
        _bsa_kernel, B=B, GH=GH, GW=GW, GD=GD, GC_pad=GC_pad,
        NOUT_pad=NOUT_pad, J_pad=J_pad, TILE=TILE, precision=precision,
        mxu_dtype=mxu_dtype)

    out_k = pl.pallas_call(
        kernel,
        out_shape=jax.ShapeDtypeStruct((B, NOUT_pad, P_pad), image.dtype),
        grid=(n_tiles,),
        in_specs=[
            pl.BlockSpec((B * GD * GC_pad, GH * GW), lambda t: (0, 0)),   # resident LHS
            pl.BlockSpec((2, TILE), lambda t: (0, t)),                    # frac coords
            pl.BlockSpec((B, 1, TILE), lambda t: (0, 0, t)),              # guide
            pl.BlockSpec((B, J_pad, TILE), lambda t: (0, 0, t)),          # image (+ ones row)
        ],
        out_specs=pl.BlockSpec((B, NOUT_pad, TILE), lambda t: (0, 0, t)),
        compiler_params=pltpu.CompilerParams(
            dimension_semantics=("parallel",),
            vmem_limit_bytes=int(vmem_limit_bytes)),
    )(grid_k, coords, guide_k, img1)

    return out_k[:, :NOUT, :P].reshape(B, NOUT, H, W)


def bilateral_slice_apply_ref(grid, guide, image):
    """Pure-JAX reference with identical semantics (for validation)."""
    B, GC, GD, GH, GW = grid.shape
    _, NIN, H, W = image.shape
    stride = NIN + 1
    NOUT = GC // stride
    f32 = jnp.float32

    def axis_weights(gf, size):
        f = jnp.floor(gf - 0.5).astype(jnp.int32)
        cells = jnp.arange(size)
        w = jnp.zeros(gf.shape + (size,), f32)
        for d in (0, 1):
            idx = f + d
            wd = jnp.maximum(1.0 - jnp.abs(idx.astype(f32) + 0.5 - gf), 0.0)
            w = w + wd[..., None] * (jnp.clip(idx, 0, size - 1)[..., None] == cells)
        return w

    Wy = axis_weights((jnp.arange(H, dtype=f32) + 0.5) * GH / H, GH)   # [H, GH]
    Wx = axis_weights((jnp.arange(W, dtype=f32) + 0.5) * GW / W, GW)   # [W, GW]
    Wz = axis_weights(guide.astype(f32) * GD, GD)                      # [B, H, W, GD]

    coeff = jnp.einsum('hp,wq,bhwz,bczpq->bhwc', Wy, Wx, Wz, grid,
                       precision=lax.Precision.HIGHEST)                # [B,H,W,GC]
    img = jnp.transpose(image, (0, 2, 3, 1))                           # [B,H,W,NIN]
    coeff_r = coeff.reshape(B, H, W, NOUT, stride)
    out = jnp.einsum('bhwij,bhwj->bhwi', coeff_r[..., :NIN], img,
                     precision=lax.Precision.HIGHEST) + coeff_r[..., NIN]
    return jnp.transpose(out, (0, 3, 1, 2))


if __name__ == "__main__":
    def run_case(key, B, NIN, NOUT, H, W, GH, GW, GD):
        GC = NOUT * (NIN + 1)
        kg, ku, ki = jax.random.split(key, 3)
        grid = jax.random.normal(kg, (B, GC, GD, GH, GW), dtype=jnp.float32)
        # guide slightly outside [0, 1] to exercise the edge-clamped tent weights
        guide = jax.random.uniform(ku, (B, H, W), dtype=jnp.float32,
                                   minval=-0.05, maxval=1.05)
        image = jax.random.normal(ki, (B, NIN, H, W), dtype=jnp.float32)

        ref = jax.block_until_ready(bilateral_slice_apply_ref(grid, guide, image))

        # exact-precision slice matmul for a tight semantic check
        out_hi = jax.block_until_ready(
            bilateral_slice_apply(grid, guide, image, precision=lax.Precision.HIGHEST))
        assert out_hi.shape == (B, NOUT, H, W) and out_hi.dtype == image.dtype
        err_hi = float(jnp.max(jnp.abs(out_hi - ref)))
        assert err_hi < 2e-3, f"HIGHEST-precision max abs error {err_hi}"

        # fast default path (bf16-staged single-pass MXU) -- looser tolerance
        out = jax.block_until_ready(bilateral_slice_apply(grid, guide, image))
        assert out.shape == (B, NOUT, H, W) and out.dtype == image.dtype
        err = float(jnp.max(jnp.abs(out - ref)))
        assert err < 1e-1, f"default-precision max abs error {err}"

    key = jax.random.PRNGKey(0)
    k1, k2 = jax.random.split(key)
    # main case: matches the HDRNet configuration at small spatial size
    run_case(k1, B=2, NIN=3, NOUT=3, H=16, W=16, GH=8, GW=8, GD=8)
    # ragged pixel tail (P not a multiple of the tile), non-square image, GD != 8
    run_case(k2, B=1, NIN=3, NOUT=3, H=20, W=24, GH=8, GW=8, GD=4)

    print("KERNEL_OK")
</pallas_src>

<mosaic_0001>
module attributes {stable_mosaic.version = 11 : i64} {
  func.func @_bsa_kernel(%arg0: i32, %arg1: memref<256x64xf32, #tpu.memory_space<vmem>>, %arg2: memref<2x128xf32, #tpu.memory_space<vmem>>, %arg3: memref<2x1x128xf32, #tpu.memory_space<vmem>>, %arg4: memref<2x4x128xf32, #tpu.memory_space<vmem>>, %arg5: memref<2x4x128xf32, #tpu.memory_space<vmem>>) attributes {dimension_semantics = [#tpu.dimension_semantics<parallel>], iteration_bounds = array<i64: 2>, scalar_prefetch = 0 : i64, scratch_operands = 0 : i64, tpu.core_type = #tpu.core_type<tc>, window_params = [{pipeline_mode = #tpu.pipeline_mode<synchronous>, transform_indices = @transform_0, window_bounds = array<i64: 256, 64>}, {transform_indices = @transform_1, window_bounds = array<i64: 2, 128>}, {transform_indices = @transform_2, window_bounds = array<i64: 2, 1, 128>}, {transform_indices = @transform_3, window_bounds = array<i64: 2, 4, 128>}, {transform_indices = @transform_4, window_bounds = array<i64: 2, 4, 128>}]} {
    %c0 = arith.constant 0 : index
    %c0_0 = arith.constant 0 : index
    %0 = vector.load %arg2[%c0, %c0_0] : memref<2x128xf32, #tpu.memory_space<vmem>>, vector<1x128xf32>
    %c1 = arith.constant 1 : index
    %c0_1 = arith.constant 0 : index
    %1 = vector.load %arg2[%c1, %c0_1] : memref<2x128xf32, #tpu.memory_space<vmem>>, vector<1x128xf32>
    %2 = tpu.iota {dimensions = array<i32: 0>} : vector<8x128xi32>
    %cst = arith.constant 5.000000e-01 : f32
    %3 = vector.broadcast %cst : f32 to vector<1x128xf32>
    %4 = arith.subf %0, %3 : vector<1x128xf32>
    %5 = math.floor %4 : vector<1x128xf32>
    %cst_2 = arith.constant 0.000000e+00 : f32
    %6 = vector.broadcast %cst_2 : f32 to vector<8x128xf32>
    %cst_3 = arith.constant 0.000000e+00 : f32
    %7 = vector.broadcast %cst_3 : f32 to vector<1x128xf32>
    %8 = arith.addf %5, %7 : vector<1x128xf32>
    %cst_4 = arith.constant 5.000000e-01 : f32
    %9 = vector.broadcast %cst_4 : f32 to vector<1x128xf32>
    %10 = arith.addf %8, %9 : vector<1x128xf32>
    %11 = arith.subf %10, %0 : vector<1x128xf32>
    %12 = math.absf %11 : vector<1x128xf32>
    %cst_5 = arith.constant 1.000000e+00 : f32
    %13 = vector.broadcast %cst_5 : f32 to vector<1x128xf32>
    %14 = arith.subf %13, %12 : vector<1x128xf32>
    %cst_6 = arith.constant 0.000000e+00 : f32
    %15 = vector.broadcast %cst_6 : f32 to vector<1x128xf32>
    %16 = arith.maximumf %14, %15 : vector<1x128xf32>
    %17 = arith.fptosi %8 : vector<1x128xf32> to vector<1x128xi32>
    %c0_i32 = arith.constant 0 : i32
    %c7_i32 = arith.constant 7 : i32
    %18 = vector.broadcast %c0_i32 : i32 to vector<1x128xi32>
    %19 = arith.maxsi %18, %17 : vector<1x128xi32>
    %20 = vector.broadcast %c7_i32 : i32 to vector<1x128xi32>
    %21 = arith.minsi %20, %19 : vector<1x128xi32>
    %22 = vector.broadcast %21 : vector<1x128xi32> to vector<8x128xi32>
    %23 = arith.cmpi eq, %22, %2 : vector<8x128xi32>
    %cst_7 = arith.constant 0.000000e+00 : f32
    %24 = vector.shape_cast %16 : vector<1x128xf32> to vector<1x128xf32>
    %25 = vector.broadcast %24 : vector<1x128xf32> to vector<8x128xf32>
    %26 = vector.broadcast %cst_7 : f32 to vector<8x128xf32>
    %27 = arith.select %23, %25, %26 : vector<8x128xi1>, vector<8x128xf32>
    %28 = arith.addf %6, %27 : vector<8x128xf32>
    %cst_8 = arith.constant 1.000000e+00 : f32
    %29 = vector.broadcast %cst_8 : f32 to vector<1x128xf32>
    %30 = arith.addf %5, %29 : vector<1x128xf32>
    %cst_9 = arith.constant 5.000000e-01 : f32
    %31 = vector.broadcast %cst_9 : f32 to vector<1x128xf32>
    %32 = arith.addf %30, %31 : vector<1x128xf32>
    %33 = arith.subf %32, %0 : vector<1x128xf32>
    %34 = math.absf %33 : vector<1x128xf32>
    %cst_10 = arith.constant 1.000000e+00 : f32
    %35 = vector.broadcast %cst_10 : f32 to vector<1x128xf32>
    %36 = arith.subf %35, %34 : vector<1x128xf32>
    %cst_11 = arith.constant 0.000000e+00 : f32
    %37 = vector.broadcast %cst_11 : f32 to vector<1x128xf32>
    %38 = arith.maximumf %36, %37 : vector<1x128xf32>
    %39 = arith.fptosi %30 : vector<1x128xf32> to vector<1x128xi32>
    %c0_i32_12 = arith.constant 0 : i32
    %c7_i32_13 = arith.constant 7 : i32
    %40 = vector.broadcast %c0_i32_12 : i32 to vector<1x128xi32>
    %41 = arith.maxsi %40, %39 : vector<1x128xi32>
    %42 = vector.broadcast %c7_i32_13 : i32 to vector<1x128xi32>
    %43 = arith.minsi %42, %41 : vector<1x128xi32>
    %44 = vector.broadcast %43 : vector<1x128xi32> to vector<8x128xi32>
    %45 = arith.cmpi eq, %44, %2 : vector<8x128xi32>
    %cst_14 = arith.constant 0.000000e+00 : f32
    %46 = vector.shape_cast %38 : vector<1x128xf32> to vector<1x128xf32>
    %47 = vector.broadcast %46 : vector<1x128xf32> to vector<8x128xf32>
    %48 = vector.broadcast %cst_14 : f32 to vector<8x128xf32>
    %49 = arith.select %45, %47, %48 : vector<8x128xi1>, vector<8x128xf32>
    %50 = arith.addf %28, %49 : vector<8x128xf32>
    %51 = tpu.iota {dimensions = array<i32: 0>} : vector<8x128xi32>
    %cst_15 = arith.constant 5.000000e-01 : f32
    %52 = vector.broadcast %cst_15 : f32 to vector<1x128xf32>
    %53 = arith.subf %1, %52 : vector<1x128xf32>
    %54 = math.floor %53 : vector<1x128xf32>
    %cst_16 = arith.constant 0.000000e+00 : f32
    %55 = vector.broadcast %cst_16 : f32 to vector<8x128xf32>
    %cst_17 = arith.constant 0.000000e+00 : f32
    %56 = vector.broadcast %cst_17 : f32 to vector<1x128xf32>
    %57 = arith.addf %54, %56 : vector<1x128xf32>
    %cst_18 = arith.constant 5.000000e-01 : f32
    %58 = vector.broadcast %cst_18 : f32 to vector<1x128xf32>
    %59 = arith.addf %57, %58 : vector<1x128xf32>
    %60 = arith.subf %59, %1 : vector<1x128xf32>
    %61 = math.absf %60 : vector<1x128xf32>
    %cst_19 = arith.constant 1.000000e+00 : f32
    %62 = vector.broadcast %cst_19 : f32 to vector<1x128xf32>
    %63 = arith.subf %62, %61 : vector<1x128xf32>
    %cst_20 = arith.constant 0.000000e+00 : f32
    %64 = vector.broadcast %cst_20 : f32 to vector<1x128xf32>
    %65 = arith.maximumf %63, %64 : vector<1x128xf32>
    %66 = arith.fptosi %57 : vector<1x128xf32> to vector<1x128xi32>
    %c0_i32_21 = arith.constant 0 : i32
    %c7_i32_22 = arith.constant 7 : i32
    %67 = vector.broadcast %c0_i32_21 : i32 to vector<1x128xi32>
    %68 = arith.maxsi %67, %66 : vector<1x128xi32>
    %69 = vector.broadcast %c7_i32_22 : i32 to vector<1x128xi32>
    %70 = arith.minsi %69, %68 : vector<1x128xi32>
    %71 = vector.broadcast %70 : vector<1x128xi32> to vector<8x128xi32>
    %72 = arith.cmpi eq, %71, %51 : vector<8x128xi32>
    %cst_23 = arith.constant 0.000000e+00 : f32
    %73 = vector.shape_cast %65 : vector<1x128xf32> to vector<1x128xf32>
    %74 = vector.broadcast %73 : vector<1x128xf32> to vector<8x128xf32>
    %75 = vector.broadcast %cst_23 : f32 to vector<8x128xf32>
    %76 = arith.select %72, %74, %75 : vector<8x128xi1>, vector<8x128xf32>
    %77 = arith.addf %55, %76 : vector<8x128xf32>
    %cst_24 = arith.constant 1.000000e+00 : f32
    %78 = vector.broadcast %cst_24 : f32 to vector<1x128xf32>
    %79 = arith.addf %54, %78 : vector<1x128xf32>
    %cst_25 = arith.constant 5.000000e-01 : f32
    %80 = vector.broadcast %cst_25 : f32 to vector<1x128xf32>
    %81 = arith.addf %79, %80 : vector<1x128xf32>
    %82 = arith.subf %81, %1 : vector<1x128xf32>
    %83 = math.absf %82 : vector<1x128xf32>
    %cst_26 = arith.constant 1.000000e+00 : f32
    %84 = vector.broadcast %cst_26 : f32 to vector<1x128xf32>
    %85 = arith.subf %84, %83 : vector<1x128xf32>
    %cst_27 = arith.constant 0.000000e+00 : f32
    %86 = vector.broadcast %cst_27 : f32 to vector<1x128xf32>
    %87 = arith.maximumf %85, %86 : vector<1x128xf32>
    %88 = arith.fptosi %79 : vector<1x128xf32> to vector<1x128xi32>
    %c0_i32_28 = arith.constant 0 : i32
    %c7_i32_29 = arith.constant 7 : i32
    %89 = vector.broadcast %c0_i32_28 : i32 to vector<1x128xi32>
    %90 = arith.maxsi %89, %88 : vector<1x128xi32>
    %91 = vector.broadcast %c7_i32_29 : i32 to vector<1x128xi32>
    %92 = arith.minsi %91, %90 : vector<1x128xi32>
    %93 = vector.broadcast %92 : vector<1x128xi32> to vector<8x128xi32>
    %94 = arith.cmpi eq, %93, %51 : vector<8x128xi32>
    %cst_30 = arith.constant 0.000000e+00 : f32
    %95 = vector.shape_cast %87 : vector<1x128xf32> to vector<1x128xf32>
    %96 = vector.broadcast %95 : vector<1x128xf32> to vector<8x128xf32>
    %97 = vector.broadcast %cst_30 : f32 to vector<8x128xf32>
    %98 = arith.select %94, %96, %97 : vector<8x128xi1>, vector<8x128xf32>
    %99 = arith.addf %77, %98 : vector<8x128xf32>
    %100 = vector.shape_cast %50 : vector<8x128xf32> to vector<8x1x128xf32>
    %101 = vector.shape_cast %99 : vector<8x128xf32> to vector<1x8x128xf32>
    %102 = vector.broadcast %100 : vector<8x1x128xf32> to vector<8x8x128xf32>
    %103 = vector.broadcast %101 : vector<1x8x128xf32> to vector<8x8x128xf32>
    %104 = arith.mulf %102, %103 : vector<8x8x128xf32>
    %105 = vector.shape_cast %104 : vector<8x8x128xf32> to vector<64x128xf32>
    %c0_31 = arith.constant 0 : index
    %c0_32 = arith.constant 0 : index
    %106 = vector.load %arg1[%c0_31, %c0_32] : memref<256x64xf32, #tpu.memory_space<vmem>>, vector<256x64xf32>
    %cst_33 = arith.constant dense<0.000000e+00> : vector<256x128xf32>
    %107 = tpu.matmul %106, %105, %cst_33 {dimension_numbers = #tpu.dot_dimension_numbers<[1], [0], [0], [1], [0, 0, 1, 1], [], []>, precision = #tpu.contract_precision<fp32>} : vector<256x64xf32>, vector<64x128xf32>, vector<256x128xf32> -> vector<256x128xf32>
    %108 = vector.shape_cast %107 : vector<256x128xf32> to vector<2x8x16x128xf32>
    %c0_34 = arith.constant 0 : index
    %c0_35 = arith.constant 0 : index
    %c0_36 = arith.constant 0 : index
    %109 = vector.load %arg3[%c0_34, %c0_35, %c0_36] : memref<2x1x128xf32, #tpu.memory_space<vmem>>, vector<2x1x128xf32>
    %cst_37 = arith.constant 8.000000e+00 : f32
    %110 = vector.broadcast %cst_37 : f32 to vector<2x1x128xf32>
    %111 = arith.mulf %109, %110 : vector<2x1x128xf32>
    %112 = tpu.iota {dimensions = array<i32: 1>} : vector<2x8x128xi32>
    %cst_38 = arith.constant 5.000000e-01 : f32
    %113 = vector.broadcast %cst_38 : f32 to vector<2x1x128xf32>
    %114 = arith.subf %111, %113 : vector<2x1x128xf32>
    %115 = math.floor %114 : vector<2x1x128xf32>
    %cst_39 = arith.constant 0.000000e+00 : f32
    %116 = vector.broadcast %cst_39 : f32 to vector<2x8x128xf32>
    %cst_40 = arith.constant 0.000000e+00 : f32
    %117 = vector.broadcast %cst_40 : f32 to vector<2x1x128xf32>
    %118 = arith.addf %115, %117 : vector<2x1x128xf32>
    %cst_41 = arith.constant 5.000000e-01 : f32
    %119 = vector.broadcast %cst_41 : f32 to vector<2x1x128xf32>
    %120 = arith.addf %118, %119 : vector<2x1x128xf32>
    %121 = arith.subf %120, %111 : vector<2x1x128xf32>
    %122 = math.absf %121 : vector<2x1x128xf32>
    %cst_42 = arith.constant 1.000000e+00 : f32
    %123 = vector.broadcast %cst_42 : f32 to vector<2x1x128xf32>
    %124 = arith.subf %123, %122 : vector<2x1x128xf32>
    %cst_43 = arith.constant 0.000000e+00 : f32
    %125 = vector.broadcast %cst_43 : f32 to vector<2x1x128xf32>
    %126 = arith.maximumf %124, %125 : vector<2x1x128xf32>
    %127 = arith.fptosi %118 : vector<2x1x128xf32> to vector<2x1x128xi32>
    %c0_i32_44 = arith.constant 0 : i32
    %c7_i32_45 = arith.constant 7 : i32
    %128 = vector.broadcast %c0_i32_44 : i32 to vector<2x1x128xi32>
    %129 = arith.maxsi %128, %127 : vector<2x1x128xi32>
    %130 = vector.broadcast %c7_i32_45 : i32 to vector<2x1x128xi32>
    %131 = arith.minsi %130, %129 : vector<2x1x128xi32>
    %132 = vector.broadcast %131 : vector<2x1x128xi32> to vector<2x8x128xi32>
    %133 = arith.cmpi eq, %132, %112 : vector<2x8x128xi32>
    %cst_46 = arith.constant 0.000000e+00 : f32
    %134 = vector.shape_cast %126 : vector<2x1x128xf32> to vector<2x1x128xf32>
    %135 = vector.broadcast %134 : vector<2x1x128xf32> to vector<2x8x128xf32>
    %136 = vector.broadcast %cst_46 : f32 to vector<2x8x128xf32>
    %137 = arith.select %133, %135, %136 : vector<2x8x128xi1>, vector<2x8x128xf32>
    %138 = arith.addf %116, %137 : vector<2x8x128xf32>
    %cst_47 = arith.constant 1.000000e+00 : f32
    %139 = vector.broadcast %cst_47 : f32 to vector<2x1x128xf32>
    %140 = arith.addf %115, %139 : vector<2x1x128xf32>
    %cst_48 = arith.constant 5.000000e-01 : f32
    %141 = vector.broadcast %cst_48 : f32 to vector<2x1x128xf32>
    %142 = arith.addf %140, %141 : vector<2x1x128xf32>
    %143 = arith.subf %142, %111 : vector<2x1x128xf32>
    %144 = math.absf %143 : vector<2x1x128xf32>
    %cst_49 = arith.constant 1.000000e+00 : f32
    %145 = vector.broadcast %cst_49 : f32 to vector<2x1x128xf32>
    %146 = arith.subf %145, %144 : vector<2x1x128xf32>
    %cst_50 = arith.constant 0.000000e+00 : f32
    %147 = vector.broadcast %cst_50 : f32 to vector<2x1x128xf32>
    %148 = arith.maximumf %146, %147 : vector<2x1x128xf32>
    %149 = arith.fptosi %140 : vector<2x1x128xf32> to vector<2x1x128xi32>
    %c0_i32_51 = arith.constant 0 : i32
    %c7_i32_52 = arith.constant 7 : i32
    %150 = vector.broadcast %c0_i32_51 : i32 to vector<2x1x128xi32>
    %151 = arith.maxsi %150, %149 : vector<2x1x128xi32>
    %152 = vector.broadcast %c7_i32_52 : i32 to vector<2x1x128xi32>
    %153 = arith.minsi %152, %151 : vector<2x1x128xi32>
    %154 = vector.broadcast %153 : vector<2x1x128xi32> to vector<2x8x128xi32>
    %155 = arith.cmpi eq, %154, %112 : vector<2x8x128xi32>
    %cst_53 = arith.constant 0.000000e+00 : f32
    %156 = vector.shape_cast %148 : vector<2x1x128xf32> to vector<2x1x128xf32>
    %157 = vector.broadcast %156 : vector<2x1x128xf32> to vector<2x8x128xf32>
    %158 = vector.broadcast %cst_53 : f32 to vector<2x8x128xf32>
    %159 = arith.select %155, %157, %158 : vector<2x8x128xi1>, vector<2x8x128xf32>
    %160 = arith.addf %138, %159 : vector<2x8x128xf32>
    %161 = vector.extract_strided_slice %108 {offsets = [0, 0, 0, 0], sizes = [2, 1, 16, 128], strides = [1, 1, 1, 1]} : vector<2x8x16x128xf32> to vector<2x1x16x128xf32>
    %162 = vector.shape_cast %161 : vector<2x1x16x128xf32> to vector<2x16x128xf32>
    %163 = vector.extract_strided_slice %160 {offsets = [0, 0, 0], sizes = [2, 1, 128], strides = [1, 1, 1]} : vector<2x8x128xf32> to vector<2x1x128xf32>
    %164 = vector.broadcast %163 : vector<2x1x128xf32> to vector<2x16x128xf32>
    %165 = arith.mulf %162, %164 : vector<2x16x128xf32>
    %166 = vector.extract_strided_slice %108 {offsets = [0, 1, 0, 0], sizes = [2, 1, 16, 128], strides = [1, 1, 1, 1]} : vector<2x8x16x128xf32> to vector<2x1x16x128xf32>
    %167 = vector.shape_cast %166 : vector<2x1x16x128xf32> to vector<2x16x128xf32>
    %168 = vector.extract_strided_slice %160 {offsets = [0, 1, 0], sizes = [2, 1, 128], strides = [1, 1, 1]} : vector<2x8x128xf32> to vector<2x1x128xf32>
    %169 = vector.broadcast %168 : vector<2x1x128xf32> to vector<2x16x128xf32>
    %170 = arith.mulf %167, %169 : vector<2x16x128xf32>
    %171 = arith.addf %165, %170 : vector<2x16x128xf32>
    %172 = vector.extract_strided_slice %108 {offsets = [0, 2, 0, 0], sizes = [2, 1, 16, 128], strides = [1, 1, 1, 1]} : vector<2x8x16x128xf32> to vector<2x1x16x128xf32>
    %173 = vector.shape_cast %172 : vector<2x1x16x128xf32> to vector<2x16x128xf32>
    %174 = vector.extract_strided_slice %160 {offsets = [0, 2, 0], sizes = [2, 1, 128], strides = [1, 1, 1]} : vector<2x8x128xf32> to vector<2x1x128xf32>
    %175 = vector.broadcast %174 : vector<2x1x128xf32> to vector<2x16x128xf32>
    %176 = arith.mulf %173, %175 : vector<2x16x128xf32>
    %177 = arith.addf %171, %176 : vector<2x16x128xf32>
    %178 = vector.extract_strided_slice %108 {offsets = [0, 3, 0, 0], sizes = [2, 1, 16, 128], strides = [1, 1, 1, 1]} : vector<2x8x16x128xf32> to vector<2x1x16x128xf32>
    %179 = vector.shape_cast %178 : vector<2x1x16x128xf32> to vector<2x16x128xf32>
    %180 = vector.extract_strided_slice %160 {offsets = [0, 3, 0], sizes = [2, 1, 128], strides = [1, 1, 1]} : vector<2x8x128xf32> to vector<2x1x128xf32>
    %181 = vector.broadcast %180 : vector<2x1x128xf32> to vector<2x16x128xf32>
    %182 = arith.mulf %179, %181 : vector<2x16x128xf32>
    %183 = arith.addf %177, %182 : vector<2x16x128xf32>
    %184 = vector.extract_strided_slice %108 {offsets = [0, 4, 0, 0], sizes = [2, 1, 16, 128], strides = [1, 1, 1, 1]} : vector<2x8x16x128xf32> to vector<2x1x16x128xf32>
    %185 = vector.shape_cast %184 : vector<2x1x16x128xf32> to vector<2x16x128xf32>
    %186 = vector.extract_strided_slice %160 {offsets = [0, 4, 0], sizes = [2, 1, 128], strides = [1, 1, 1]} : vector<2x8x128xf32> to vector<2x1x128xf32>
    %187 = vector.broadcast %186 : vector<2x1x128xf32> to vector<2x16x128xf32>
    %188 = arith.mulf %185, %187 : vector<2x16x128xf32>
    %189 = arith.addf %183, %188 : vector<2x16x128xf32>
    %190 = vector.extract_strided_slice %108 {offsets = [0, 5, 0, 0], sizes = [2, 1, 16, 128], strides = [1, 1, 1, 1]} : vector<2x8x16x128xf32> to vector<2x1x16x128xf32>
    %191 = vector.shape_cast %190 : vector<2x1x16x128xf32> to vector<2x16x128xf32>
    %192 = vector.extract_strided_slice %160 {offsets = [0, 5, 0], sizes = [2, 1, 128], strides = [1, 1, 1]} : vector<2x8x128xf32> to vector<2x1x128xf32>
    %193 = vector.broadcast %192 : vector<2x1x128xf32> to vector<2x16x128xf32>
    %194 = arith.mulf %191, %193 : vector<2x16x128xf32>
    %195 = arith.addf %189, %194 : vector<2x16x128xf32>
    %196 = vector.extract_strided_slice %108 {offsets = [0, 6, 0, 0], sizes = [2, 1, 16, 128], strides = [1, 1, 1, 1]} : vector<2x8x16x128xf32> to vector<2x1x16x128xf32>
    %197 = vector.shape_cast %196 : vector<2x1x16x128xf32> to vector<2x16x128xf32>
    %198 = vector.extract_strided_slice %160 {offsets = [0, 6, 0], sizes = [2, 1, 128], strides = [1, 1, 1]} : vector<2x8x128xf32> to vector<2x1x128xf32>
    %199 = vector.broadcast %198 : vector<2x1x128xf32> to vector<2x16x128xf32>
    %200 = arith.mulf %197, %199 : vector<2x16x128xf32>
    %201 = arith.addf %195, %200 : vector<2x16x128xf32>
    %202 = vector.extract_strided_slice %108 {offsets = [0, 7, 0, 0], sizes = [2, 1, 16, 128], strides = [1, 1, 1, 1]} : vector<2x8x16x128xf32> to vector<2x1x16x128xf32>
    %203 = vector.shape_cast %202 : vector<2x1x16x128xf32> to vector<2x16x128xf32>
    %204 = vector.extract_strided_slice %160 {offsets = [0, 7, 0], sizes = [2, 1, 128], strides = [1, 1, 1]} : vector<2x8x128xf32> to vector<2x1x128xf32>
    %205 = vector.broadcast %204 : vector<2x1x128xf32> to vector<2x16x128xf32>
    %206 = arith.mulf %203, %205 : vector<2x16x128xf32>
    %207 = arith.addf %201, %206 : vector<2x16x128xf32>
    %c0_54 = arith.constant 0 : index
    %c0_55 = arith.constant 0 : index
    %c0_56 = arith.constant 0 : index
    %208 = vector.load %arg4[%c0_54, %c0_55, %c0_56] : memref<2x4x128xf32, #tpu.memory_space<vmem>>, vector<2x4x128xf32>
    %209 = vector.shape_cast %207 : vector<2x16x128xf32> to vector<2x4x4x128xf32>
    %210 = vector.shape_cast %208 : vector<2x4x128xf32> to vector<2x1x4x128xf32>
    %211 = vector.broadcast %210 : vector<2x1x4x128xf32> to vector<2x4x4x128xf32>
    %212 = arith.mulf %209, %211 : vector<2x4x4x128xf32>
    %cst_57 = arith.constant dense<0.000000e+00> : vector<2x4x128xf32>
    %213 = vector.multi_reduction <add>, %212, %cst_57 [2] : vector<2x4x4x128xf32> to vector<2x4x128xf32>
    %c0_58 = arith.constant 0 : index
    %c0_59 = arith.constant 0 : index
    %c0_60 = arith.constant 0 : index
    %214 = vector.load %arg5[%c0_58, %c0_59, %c0_60] : memref<2x4x128xf32, #tpu.memory_space<vmem>>, vector<2x4x128xf32>
    tpu.vector_store %arg5[%c0_58, %c0_59, %c0_60], %213 {strides = array<i32>} : memref<2x4x128xf32, #tpu.memory_space<vmem>>, vector<2x4x128xf32>,
    return
  }
  func.func @transform_0(%arg0: i32) -> (i32, i32) {
    %c0_i32 = arith.constant 0 : i32
    %c0_i32_0 = arith.constant 0 : i32
    %c0_i32_1 = arith.constant 0 : i32
    return %c0_i32, %c0_i32_0 : i32, i32
  }
  func.func @transform_1(%arg0: i32) -> (i32, i32) {
    %c0_i32 = arith.constant 0 : i32
    %c0_i32_0 = arith.constant 0 : i32
    return %c0_i32, %arg0 : i32, i32
  }
  func.func @transform_2(%arg0: i32) -> (i32, i32, i32) {
    %c0_i32 = arith.constant 0 : i32
    %c0_i32_0 = arith.constant 0 : i32
    %c0_i32_1 = arith.constant 0 : i32
    return %c0_i32, %c0_i32_0, %arg0 : i32, i32, i32
  }
  func.func @transform_3(%arg0: i32) -> (i32, i32, i32) {
    %c0_i32 = arith.constant 0 : i32
    %c0_i32_0 = arith.constant 0 : i32
    %c0_i32_1 = arith.constant 0 : i32
    return %c0_i32, %c0_i32_0, %arg0 : i32, i32, i32
  }
  func.func @transform_4(%arg0: i32) -> (i32, i32, i32) {
    %c0_i32 = arith.constant 0 : i32
    %c0_i32_0 = arith.constant 0 : i32
    %c0_i32_1 = arith.constant 0 : i32
    return %c0_i32, %c0_i32_0, %arg0 : i32, i32, i32
  }
}

</mosaic_0001>

<llo_original>
// kernel: tpu_custom_call.1
$region0: #{tpu_custom_call.1}
  #allocation0 [shape = 'u32[]', space=smem, size = 0x4, offset = 0x4, fixed_abs, tag = 'smem constant byte address 0x4 - core index']
  #allocation1 [shape = 'u32[144,128]{1,0:T(1,128)}', space=vmem, size = 0x12000, scoped, tag = 'internal scratch']
  %s0 = inlined_call_operand.vmem [shape: f32[256,64], index: 0, kind: input, shape index: {}]
  %s1 = inlined_call_operand.vmem [shape: f32[2,256], index: 1, kind: input, shape index: {}]
  %s2 = inlined_call_operand.vmem [shape: f32[2,1,256], index: 2, kind: input, shape index: {}]
  %s3 = inlined_call_operand.vmem [shape: f32[2,4,256], index: 3, kind: input, shape index: {}]
  %s4 = inlined_call_operand.hbm [shape: f32[2,4,256], index: 4, kind: output, shape index: {}]
  %s5 = sld [smem:[#allocation0]]
  $region124: #{tpu_custom_call.1} parent=0
    _
  %s7 = ssub.s32 1, %s5
  %s8 = scalar_select 0, %s7, %s5
  $region1: #{tpu_custom_call.1} parent=0
    #allocation2 [shape = 'u8[2048]{0}', space=vmem, size = 0x800, scoped, tag = 'input window, operand 2']
    #allocation3 [shape = 'u8[8192]{0}', space=vmem, size = 0x2000, scoped, tag = 'input window, operand 3']
    #allocation4 [shape = 'u8[8192]{0}', space=vmem, size = 0x2000, scoped, tag = 'output window, operand 0']
    #allocation5 [shape = 's32[2]{0}', space=sflag, size = 0x8, scoped, tag = 'scoped memory for tpu_custom_call.1']
    %9 = vsyncpa [#allocation5], 0
    %s10 = scalar_lea.sflag [#allocation5], 1
    %11 = vsyncpa %s10, 0
    loop: start=0, step=1, limit=4
    $region2: #{tpu_custom_call.1} parent=1 // loop_pre_header
      _
    $region3: #{tpu_custom_call.1} parent=1 // loop_header
      %s13 = sphi 0, %s17
      %p14 = scmp.ge.s32.totalorder %s13, 4
      %s21 = sphi 0, %s21
      %s23 = sphi 0, %s21
      %s24 = sphi 0, %s23
      %s38 = sphi 0, %s24
      %s44 = sphi 0, %s46
      %s47 = sphi 0, %s44
      %s48 = sphi 0, %s47
      %s64 = sphi 0, %s48
      %s70 = sphi 0, %s72
      %s73 = sphi 0, %s70
      %s74 = sphi 0, %s73
      %s90 = sphi 0, %s74
      %s96 = sphi 0, %s98
      %s99 = sphi 0, %s96
      %s100 = sphi 0, %s99
      %s116 = sphi 0, %s100
      %s122 = sphi 0, %s124
      %s125 = sphi 0, %s122
      %s126 = sphi 0, %s125
      %s142 = sphi 0, %s126
    $region4: #{tpu_custom_call.1} parent=1 // loop_header_branch
      %16 = sbr.rel (%p14) target = $region8
    $region5: #{tpu_custom_call.1} parent=1 // loop_body
      %s18 = ssub.s32 %s13, 1
      %s19 = ssub.s32 %s13, 2
      %s20 = sadd.s32 %s13, 1
      %s22 = sadd.s32 %s21, 1
      %p25 = scmp.eq.s32.totalorder %s13, 1
      %p26 = scmp.ne.s32.totalorder %s21, %s23
      %p27 = scmp.eq.s32.totalorder %s13, 0
      %p28 = por %p26, %p27
      %p29 = scmp.ne.s32.totalorder %s21, %s23
      %p30 = scmp.eq.s32.totalorder %s18, 1
      %p31 = por %p29, %p30
      %p32 = scmp.ne.s32.totalorder %s23, %s24
      %p33 = scmp.eq.s32.totalorder %s18, 0
      %p34 = por %p32, %p33
      %p35 = scmp.ne.s32.totalorder %s23, %s24
      %p36 = scmp.eq.s32.totalorder %s19, 1
      %p37 = por %p35, %p36
      %p39 = scmp.ne.s32.totalorder %s24, %s38
      %p40 = scmp.eq.s32.totalorder %s19, 0
      %p41 = por %p39, %p40
      %s42 = ssub.s32 %s13, %s20
      %p43 = scmp.eq.s32.totalorder %s42, 0
      %s45 = sadd.s32 %s44, 1
      %s46 = scalar_select %p43, %s44, %s45
      %p49 = pneg %p43
      %p50 = scmp.eq.s32.totalorder %s13, 1
      %p51 = por %p49, %p50
      %p52 = scmp.ne.s32.totalorder %s44, %s47
      %p53 = scmp.eq.s32.totalorder %s13, 0
      %p54 = por %p52, %p53
      %p55 = scmp.ne.s32.totalorder %s44, %s47
      %p56 = scmp.eq.s32.totalorder %s18, 1
      %p57 = por %p55, %p56
      %p58 = scmp.ne.s32.totalorder %s47, %s48
      %p59 = scmp.eq.s32.totalorder %s18, 0
      %p60 = por %p58, %p59
      %p61 = scmp.ne.s32.totalorder %s47, %s48
      %p62 = scmp.eq.s32.totalorder %s19, 1
      %p63 = por %p61, %p62
      %p65 = scmp.ne.s32.totalorder %s48, %s64
      %p66 = scmp.eq.s32.totalorder %s19, 0
      %p67 = por %p65, %p66
      %s68 = ssub.s32 %s13, %s20
      %p69 = scmp.eq.s32.totalorder %s68, 0
      %s71 = sadd.s32 %s70, 1
      %s72 = scalar_select %p69, %s70, %s71
      %p75 = pneg %p69
      %p76 = scmp.eq.s32.totalorder %s13, 1
      %p77 = por %p75, %p76
      %p78 = scmp.ne.s32.totalorder %s70, %s73
      %p79 = scmp.eq.s32.totalorder %s13, 0
      %p80 = por %p78, %p79
      %p81 = scmp.ne.s32.totalorder %s70, %s73
      %p82 = scmp.eq.s32.totalorder %s18, 1
      %p83 = por %p81, %p82
      %p84 = scmp.ne.s32.totalorder %s73, %s74
      %p85 = scmp.eq.s32.totalorder %s18, 0
      %p86 = por %p84, %p85
      %p87 = scmp.ne.s32.totalorder %s73, %s74
      %p88 = scmp.eq.s32.totalorder %s19, 1
      %p89 = por %p87, %p88
      %p91 = scmp.ne.s32.totalorder %s74, %s90
      %p92 = scmp.eq.s32.totalorder %s19, 0
      %p93 = por %p91, %p92
      %s94 = ssub.s32 %s13, %s20
      %p95 = scmp.eq.s32.totalorder %s94, 0
      %s97 = sadd.s32 %s96, 1
      %s98 = scalar_select %p95, %s96, %s97
      %p101 = pneg %p95
      %p102 = scmp.eq.s32.totalorder %s13, 1
      %p103 = por %p101, %p102
      %p104 = scmp.ne.s32.totalorder %s96, %s99
      %p105 = scmp.eq.s32.totalorder %s13, 0
      %p106 = por %p104, %p105
      %p107 = scmp.ne.s32.totalorder %s96, %s99
      %p108 = scmp.eq.s32.totalorder %s18, 1
      %p109 = por %p107, %p108
      %p110 = scmp.ne.s32.totalorder %s99, %s100
      %p111 = scmp.eq.s32.totalorder %s18, 0
      %p112 = por %p110, %p111
      %p113 = scmp.ne.s32.totalorder %s99, %s100
      %p114 = scmp.eq.s32.totalorder %s19, 1
      %p115 = por %p113, %p114
      %p117 = scmp.ne.s32.totalorder %s100, %s116
      %p118 = scmp.eq.s32.totalorder %s19, 0
      %p119 = por %p117, %p118
      %s120 = ssub.s32 %s13, %s20
      %p121 = scmp.eq.s32.totalorder %s120, 0
      %s123 = sadd.s32 %s122, 1
      %s124 = scalar_select %p121, %s122, %s123
      %p127 = pneg %p121
      %p128 = scmp.eq.s32.totalorder %s13, 1
      %p129 = por %p127, %p128
      %p130 = scmp.ne.s32.totalorder %s122, %s125
      %p131 = scmp.eq.s32.totalorder %s13, 0
      %p132 = por %p130, %p131
      %p133 = scmp.ne.s32.totalorder %s122, %s125
      %p134 = scmp.eq.s32.totalorder %s18, 1
      %p135 = por %p133, %p134
      %p136 = scmp.ne.s32.totalorder %s125, %s126
      %p137 = scmp.eq.s32.totalorder %s18, 0
      %p138 = por %p136, %p137
      %p139 = scmp.ne.s32.totalorder %s125, %s126
      %p140 = scmp.eq.s32.totalorder %s19, 1
      %p141 = por %p139, %p140
      %p143 = scmp.ne.s32.totalorder %s126, %s142
      %p144 = scmp.eq.s32.totalorder %s19, 0
      %p145 = por %p143, %p144
      %p146 = scmp.le.s32.totalorder 1, %s13
      %p147 = scmp.lt.s32.totalorder %s13, 3
      %p148 = pnand %p146, %p147
      %p149 = pneg %p148
      // Predicated region
      $region9: #{tpu_custom_call.1} parent=5 // pred_check
        _
      $region10: #{tpu_custom_call.1} parent=5 // pred_check_branch
        %151 = sbr.rel (%p148) target = $region12
      $region11: #{tpu_custom_call.1} parent=5 // pred_region
        %s152 = ssub.s32 %s13, 1
        // Predicated region
        $region13: #{tpu_custom_call.1} parent=11 // pred_check
          %p153 = pneg %p34
        $region14: #{tpu_custom_call.1} parent=11 // pred_check_branch
          %155 = sbr.rel (%p153) target = $region16
        $region15: #{tpu_custom_call.1} parent=11 // pred_region
          _
        $region16: #{tpu_custom_call.1} parent=11 // pred_fallthru
          _
      $region12: #{tpu_custom_call.1} parent=5 // pred_fallthru
        _
      %p156 = scmp.lt.s32.totalorder %s13, 2
      // Predicated region
      $region17: #{tpu_custom_call.1} parent=5 // pred_check
        %p157 = pneg %p156
      $region18: #{tpu_custom_call.1} parent=5 // pred_check_branch
        %159 = sbr.rel (%p157) target = $region20
      $region19: #{tpu_custom_call.1} parent=5 // pred_region
        // Predicated region
        $region21: #{tpu_custom_call.1} parent=19 // pred_check
          %p160 = pneg %p54
        $region22: #{tpu_custom_call.1} parent=19 // pred_check_branch
          %162 = sbr.rel (%p160) target = $region24
        $region23: #{tpu_custom_call.1} parent=19 // pred_region
          %p163 = scmp.lt.s32.totalorder %s13, 1
          %s164 = scalar_select %p163, %s13, 1
          %s165 = smul.addr %s164, 2
          %s166 = scalar_lea.vmem %s1, %s165
        $region24: #{tpu_custom_call.1} parent=19 // pred_fallthru
          _
        // Predicated region
        $region25: #{tpu_custom_call.1} parent=19 // pred_check
          %p167 = pneg %p80
        $region26: #{tpu_custom_call.1} parent=19 // pred_check_branch
          %169 = sbr.rel (%p167) target = $region28
        $region27: #{tpu_custom_call.1} parent=19 // pred_region
          %s170 = sand.u32 %s70, 1
          %s171 = sand.u32 %s70, 1
          %s172 = smul.addr %s171, 2
          %s173 = scalar_lea.vmem [#allocation2], %s172
          %s174 = scalar_lea.vmem %s2, %s13
          // Predicated region
          $region29: #{tpu_custom_call.1} parent=27 // pred_check
            _
          $region30: #{tpu_custom_call.1} parent=27 // pred_check_branch
            %176 = sbr.rel (0) target = $region32
          $region31: #{tpu_custom_call.1} parent=27 // pred_region
            // Predicated region
            $region33: #{tpu_custom_call.1} parent=31 // pred_check
              _
            $region34: #{tpu_custom_call.1} parent=31 // pred_check_branch
              %178 = sbr.rel target = $region36
            $region35: #{tpu_custom_call.1} parent=31 // pred_region
              // Predicated region
              $region48: #{tpu_custom_call.1} parent=35 // pred_check
                _
              $region49: #{tpu_custom_call.1} parent=35 // pred_check_branch
                %196 = sbr.rel (0) target = $region51
              $region50: #{tpu_custom_call.1} parent=35 // pred_region
                %s198 = ssub.s32 2, 1
                loop: start=0, step=1, limit=1
                $region52: #{tpu_custom_call.1} parent=50 // loop_pre_header
                  _
                $region53: #{tpu_custom_call.1} parent=50 // loop_header
                  %s200 = sphi 0, %s204
                  %p201 = scmp.ge.s32.totalorder %s200, 1
                  %s205 = sphi %s174, %s174
                  %s206 = sphi %s173, %s173
                $region54: #{tpu_custom_call.1} parent=50 // loop_header_branch
                  %203 = sbr.rel (%p201) target = $region58
                $region55: #{tpu_custom_call.1} parent=50 // loop_body
                  %v207 = vld [vmem:[%s205] sm:%s198]
                  %208 = vst [vmem:[%s206] sm:%s198] %v207
                  %v209 = vld [vmem:[%s205 + $0x2] sm:%s198]
                  %210 = vst [vmem:[%s206 + $0x1] sm:%s198] %v209
                $region56: #{tpu_custom_call.1} parent=50 // loop_footer
                  %s204 = sadd.s32 1, %s200
                $region57: #{tpu_custom_call.1} parent=50 // loop_footer_branch
                  %199 = sbr.rel target = $region53
                $region58: #{tpu_custom_call.1} parent=50 // loop_exit
                  _
              $region51: #{tpu_custom_call.1} parent=35 // pred_fallthru
                _
            $region36: #{tpu_custom_call.1} parent=31 // pred_fallthru
              _
            // Predicated region
            $region37: #{tpu_custom_call.1} parent=31 // pred_check
              _
            $region38: #{tpu_custom_call.1} parent=31 // pred_check_branch
              %180 = sbr.rel (0) target = $region40
            $region39: #{tpu_custom_call.1} parent=31 // pred_region
              %s182 = ssub.s32 2, 1
              loop: start=0, step=1, limit=1
              $region41: #{tpu_custom_call.1} parent=39 // loop_pre_header
                _
              $region42: #{tpu_custom_call.1} parent=39 // loop_header
                %s184 = sphi 0, %s188
                %p185 = scmp.ge.s32.totalorder %s184, 1
                %s189 = sphi %s174, %s174
                %s190 = sphi %s173, %s173
              $region43: #{tpu_custom_call.1} parent=39 // loop_header_branch
                %187 = sbr.rel (%p185) target = $region47
              $region44: #{tpu_custom_call.1} parent=39 // loop_body
                %v191 = vld [vmem:[%s189] sm:%s182]
                %192 = vst [vmem:[%s190] sm:%s182] %v191
                %v193 = vld [vmem:[%s189 + $0x2] sm:%s182]
                %194 = vst [vmem:[%s190 + $0x1] sm:%s182] %v193
              $region45: #{tpu_custom_call.1} parent=39 // loop_footer
                %s188 = sadd.s32 1, %s184
              $region46: #{tpu_custom_call.1} parent=39 // loop_footer_branch
                %183 = sbr.rel target = $region42
              $region47: #{tpu_custom_call.1} parent=39 // loop_exit
                _
            $region40: #{tpu_custom_call.1} parent=31 // pred_fallthru
              _
          $region32: #{tpu_custom_call.1} parent=27 // pred_fallthru
            _
          %211 = vnop
        $region28: #{tpu_custom_call.1} parent=19 // pred_fallthru
          _
        // Predicated region
        $region59: #{tpu_custom_call.1} parent=19 // pred_check
          %p212 = pneg %p106
        $region60: #{tpu_custom_call.1} parent=19 // pred_check_branch
          %214 = sbr.rel (%p212) target = $region62
        $region61: #{tpu_custom_call.1} parent=19 // pred_region
          %s215 = sand.u32 %s96, 1
          %s216 = sand.u32 %s96, 1
          %s217 = smul.addr %s216, 8
          %s218 = scalar_lea.vmem [#allocation3], %s217
          %s219 = smul.addr %s13, 4
          %s220 = scalar_lea.vmem %s3, %s219
          // Predicated region
          $region63: #{tpu_custom_call.1} parent=61 // pred_check
            _
          $region64: #{tpu_custom_call.1} parent=61 // pred_check_branch
            %222 = sbr.rel (0) target = $region66
          $region65: #{tpu_custom_call.1} parent=61 // pred_region
            // Predicated region
            $region67: #{tpu_custom_call.1} parent=65 // pred_check
              _
            $region68: #{tpu_custom_call.1} parent=65 // pred_check_branch
              %224 = sbr.rel target = $region70
            $region69: #{tpu_custom_call.1} parent=65 // pred_region
              // Predicated region
              $region82: #{tpu_custom_call.1} parent=69 // pred_check
                _
              $region83: #{tpu_custom_call.1} parent=69 // pred_check_branch
                %242 = sbr.rel (0) target = $region85
              $region84: #{tpu_custom_call.1} parent=69 // pred_region
                loop: start=0, step=1, limit=1
                $region86: #{tpu_custom_call.1} parent=84 // loop_pre_header
                  _
                $region87: #{tpu_custom_call.1} parent=84 // loop_header
                  %s244 = sphi 0, %s248
                  %p245 = scmp.ge.s32.totalorder %s244, 1
                  %s249 = sphi %s220, %s220
                  %s250 = sphi %s218, %s218
                $region88: #{tpu_custom_call.1} parent=84 // loop_header_branch
                  %247 = sbr.rel (%p245) target = $region92
                $region89: #{tpu_custom_call.1} parent=84 // loop_body
                  _
                $region90: #{tpu_custom_call.1} parent=84 // loop_footer
                  %s248 = sadd.s32 1, %s244
                $region91: #{tpu_custom_call.1} parent=84 // loop_footer_branch
                  %243 = sbr.rel target = $region87
                $region92: #{tpu_custom_call.1} parent=84 // loop_exit
                  _
                %s252 = ssub.s32 16, 1
                loop: start=0, step=1, limit=1
                $region93: #{tpu_custom_call.1} parent=84 // loop_pre_header
                  _
                $region94: #{tpu_custom_call.1} parent=84 // loop_header
                  %s254 = sphi 0, %s258
                  %p255 = scmp.ge.s32.totalorder %s254, 1
                  %s259 = sphi %s220, %s220
                  %s260 = sphi %s218, %s218
                $region95: #{tpu_custom_call.1} parent=84 // loop_header_branch
                  %257 = sbr.rel (%p255) target = $region99
                $region96: #{tpu_custom_call.1} parent=84 // loop_body
                  %v261 = vld [vmem:[%s259] sm:%s252]
                  %262 = vst [vmem:[%s260] sm:%s252] %v261
                  %v263 = vld [vmem:[%s259 + $0x8] sm:%s252]
                  %264 = vst [vmem:[%s260 + $0x4] sm:%s252] %v263
                $region97: #{tpu_custom_call.1} parent=84 // loop_footer
                  %s258 = sadd.s32 1, %s254
                $region98: #{tpu_custom_call.1} parent=84 // loop_footer_branch
                  %253 = sbr.rel target = $region94
                $region99: #{tpu_custom_call.1} parent=84 // loop_exit
                  _
              $region85: #{tpu_custom_call.1} parent=69 // pred_fallthru
                _
            $region70: #{tpu_custom_call.1} parent=65 // pred_fallthru
              _
            // Predicated region
            $region71: #{tpu_custom_call.1} parent=65 // pred_check
              _
            $region72: #{tpu_custom_call.1} parent=65 // pred_check_branch
              %226 = sbr.rel (0) target = $region74
            $region73: #{tpu_custom_call.1} parent=65 // pred_region
              %s228 = ssub.s32 16, 1
              loop: start=0, step=1, limit=1
              $region75: #{tpu_custom_call.1} parent=73 // loop_pre_header
                _
              $region76: #{tpu_custom_call.1} parent=73 // loop_header
                %s230 = sphi 0, %s234
                %p231 = scmp.ge.s32.totalorder %s230, 1
                %s235 = sphi %s220, %s220
                %s236 = sphi %s218, %s218
              $region77: #{tpu_custom_call.1} parent=73 // loop_header_branch
                %233 = sbr.rel (%p231) target = $region81
              $region78: #{tpu_custom_call.1} parent=73 // loop_body
                %v237 = vld [vmem:[%s235] sm:%s228]
                %238 = vst [vmem:[%s236] sm:%s228] %v237
                %v239 = vld [vmem:[%s235 + $0x8] sm:%s228]
                %240 = vst [vmem:[%s236 + $0x4] sm:%s228] %v239
              $region79: #{tpu_custom_call.1} parent=73 // loop_footer
                %s234 = sadd.s32 1, %s230
              $region80: #{tpu_custom_call.1} parent=73 // loop_footer_branch
                %229 = sbr.rel target = $region76
              $region81: #{tpu_custom_call.1} parent=73 // loop_exit
                _
            $region74: #{tpu_custom_call.1} parent=65 // pred_fallthru
              _
          $region66: #{tpu_custom_call.1} parent=61 // pred_fallthru
            _
          %265 = vnop
        $region62: #{tpu_custom_call.1} parent=19 // pred_fallthru
          _
      $region20: #{tpu_custom_call.1} parent=5 // pred_fallthru
        _
      %p266 = scmp.le.s32.totalorder 1, %s13
      %p267 = scmp.lt.s32.totalorder %s13, 3
      %p268 = pnand %p266, %p267
      %p269 = pneg %p268
      // Predicated region
      $region100: #{tpu_custom_call.1} parent=5 // pred_check
        _
      $region101: #{tpu_custom_call.1} parent=5 // pred_check_branch
        %271 = sbr.rel (%p268) target = $region103
      $region102: #{tpu_custom_call.1} parent=5 // pred_region
        %s272 = ssub.s32 %s13, 1
        %s273 = sand.u32 %s73, 1
        %s274 = sand.u32 %s73, 1
        %s275 = smul.addr %s274, 2
        %s276 = scalar_lea.vmem [#allocation2], %s275
        // Predicated region
        $region104: #{tpu_custom_call.1} parent=102 // pred_check
          %p277 = pneg %p86
        $region105: #{tpu_custom_call.1} parent=102 // pred_check_branch
          %279 = sbr.rel (%p277) target = $region107
        $region106: #{tpu_custom_call.1} parent=102 // pred_region
          _
        $region107: #{tpu_custom_call.1} parent=102 // pred_fallthru
          _
        %s280 = sand.u32 %s99, 1
        %s281 = sand.u32 %s99, 1
        %s282 = smul.addr %s281, 8
        %s283 = scalar_lea.vmem [#allocation3], %s282
        // Predicated region
        $region108: #{tpu_custom_call.1} parent=102 // pred_check
          %p284 = pneg %p112
        $region109: #{tpu_custom_call.1} parent=102 // pred_check_branch
          %286 = sbr.rel (%p284) target = $region111
        $region110: #{tpu_custom_call.1} parent=102 // pred_region
          _
        $region111: #{tpu_custom_call.1} parent=102 // pred_fallthru
          _
        %p287 = pneg %p34
        %p288 = pneg %p31
        %p289 = scmp.lt.s32.totalorder %s18, 1
        %s290 = scalar_select %p289, %s18, 1
        %s291 = smul.addr %s290, 2
        %s292 = scalar_lea.vmem %s1, %s291
        %p293 = pneg %p60
        %p294 = pneg %p57
        %s295 = sand.u32 %s73, 1
        %s296 = sand.u32 %s73, 1
        %s297 = smul.addr %s296, 2
        %s298 = scalar_lea.vmem [#allocation2], %s297
        %p299 = pneg %p86
        %p300 = pneg %p83
        %s301 = sand.u32 %s99, 1
        %s302 = sand.u32 %s99, 1
        %s303 = smul.addr %s302, 8
        %s304 = scalar_lea.vmem [#allocation3], %s303
        %p305 = pneg %p112
        %p306 = pneg %p109
        %p307 = pneg %p138
        %p308 = pneg %p135
        %s309 = sand.u32 %s125, 1
        %s310 = scalar_lea.sflag [#allocation5], %s309
        %s311 = sand.u32 %s125, 1
        %s312 = smul.addr %s311, 8
        %s313 = scalar_lea.vmem [#allocation4], %s312
        %p314 = scmp.lt.s32.totalorder %s18, 1
        %s315 = scalar_select %p314, %s18, 1
        %s316 = smul.addr %s315, 2
        %s317 = scalar_lea.vmem %s1, %s316
        %v318 = vld [vmem:[%s317] sm:$0x1]
        %v319 = vld [vmem:[%s317 + $0x1] sm:$0x1]
        %v320 = vlaneseq
        %v321 = vshrl.u32 %v320, 7
        %v322 = vsub.f32 %v318, 0.5
        %v323 = vfloor.f32 %v322
        %v324 = vadd.f32 %v323, 0.0
        %v325 = vadd.f32 %v324, 0.5
        %v326 = vsub.f32 %v325, %v318
        %v327 = vand.u32 2147483647, %v326
        %v328 = vsub.f32 1.0, %v327
        %v329 = vmax.f32 %v328, 0.0
        %v330 = vcvt.f32.s32.to.zero.pseudo %v324
        %vm331 = vcmp.gt.s32.totalorder %v330, 0
        %v332 = vsel %vm331, %v330, 0
        %vm333 = vcmp.lt.s32.totalorder %v332, 7
        %v334 = vsel %vm333, %v332, 7
        %v335 = vlaneseq
        %v336 = vshrl.u32 %v335, 7
        %v337 = vsub.s32 0, %v336
        %v338 = vrot.slane %v334, %v337
        %vm339 = vcmp.eq.s32.totalorder %v338, %v321
        %v340 = vlaneseq
        %v341 = vshrl.u32 %v340, 7
        %v342 = vsub.s32 0, %v341
        %v343 = vrot.slane %v329, %v342
        %v344 = vsel %vm339, %v343, 0.0
        %v345 = vadd.f32 %v344, 0.0
        %v346 = vadd.f32 %v323, 1.0
        %v347 = vadd.f32 %v346, 0.5
        %v348 = vsub.f32 %v347, %v318
        %v349 = vand.u32 2147483647, %v348
        %v350 = vsub.f32 1.0, %v349
        %v351 = vmax.f32 %v350, 0.0
        %v352 = vcvt.f32.s32.to.zero.pseudo %v346
        %vm353 = vcmp.gt.s32.totalorder %v352, 0
        %v354 = vsel %vm353, %v352, 0
        %vm355 = vcmp.lt.s32.totalorder %v354, 7
        %v356 = vsel %vm355, %v354, 7
        %v357 = vlaneseq
        %v358 = vshrl.u32 %v357, 7
        %v359 = vsub.s32 0, %v358
        %v360 = vrot.slane %v356, %v359
        %vm361 = vcmp.eq.s32.totalorder %v360, %v321
        %v362 = vlaneseq
        %v363 = vshrl.u32 %v362, 7
        %v364 = vsub.s32 0, %v363
        %v365 = vrot.slane %v351, %v364
        %v366 = vsel %vm361, %v365, 0.0
        %v367 = vadd.f32 %v345, %v366
        %v368 = vsub.f32 %v319, 0.5
        %v369 = vfloor.f32 %v368
        %v370 = vadd.f32 %v369, 0.0
        %v371 = vadd.f32 %v370, 0.5
        %v372 = vsub.f32 %v371, %v319
        %v373 = vand.u32 2147483647, %v372
        %v374 = vsub.f32 1.0, %v373
        %v375 = vmax.f32 %v374, 0.0
        %v376 = vcvt.f32.s32.to.zero.pseudo %v370
        %vm377 = vcmp.gt.s32.totalorder %v376, 0
        %v378 = vsel %vm377, %v376, 0
        %vm379 = vcmp.lt.s32.totalorder %v378, 7
        %v380 = vsel %vm379, %v378, 7
        %v381 = vlaneseq
        %v382 = vshrl.u32 %v381, 7
        %v383 = vsub.s32 0, %v382
        %v384 = vrot.slane %v380, %v383
        %vm385 = vcmp.eq.s32.totalorder %v384, %v321
        %v386 = vlaneseq
        %v387 = vshrl.u32 %v386, 7
        %v388 = vsub.s32 0, %v387
        %v389 = vrot.slane %v375, %v388
        %v390 = vsel %vm385, %v389, 0.0
        %v391 = vadd.f32 %v390, 0.0
        %v392 = vadd.f32 %v369, 1.0
        %v393 = vadd.f32 %v392, 0.5
        %v394 = vsub.f32 %v393, %v319
        %v395 = vand.u32 2147483647, %v394
        %v396 = vsub.f32 1.0, %v395
        %v397 = vmax.f32 %v396, 0.0
        %v398 = vcvt.f32.s32.to.zero.pseudo %v392
        %vm399 = vcmp.gt.s32.totalorder %v398, 0
        %v400 = vsel %vm399, %v398, 0
        %vm401 = vcmp.lt.s32.totalorder %v400, 7
        %v402 = vsel %vm401, %v400, 7
        %v403 = vlaneseq
        %v404 = vshrl.u32 %v403, 7
        %v405 = vsub.s32 0, %v404
        %v406 = vrot.slane %v402, %v405
        %vm407 = vcmp.eq.s32.totalorder %v406, %v321
        %v408 = vlaneseq
        %v409 = vshrl.u32 %v408, 7
        %v410 = vsub.s32 0, %v409
        %v411 = vrot.slane %v397, %v410
        %v412 = vsel %vm407, %v411, 0.0
        %v413 = vadd.f32 %v391, %v412
        %v415 = vcombine.high %v367, %v367
        %v417 = vunpack.c.l.s4 1966171168
        %v418 = vunpack.c.0.s8 %v417
        %v419 = vlaneseq
        %v420 = vshrl.u32 %v419, 7
        %v421 = vsub.s32 %v418, %v420
        %v422 = vrot.slane %v367, %v421
        %v424 = vunpack.c.l.s4 1966171168
        %v425 = vunpack.c.0.s8 %v424
        %v426 = vlaneseq
        %v427 = vshrl.u32 %v426, 7
        %v428 = vsub.s32 %v425, %v427
        %v429 = vrot.slane %v415, %v428
        %v430 = vcombine.high %v422, %v422
        %v431 = vcombine.high %v429, %v429
        %v433 = vunpack.c.l.s4 1966171168
        %v434 = vunpack.c.0.s8 %v433
        %v435 = vlaneseq
        %v436 = vshrl.u32 %v435, 7
        %v437 = vsub.s32 %v434, %v436
        %v438 = vrot.slane %v422, %v437
        %v440 = vunpack.c.l.s4 1966171168
        %v441 = vunpack.c.0.s8 %v440
        %v442 = vlaneseq
        %v443 = vshrl.u32 %v442, 7
        %v444 = vsub.s32 %v441, %v443
        %v445 = vrot.slane %v429, %v444
        %v447 = vunpack.c.l.s4 1966171168
        %v448 = vunpack.c.0.s8 %v447
        %v449 = vlaneseq
        %v450 = vshrl.u32 %v449, 7
        %v451 = vsub.s32 %v448, %v450
        %v452 = vrot.slane %v430, %v451
        %v454 = vunpack.c.l.s4 1966171168
        %v455 = vunpack.c.0.s8 %v454
        %v456 = vlaneseq
        %v457 = vshrl.u32 %v456, 7
        %v458 = vsub.s32 %v455, %v457
        %v459 = vrot.slane %v431, %v458
        %v460 = vcombine.high %v438, %v438
        %v461 = vcombine.high %v445, %v445
        %v462 = vcombine.high %v452, %v452
        %v463 = vcombine.high %v459, %v459
        %v464 = vlaneseq
        %v465 = vshrl.u32 %v464, 7
        %v466 = vsub.s32 0, %v465
        %v467 = vrot.slane %v438, %v466
        %v468 = vlaneseq
        %v469 = vshrl.u32 %v468, 7
        %v470 = vsub.s32 0, %v469
        %v471 = vrot.slane %v452, %v470
        %v472 = vlaneseq
        %v473 = vshrl.u32 %v472, 7
        %v474 = vsub.s32 0, %v473
        %v475 = vrot.slane %v460, %v474
        %v476 = vlaneseq
        %v477 = vshrl.u32 %v476, 7
        %v478 = vsub.s32 0, %v477
        %v479 = vrot.slane %v462, %v478
        %v480 = vlaneseq
        %v481 = vshrl.u32 %v480, 7
        %v482 = vsub.s32 0, %v481
        %v483 = vrot.slane %v445, %v482
        %v484 = vlaneseq
        %v485 = vshrl.u32 %v484, 7
        %v486 = vsub.s32 0, %v485
        %v487 = vrot.slane %v459, %v486
        %v488 = vlaneseq
        %v489 = vshrl.u32 %v488, 7
        %v490 = vsub.s32 0, %v489
        %v491 = vrot.slane %v461, %v490
        %v492 = vlaneseq
        %v493 = vshrl.u32 %v492, 7
        %v494 = vsub.s32 0, %v493
        %v495 = vrot.slane %v463, %v494
        %v504 = vmul.f32 %v467, %v413
        %v505 = vmul.f32 %v471, %v413
        %v506 = vmul.f32 %v475, %v413
        %v507 = vmul.f32 %v479, %v413
        %v508 = vmul.f32 %v483, %v413
        %v509 = vmul.f32 %v487, %v413
        %v510 = vmul.f32 %v491, %v413
        %v511 = vmul.f32 %v495, %v413
        %v512 = vld [vmem:[%s0] sm:$0xff]
        %v513 = vld [vmem:[%s0 + $0x8] sm:$0xff]
        %v514 = vld [vmem:[%s0 + $0x10] sm:$0xff]
        %v515 = vld [vmem:[%s0 + $0x18] sm:$0xff]
        %v516 = vld [vmem:[%s0 + $0x20] sm:$0xff]
        %v517 = vld [vmem:[%s0 + $0x28] sm:$0xff]
        %v518 = vld [vmem:[%s0 + $0x30] sm:$0xff]
        %v519 = vld [vmem:[%s0 + $0x38] sm:$0xff]
        %v520 = vld [vmem:[%s0 + $0x40] sm:$0xff]
        %v521 = vld [vmem:[%s0 + $0x48] sm:$0xff]
        %v522 = vld [vmem:[%s0 + $0x50] sm:$0xff]
        %v523 = vld [vmem:[%s0 + $0x58] sm:$0xff]
        %v524 = vld [vmem:[%s0 + $0x60] sm:$0xff]
        %v525 = vld [vmem:[%s0 + $0x68] sm:$0xff]
        %v526 = vld [vmem:[%s0 + $0x70] sm:$0xff]
        %v527 = vld [vmem:[%s0 + $0x78] sm:$0xff]
        %v528 = vld [vmem:[%s0 + $0x80] sm:$0xff]
        %v529 = vld [vmem:[%s0 + $0x88] sm:$0xff]
        %v530 = vld [vmem:[%s0 + $0x90] sm:$0xff]
        %v531 = vld [vmem:[%s0 + $0x98] sm:$0xff]
        %v532 = vld [vmem:[%s0 + $0xa0] sm:$0xff]
        %v533 = vld [vmem:[%s0 + $0xa8] sm:$0xff]
        %v534 = vld [vmem:[%s0 + $0xb0] sm:$0xff]
        %v535 = vld [vmem:[%s0 + $0xb8] sm:$0xff]
        %v536 = vld [vmem:[%s0 + $0xc0] sm:$0xff]
        %v537 = vld [vmem:[%s0 + $0xc8] sm:$0xff]
        %v538 = vld [vmem:[%s0 + $0xd0] sm:$0xff]
        %v539 = vld [vmem:[%s0 + $0xd8] sm:$0xff]
        %v540 = vld [vmem:[%s0 + $0xe0] sm:$0xff]
        %v541 = vld [vmem:[%s0 + $0xe8] sm:$0xff]
        %v542 = vld [vmem:[%s0 + $0xf0] sm:$0xff]
        %v543 = vld [vmem:[%s0 + $0xf8] sm:$0xff]
        %vm544 = vcmask 523264
        %v546 = vsel %vm544, %v512, 0
        %v549 = vsel %vm544, %v513, 0
        %v552 = vsel %vm544, %v514, 0
        %v555 = vsel %vm544, %v515, 0
        %v558 = vsel %vm544, %v516, 0
        %v561 = vsel %vm544, %v517, 0
        %v564 = vsel %vm544, %v518, 0
        %v567 = vsel %vm544, %v519, 0
        %v570 = vsel %vm544, %v520, 0
        %v573 = vsel %vm544, %v521, 0
        %v576 = vsel %vm544, %v522, 0
        %v579 = vsel %vm544, %v523, 0
        %v582 = vsel %vm544, %v524, 0
        %v585 = vsel %vm544, %v525, 0
        %v588 = vsel %vm544, %v526, 0
        %v591 = vsel %vm544, %v527, 0
        %v594 = vsel %vm544, %v528, 0
        %v597 = vsel %vm544, %v529, 0
        %v600 = vsel %vm544, %v530, 0
        %v603 = vsel %vm544, %v531, 0
        %v606 = vsel %vm544, %v532, 0
        %v609 = vsel %vm544, %v533, 0
        %v612 = vsel %vm544, %v534, 0
        %v615 = vsel %vm544, %v535, 0
        %v618 = vsel %vm544, %v536, 0
        %v621 = vsel %vm544, %v537, 0
        %v624 = vsel %vm544, %v538, 0
        %v627 = vsel %vm544, %v539, 0
        %v630 = vsel %vm544, %v540, 0
        %v633 = vsel %vm544, %v541, 0
        %v636 = vsel %vm544, %v542, 0
        %v639 = vsel %vm544, %v543, 0
        %641 = vmatprep.subr.mxu0 0.0
        %642 = vmatpush1.msra.mxu0 0.0
        %643 = vmatprep.subr.mxu0 0.0
        %644 = vmatpush1.msra.mxu0 0.0
        %645 = vmatprep.subr.mxu0 0.0
        %646 = vmatpush1.msra.mxu0 0.0
        %647 = vmatprep.subr.mxu0 0.0
        %648 = vmatpush1.msra.mxu0 0.0
        %649 = vmatprep.subr.mxu0 0.0
        %650 = vmatpush1.msra.mxu0 0.0
        %651 = vmatprep.subr.mxu0 0.0
        %652 = vmatpush1.msra.mxu0 0.0
        %653 = vmatprep.subr.mxu0 0.0
        %654 = vmatpush1.msra.mxu0 0.0
        %655 = vmatprep.subr.mxu0 0.0
        %656 = vmatpush1.msra.mxu0 0.0
        %657 = vmatprep.subr.mxu0 0.0
        %v658 = vand.u32 %v511, 4294901760
        %659 = vmatpush1.msra.mxu0 %v658
        %660 = vmatprep.subr.mxu0 0.0
        %v661 = vand.u32 %v510, 4294901760
        %662 = vmatpush1.msra.mxu0 %v661
        %663 = vmatprep.subr.mxu0 0.0
        %v664 = vand.u32 %v509, 4294901760
        %665 = vmatpush1.msra.mxu0 %v664
        %666 = vmatprep.subr.mxu0 0.0
        %v667 = vand.u32 %v508, 4294901760
        %668 = vmatpush1.msra.mxu0 %v667
        %669 = vmatprep.subr.mxu0 0.0
        %v670 = vand.u32 %v507, 4294901760
        %671 = vmatpush1.msra.mxu0 %v670
        %672 = vmatprep.subr.mxu0 0.0
        %v673 = vand.u32 %v506, 4294901760
        %674 = vmatpush1.msra.mxu0 %v673
        %675 = vmatprep.subr.mxu0 0.0
        %v676 = vand.u32 %v505, 4294901760
        %677 = vmatpush1.msra.mxu0 %v676
        %678 = vmatprep.subr.mxu0 0.0
        %v679 = vand.u32 %v504, 4294901760
        %680 = vmatpush1.msra.mxu0 %v679
        %681 = vmatprep.subr.mxu0 0.0
        %682 = vmatpush2.msra.mxu0 0.0
        %683 = vmatprep.subr.mxu0 0.0
        %684 = vmatpush2.msra.mxu0 0.0
        %685 = vmatprep.subr.mxu0 0.0
        %686 = vmatpush2.msra.mxu0 0.0
        %687 = vmatprep.subr.mxu0 0.0
        %688 = vmatpush2.msra.mxu0 0.0
        %689 = vmatprep.subr.mxu0 0.0
        %690 = vmatpush2.msra.mxu0 0.0
        %691 = vmatprep.subr.mxu0 0.0
        %692 = vmatpush2.msra.mxu0 0.0
        %693 = vmatprep.subr.mxu0 0.0
        %694 = vmatpush2.msra.mxu0 0.0
        %695 = vmatprep.subr.mxu0 0.0
        %696 = vmatpush2.msra.mxu0 0.0
        %697 = vmatprep.subr.mxu0 0.0
        %698 = vmatpush2.msra.mxu0 0.0
        %699 = vmatprep.subr.mxu0 0.0
        %700 = vmatpush2.msra.mxu0 0.0
        %701 = vmatprep.subr.mxu0 0.0
        %702 = vmatpush2.msra.mxu0 0.0
        %703 = vmatprep.subr.mxu0 0.0
        %704 = vmatpush2.msra.mxu0 0.0
        %705 = vmatprep.subr.mxu0 0.0
        %706 = vmatpush2.msra.mxu0 0.0
        %707 = vmatprep.subr.mxu0 0.0
        %708 = vmatpush2.msra.mxu0 0.0
        %709 = vmatprep.subr.mxu0 0.0
        %710 = vmatpush2.msra.mxu0 0.0
        %711 = vmatprep.subr.mxu0 0.0
        %712 = vmatpush2.msra.mxu0 0.0
        %713 = vmatprep.mubr.f32.mxu0 0.0
        %v714 = vand.u32 %v546, 4294901760
        %v715 = vsub.f32 %v546, %v714
        %v716 = vand.u32 %v715, 4294901760
        %v717 = vsub.f32 %v715, %v716
        %v718 = vand.u32 %v717, 4294901760
        %719 = vmatmul.mubr.f32.gmra.mxu0 %v718
        %v720 = vpop.f32.mrf.mxu0
        %v721 = vadd.f32 0.0, %v720
        %v722 = vpop.f32.mrf.mxu0
        %723 = vmatprep.mubr.f32.mxu0 0.0
        %v724 = vand.u32 %v549, 4294901760
        %v725 = vsub.f32 %v549, %v724
        %v726 = vand.u32 %v725, 4294901760
        %v727 = vsub.f32 %v725, %v726
        %v728 = vand.u32 %v727, 4294901760
        %729 = vmatmul.mubr.f32.gmra.mxu0 %v728
        %v730 = vpop.f32.mrf.mxu0
        %v731 = vadd.f32 0.0, %v730
        %v732 = vpop.f32.mrf.mxu0
        %733 = vmatprep.mubr.f32.mxu0 0.0
        %v734 = vand.u32 %v552, 4294901760
        %v735 = vsub.f32 %v552, %v734
        %v736 = vand.u32 %v735, 4294901760
        %v737 = vsub.f32 %v735, %v736
        %v738 = vand.u32 %v737, 4294901760
        %739 = vmatmul.mubr.f32.gmra.mxu0 %v738
        %v740 = vpop.f32.mrf.mxu0
        %v741 = vadd.f32 0.0, %v740
        %v742 = vpop.f32.mrf.mxu0
        %743 = vmatprep.mubr.f32.mxu0 0.0
        %v744 = vand.u32 %v555, 4294901760
        %v745 = vsub.f32 %v555, %v744
        %v746 = vand.u32 %v745, 4294901760
        %v747 = vsub.f32 %v745, %v746
        %v748 = vand.u32 %v747, 4294901760
        %749 = vmatmul.mubr.f32.gmra.mxu0 %v748
        %v750 = vpop.f32.mrf.mxu0
        %v751 = vadd.f32 0.0, %v750
        %v752 = vpop.f32.mrf.mxu0
        %753 = vmatprep.mubr.f32.mxu0 0.0
        %v754 = vand.u32 %v558, 4294901760
        %v755 = vsub.f32 %v558, %v754
        %v756 = vand.u32 %v755, 4294901760
        %v757 = vsub.f32 %v755, %v756
        %v758 = vand.u32 %v757, 4294901760
        %759 = vmatmul.mubr.f32.gmra.mxu0 %v758
        %v760 = vpop.f32.mrf.mxu0
        %v761 = vadd.f32 0.0, %v760
        %v762 = vpop.f32.mrf.mxu0
        %763 = vmatprep.mubr.f32.mxu0 0.0
        %v764 = vand.u32 %v561, 4294901760
        %v765 = vsub.f32 %v561, %v764
        %v766 = vand.u32 %v765, 4294901760
        %v767 = vsub.f32 %v765, %v766
        %v768 = vand.u32 %v767, 4294901760
        %769 = vmatmul.mubr.f32.gmra.mxu0 %v768
        %v770 = vpop.f32.mrf.mxu0
        %v771 = vadd.f32 0.0, %v770
        %v772 = vpop.f32.mrf.mxu0
        %773 = vmatprep.mubr.f32.mxu0 0.0
        %v774 = vand.u32 %v564, 4294901760
        %v775 = vsub.f32 %v564, %v774
        %v776 = vand.u32 %v775, 4294901760
        %v777 = vsub.f32 %v775, %v776
        %v778 = vand.u32 %v777, 4294901760
        %779 = vmatmul.mubr.f32.gmra.mxu0 %v778
        %v780 = vpop.f32.mrf.mxu0
        %v781 = vadd.f32 0.0, %v780
        %v782 = vpop.f32.mrf.mxu0
        %783 = vmatprep.mubr.f32.mxu0 0.0
        %v784 = vand.u32 %v567, 4294901760
        %v785 = vsub.f32 %v567, %v784
        %v786 = vand.u32 %v785, 4294901760
        %v787 = vsub.f32 %v785, %v786
        %v788 = vand.u32 %v787, 4294901760
        %789 = vmatmul.mubr.f32.gmra.mxu0 %v788
        %v790 = vpop.f32.mrf.mxu0
        %v791 = vadd.f32 0.0, %v790
        %v792 = vpop.f32.mrf.mxu0
        %793 = vmatprep.mubr.f32.mxu0 0.0
        %v794 = vand.u32 %v570, 4294901760
        %v795 = vsub.f32 %v570, %v794
        %v796 = vand.u32 %v795, 4294901760
        %v797 = vsub.f32 %v795, %v796
        %v798 = vand.u32 %v797, 4294901760
        %799 = vmatmul.mubr.f32.gmra.mxu0 %v798
        %v800 = vpop.f32.mrf.mxu0
        %v801 = vadd.f32 0.0, %v800
        %v802 = vpop.f32.mrf.mxu0
        %803 = vmatprep.mubr.f32.mxu0 0.0
        %v804 = vand.u32 %v573, 4294901760
        %v805 = vsub.f32 %v573, %v804
        %v806 = vand.u32 %v805, 4294901760
        %v807 = vsub.f32 %v805, %v806
        %v808 = vand.u32 %v807, 4294901760
        %809 = vmatmul.mubr.f32.gmra.mxu0 %v808
        %v810 = vpop.f32.mrf.mxu0
        %v811 = vadd.f32 0.0, %v810
        %v812 = vpop.f32.mrf.mxu0
        %813 = vmatprep.mubr.f32.mxu0 0.0
        %v814 = vand.u32 %v576, 4294901760
        %v815 = vsub.f32 %v576, %v814
        %v816 = vand.u32 %v815, 4294901760
        %v817 = vsub.f32 %v815, %v816
        %v818 = vand.u32 %v817, 4294901760
        %819 = vmatmul.mubr.f32.gmra.mxu0 %v818
        %v820 = vpop.f32.mrf.mxu0
        %v821 = vadd.f32 0.0, %v820
        %v822 = vpop.f32.mrf.mxu0
        %823 = vmatprep.mubr.f32.mxu0 0.0
        %v824 = vand.u32 %v579, 4294901760
        %v825 = vsub.f32 %v579, %v824
        %v826 = vand.u32 %v825, 4294901760
        %v827 = vsub.f32 %v825, %v826
        %v828 = vand.u32 %v827, 4294901760
        %829 = vmatmul.mubr.f32.gmra.mxu0 %v828
        %v830 = vpop.f32.mrf.mxu0
        %v831 = vadd.f32 0.0, %v830
        %v832 = vpop.f32.mrf.mxu0
        %833 = vmatprep.mubr.f32.mxu0 0.0
        %v834 = vand.u32 %v582, 4294901760
        %v835 = vsub.f32 %v582, %v834
        %v836 = vand.u32 %v835, 4294901760
        %v837 = vsub.f32 %v835, %v836
        %v838 = vand.u32 %v837, 4294901760
        %839 = vmatmul.mubr.f32.gmra.mxu0 %v838
        %v840 = vpop.f32.mrf.mxu0
        %v841 = vadd.f32 0.0, %v840
        %v842 = vpop.f32.mrf.mxu0
        %843 = vmatprep.mubr.f32.mxu0 0.0
        %v844 = vand.u32 %v585, 4294901760
        %v845 = vsub.f32 %v585, %v844
        %v846 = vand.u32 %v845, 4294901760
        %v847 = vsub.f32 %v845, %v846
        %v848 = vand.u32 %v847, 4294901760
        %849 = vmatmul.mubr.f32.gmra.mxu0 %v848
        %v850 = vpop.f32.mrf.mxu0
        %v851 = vadd.f32 0.0, %v850
        %v852 = vpop.f32.mrf.mxu0
        %853 = vmatprep.mubr.f32.mxu0 0.0
        %v854 = vand.u32 %v588, 4294901760
        %v855 = vsub.f32 %v588, %v854
        %v856 = vand.u32 %v855, 4294901760
        %v857 = vsub.f32 %v855, %v856
        %v858 = vand.u32 %v857, 4294901760
        %859 = vmatmul.mubr.f32.gmra.mxu0 %v858
        %v860 = vpop.f32.mrf.mxu0
        %v861 = vadd.f32 0.0, %v860
        %v862 = vpop.f32.mrf.mxu0
        %863 = vmatprep.mubr.f32.mxu0 0.0
        %v864 = vand.u32 %v591, 4294901760
        %v865 = vsub.f32 %v591, %v864
        %v866 = vand.u32 %v865, 4294901760
        %v867 = vsub.f32 %v865, %v866
        %v868 = vand.u32 %v867, 4294901760
        %869 = vmatmul.mubr.f32.gmra.mxu0 %v868
        %v870 = vpop.f32.mrf.mxu0
        %v871 = vadd.f32 0.0, %v870
        %v872 = vpop.f32.mrf.mxu0
        %873 = vmatprep.mubr.f32.mxu0 0.0
        %v874 = vand.u32 %v594, 4294901760
        %v875 = vsub.f32 %v594, %v874
        %v876 = vand.u32 %v875, 4294901760
        %v877 = vsub.f32 %v875, %v876
        %v878 = vand.u32 %v877, 4294901760
        %879 = vmatmul.mubr.f32.gmra.mxu0 %v878
        %v880 = vpop.f32.mrf.mxu0
        %v881 = vadd.f32 0.0, %v880
        %v882 = vpop.f32.mrf.mxu0
        %883 = vmatprep.mubr.f32.mxu0 0.0
        %v884 = vand.u32 %v597, 4294901760
        %v885 = vsub.f32 %v597, %v884
        %v886 = vand.u32 %v885, 4294901760
        %v887 = vsub.f32 %v885, %v886
        %v888 = vand.u32 %v887, 4294901760
        %889 = vmatmul.mubr.f32.gmra.mxu0 %v888
        %v890 = vpop.f32.mrf.mxu0
        %v891 = vadd.f32 0.0, %v890
        %v892 = vpop.f32.mrf.mxu0
        %893 = vmatprep.mubr.f32.mxu0 0.0
        %v894 = vand.u32 %v600, 4294901760
        %v895 = vsub.f32 %v600, %v894
        %v896 = vand.u32 %v895, 4294901760
        %v897 = vsub.f32 %v895, %v896
        %v898 = vand.u32 %v897, 4294901760
        %899 = vmatmul.mubr.f32.gmra.mxu0 %v898
        %v900 = vpop.f32.mrf.mxu0
        %v901 = vadd.f32 0.0, %v900
        %v902 = vpop.f32.mrf.mxu0
        %903 = vmatprep.mubr.f32.mxu0 0.0
        %v904 = vand.u32 %v603, 4294901760
        %v905 = vsub.f32 %v603, %v904
        %v906 = vand.u32 %v905, 4294901760
        %v907 = vsub.f32 %v905, %v906
        %v908 = vand.u32 %v907, 4294901760
        %909 = vmatmul.mubr.f32.gmra.mxu0 %v908
        %v910 = vpop.f32.mrf.mxu0
        %v911 = vadd.f32 0.0, %v910
        %v912 = vpop.f32.mrf.mxu0
        %913 = vmatprep.mubr.f32.mxu0 0.0
        %v914 = vand.u32 %v606, 4294901760
        %v915 = vsub.f32 %v606, %v914
        %v916 = vand.u32 %v915, 4294901760
        %v917 = vsub.f32 %v915, %v916
        %v918 = vand.u32 %v917, 4294901760
        %919 = vmatmul.mubr.f32.gmra.mxu0 %v918
        %v920 = vpop.f32.mrf.mxu0
        %v921 = vadd.f32 0.0, %v920
        %v922 = vpop.f32.mrf.mxu0
        %923 = vmatprep.mubr.f32.mxu0 0.0
        %v924 = vand.u32 %v609, 4294901760
        %v925 = vsub.f32 %v609, %v924
        %v926 = vand.u32 %v925, 4294901760
        %v927 = vsub.f32 %v925, %v926
        %v928 = vand.u32 %v927, 4294901760
        %929 = vmatmul.mubr.f32.gmra.mxu0 %v928
        %v930 = vpop.f32.mrf.mxu0
        %v931 = vadd.f32 0.0, %v930
        %v932 = vpop.f32.mrf.mxu0
        %933 = vmatprep.mubr.f32.mxu0 0.0
        %v934 = vand.u32 %v612, 4294901760
        %v935 = vsub.f32 %v612, %v934
        %v936 = vand.u32 %v935, 4294901760
        %v937 = vsub.f32 %v935, %v936
        %v938 = vand.u32 %v937, 4294901760
        %939 = vmatmul.mubr.f32.gmra.mxu0 %v938
        %v940 = vpop.f32.mrf.mxu0
        %v941 = vadd.f32 0.0, %v940
        %v942 = vpop.f32.mrf.mxu0
        %943 = vmatprep.mubr.f32.mxu0 0.0
        %v944 = vand.u32 %v615, 4294901760
        %v945 = vsub.f32 %v615, %v944
        %v946 = vand.u32 %v945, 4294901760
        %v947 = vsub.f32 %v945, %v946
        %v948 = vand.u32 %v947, 4294901760
        %949 = vmatmul.mubr.f32.gmra.mxu0 %v948
        %v950 = vpop.f32.mrf.mxu0
        %v951 = vadd.f32 0.0, %v950
        %v952 = vpop.f32.mrf.mxu0
        %953 = vmatprep.mubr.f32.mxu0 0.0
        %v954 = vand.u32 %v618, 4294901760
        %v955 = vsub.f32 %v618, %v954
        %v956 = vand.u32 %v955, 4294901760
        %v957 = vsub.f32 %v955, %v956
        %v958 = vand.u32 %v957, 4294901760
        %959 = vmatmul.mubr.f32.gmra.mxu0 %v958
        %v960 = vpop.f32.mrf.mxu0
        %v961 = vadd.f32 0.0, %v960
        %v962 = vpop.f32.mrf.mxu0
        %963 = vmatprep.mubr.f32.mxu0 0.0
        %v964 = vand.u32 %v621, 4294901760
        %v965 = vsub.f32 %v621, %v964
        %v966 = vand.u32 %v965, 4294901760
        %v967 = vsub.f32 %v965, %v966
        %v968 = vand.u32 %v967, 4294901760
        %969 = vmatmul.mubr.f32.gmra.mxu0 %v968
        %v970 = vpop.f32.mrf.mxu0
        %v971 = vadd.f32 0.0, %v970
        %v972 = vpop.f32.mrf.mxu0
        %973 = vmatprep.mubr.f32.mxu0 0.0
        %v974 = vand.u32 %v624, 4294901760
        %v975 = vsub.f32 %v624, %v974
        %v976 = vand.u32 %v975, 4294901760
        %v977 = vsub.f32 %v975, %v976
        %v978 = vand.u32 %v977, 4294901760
        %979 = vmatmul.mubr.f32.gmra.mxu0 %v978
        %v980 = vpop.f32.mrf.mxu0
        %v981 = vadd.f32 0.0, %v980
        %v982 = vpop.f32.mrf.mxu0
        %983 = vmatprep.mubr.f32.mxu0 0.0
        %v984 = vand.u32 %v627, 4294901760
        %v985 = vsub.f32 %v627, %v984
        %v986 = vand.u32 %v985, 4294901760
        %v987 = vsub.f32 %v985, %v986
        %v988 = vand.u32 %v987, 4294901760
        %989 = vmatmul.mubr.f32.gmra.mxu0 %v988
        %v990 = vpop.f32.mrf.mxu0
        %v991 = vadd.f32 0.0, %v990
        %v992 = vpop.f32.mrf.mxu0
        %993 = vmatprep.mubr.f32.mxu0 0.0
        %v994 = vand.u32 %v630, 4294901760
        %v995 = vsub.f32 %v630, %v994
        %v996 = vand.u32 %v995, 4294901760
        %v997 = vsub.f32 %v995, %v996
        %v998 = vand.u32 %v997, 4294901760
        %999 = vmatmul.mubr.f32.gmra.mxu0 %v998
        %v1000 = vpop.f32.mrf.mxu0
        %v1001 = vadd.f32 0.0, %v1000
        %v1002 = vpop.f32.mrf.mxu0
        %1003 = vmatprep.mubr.f32.mxu0 0.0
        %v1004 = vand.u32 %v633, 4294901760
        %v1005 = vsub.f32 %v633, %v1004
        %v1006 = vand.u32 %v1005, 4294901760
        %v1007 = vsub.f32 %v1005, %v1006
        %v1008 = vand.u32 %v1007, 4294901760
        %1009 = vmatmul.mubr.f32.gmra.mxu0 %v1008
        %v1010 = vpop.f32.mrf.mxu0
        %v1011 = vadd.f32 0.0, %v1010
        %v1012 = vpop.f32.mrf.mxu0
        %1013 = vmatprep.mubr.f32.mxu0 0.0
        %v1014 = vand.u32 %v636, 4294901760
        %v1015 = vsub.f32 %v636, %v1014
        %v1016 = vand.u32 %v1015, 4294901760
        %v1017 = vsub.f32 %v1015, %v1016
        %v1018 = vand.u32 %v1017, 4294901760
        %1019 = vmatmul.mubr.f32.gmra.mxu0 %v1018
        %v1020 = vpop.f32.mrf.mxu0
        %v1021 = vadd.f32 0.0, %v1020
        %v1022 = vpop.f32.mrf.mxu0
        %1023 = vmatprep.mubr.f32.mxu0 0.0
        %v1024 = vand.u32 %v639, 4294901760
        %v1025 = vsub.f32 %v639, %v1024
        %v1026 = vand.u32 %v1025, 4294901760
        %v1027 = vsub.f32 %v1025, %v1026
        %v1028 = vand.u32 %v1027, 4294901760
        %1029 = vmatmul.mubr.f32.gmra.mxu0 %v1028
        %v1030 = vpop.f32.mrf.mxu0
        %v1031 = vadd.f32 0.0, %v1030
        %v1032 = vpop.f32.mrf.mxu0
        %1033 = vdwg.mxu0
        %1034 = vmatprep.subr.mxu0 0.0
        %1035 = vmatpush1.msra.mxu0 0.0
        %1036 = vmatprep.subr.mxu0 0.0
        %1037 = vmatpush1.msra.mxu0 0.0
        %1038 = vmatprep.subr.mxu0 0.0
        %1039 = vmatpush1.msra.mxu0 0.0
        %1040 = vmatprep.subr.mxu0 0.0
        %1041 = vmatpush1.msra.mxu0 0.0
        %1042 = vmatprep.subr.mxu0 0.0
        %1043 = vmatpush1.msra.mxu0 0.0
        %1044 = vmatprep.subr.mxu0 0.0
        %1045 = vmatpush1.msra.mxu0 0.0
        %1046 = vmatprep.subr.mxu0 0.0
        %1047 = vmatpush1.msra.mxu0 0.0
        %1048 = vmatprep.subr.mxu0 0.0
        %1049 = vmatpush1.msra.mxu0 0.0
        %1050 = vmatprep.subr.mxu0 0.0
        %v1051 = vand.u32 %v511, 4294901760
        %v1052 = vsub.f32 %v511, %v1051
        %v1053 = vand.u32 %v1052, 4294901760
        %v1054 = vsub.f32 %v1052, %v1053
        %v1055 = vand.u32 %v1054, 4294901760
        %1056 = vmatpush1.msra.mxu0 %v1055
        %1057 = vmatprep.subr.mxu0 0.0
        %v1058 = vand.u32 %v510, 4294901760
        %v1059 = vsub.f32 %v510, %v1058
        %v1060 = vand.u32 %v1059, 4294901760
        %v1061 = vsub.f32 %v1059, %v1060
        %v1062 = vand.u32 %v1061, 4294901760
        %1063 = vmatpush1.msra.mxu0 %v1062
        %1064 = vmatprep.subr.mxu0 0.0
        %v1065 = vand.u32 %v509, 4294901760
        %v1066 = vsub.f32 %v509, %v1065
        %v1067 = vand.u32 %v1066, 4294901760
        %v1068 = vsub.f32 %v1066, %v1067
        %v1069 = vand.u32 %v1068, 4294901760
        %1070 = vmatpush1.msra.mxu0 %v1069
        %1071 = vmatprep.subr.mxu0 0.0
        %v1072 = vand.u32 %v508, 4294901760
        %v1073 = vsub.f32 %v508, %v1072
        %v1074 = vand.u32 %v1073, 4294901760
        %v1075 = vsub.f32 %v1073, %v1074
        %v1076 = vand.u32 %v1075, 4294901760
        %1077 = vmatpush1.msra.mxu0 %v1076
        %1078 = vmatprep.subr.mxu0 0.0
        %v1079 = vand.u32 %v507, 4294901760
        %v1080 = vsub.f32 %v507, %v1079
        %v1081 = vand.u32 %v1080, 4294901760
        %v1082 = vsub.f32 %v1080, %v1081
        %v1083 = vand.u32 %v1082, 4294901760
        %1084 = vmatpush1.msra.mxu0 %v1083
        %1085 = vmatprep.subr.mxu0 0.0
        %v1086 = vand.u32 %v506, 4294901760
        %v1087 = vsub.f32 %v506, %v1086
        %v1088 = vand.u32 %v1087, 4294901760
        %v1089 = vsub.f32 %v1087, %v1088
        %v1090 = vand.u32 %v1089, 4294901760
        %1091 = vmatpush1.msra.mxu0 %v1090
        %1092 = vmatprep.subr.mxu0 0.0
        %v1093 = vand.u32 %v505, 4294901760
        %v1094 = vsub.f32 %v505, %v1093
        %v1095 = vand.u32 %v1094, 4294901760
        %v1096 = vsub.f32 %v1094, %v1095
        %v1097 = vand.u32 %v1096, 4294901760
        %1098 = vmatpush1.msra.mxu0 %v1097
        %1099 = vmatprep.subr.mxu0 0.0
        %v1100 = vand.u32 %v504, 4294901760
        %v1101 = vsub.f32 %v504, %v1100
        %v1102 = vand.u32 %v1101, 4294901760
        %v1103 = vsub.f32 %v1101, %v1102
        %v1104 = vand.u32 %v1103, 4294901760
        %1105 = vmatpush1.msra.mxu0 %v1104
        %1106 = vmatprep.subr.mxu0 0.0
        %1107 = vmatpush2.msra.mxu0 0.0
        %1108 = vmatprep.subr.mxu0 0.0
        %1109 = vmatpush2.msra.mxu0 0.0
        %1110 = vmatprep.subr.mxu0 0.0
        %1111 = vmatpush2.msra.mxu0 0.0
        %1112 = vmatprep.subr.mxu0 0.0
        %1113 = vmatpush2.msra.mxu0 0.0
        %1114 = vmatprep.subr.mxu0 0.0
        %1115 = vmatpush2.msra.mxu0 0.0
        %1116 = vmatprep.subr.mxu0 0.0
        %1117 = vmatpush2.msra.mxu0 0.0
        %1118 = vmatprep.subr.mxu0 0.0
        %1119 = vmatpush2.msra.mxu0 0.0
        %1120 = vmatprep.subr.mxu0 0.0
        %1121 = vmatpush2.msra.mxu0 0.0
        %1122 = vmatprep.subr.mxu0 0.0
        %1123 = vmatpush2.msra.mxu0 0.0
        %1124 = vmatprep.subr.mxu0 0.0
        %1125 = vmatpush2.msra.mxu0 0.0
        %1126 = vmatprep.subr.mxu0 0.0
        %1127 = vmatpush2.msra.mxu0 0.0
        %1128 = vmatprep.subr.mxu0 0.0
        %1129 = vmatpush2.msra.mxu0 0.0
        %1130 = vmatprep.subr.mxu0 0.0
        %1131 = vmatpush2.msra.mxu0 0.0
        %1132 = vmatprep.subr.mxu0 0.0
        %1133 = vmatpush2.msra.mxu0 0.0
        %1134 = vmatprep.subr.mxu0 0.0
        %1135 = vmatpush2.msra.mxu0 0.0
        %1136 = vmatprep.subr.mxu0 0.0
        %1137 = vmatpush2.msra.mxu0 0.0
        %1138 = vmatprep.mubr.f32.mxu0 0.0
        %v1139 = vand.u32 %v546, 4294901760
        %1140 = vmatmul.mubr.f32.gmra.mxu0 %v1139
        %v1141 = vpop.f32.mrf.mxu0
        %v1142 = vadd.f32 %v721, %v1141
        %v1143 = vpop.f32.mrf.mxu0
        %1144 = vmatprep.mubr.f32.mxu0 0.0
        %v1145 = vand.u32 %v549, 4294901760
        %1146 = vmatmul.mubr.f32.gmra.mxu0 %v1145
        %v1147 = vpop.f32.mrf.mxu0
        %v1148 = vadd.f32 %v731, %v1147
        %v1149 = vpop.f32.mrf.mxu0
        %1150 = vmatprep.mubr.f32.mxu0 0.0
        %v1151 = vand.u32 %v552, 4294901760
        %1152 = vmatmul.mubr.f32.gmra.mxu0 %v1151
        %v1153 = vpop.f32.mrf.mxu0
        %v1154 = vadd.f32 %v741, %v1153
        %v1155 = vpop.f32.mrf.mxu0
        %1156 = vmatprep.mubr.f32.mxu0 0.0
        %v1157 = vand.u32 %v555, 4294901760
        %1158 = vmatmul.mubr.f32.gmra.mxu0 %v1157
        %v1159 = vpop.f32.mrf.mxu0
        %v1160 = vadd.f32 %v751, %v1159
        %v1161 = vpop.f32.mrf.mxu0
        %1162 = vmatprep.mubr.f32.mxu0 0.0
        %v1163 = vand.u32 %v558, 4294901760
        %1164 = vmatmul.mubr.f32.gmra.mxu0 %v1163
        %v1165 = vpop.f32.mrf.mxu0
        %v1166 = vadd.f32 %v761, %v1165
        %v1167 = vpop.f32.mrf.mxu0
        %1168 = vmatprep.mubr.f32.mxu0 0.0
        %v1169 = vand.u32 %v561, 4294901760
        %1170 = vmatmul.mubr.f32.gmra.mxu0 %v1169
        %v1171 = vpop.f32.mrf.mxu0
        %v1172 = vadd.f32 %v771, %v1171
        %v1173 = vpop.f32.mrf.mxu0
        %1174 = vmatprep.mubr.f32.mxu0 0.0
        %v1175 = vand.u32 %v564, 4294901760
        %1176 = vmatmul.mubr.f32.gmra.mxu0 %v1175
        %v1177 = vpop.f32.mrf.mxu0
        %v1178 = vadd.f32 %v781, %v1177
        %v1179 = vpop.f32.mrf.mxu0
        %1180 = vmatprep.mubr.f32.mxu0 0.0
        %v1181 = vand.u32 %v567, 4294901760
        %1182 = vmatmul.mubr.f32.gmra.mxu0 %v1181
        %v1183 = vpop.f32.mrf.mxu0
        %v1184 = vadd.f32 %v791, %v1183
        %v1185 = vpop.f32.mrf.mxu0
        %1186 = vmatprep.mubr.f32.mxu0 0.0
        %v1187 = vand.u32 %v570, 4294901760
        %1188 = vmatmul.mubr.f32.gmra.mxu0 %v1187
        %v1189 = vpop.f32.mrf.mxu0
        %v1190 = vadd.f32 %v801, %v1189
        %v1191 = vpop.f32.mrf.mxu0
        %1192 = vmatprep.mubr.f32.mxu0 0.0
        %v1193 = vand.u32 %v573, 4294901760
        %1194 = vmatmul.mubr.f32.gmra.mxu0 %v1193
        %v1195 = vpop.f32.mrf.mxu0
        %v1196 = vadd.f32 %v811, %v1195
        %v1197 = vpop.f32.mrf.mxu0
        %1198 = vmatprep.mubr.f32.mxu0 0.0
        %v1199 = vand.u32 %v576, 4294901760
        %1200 = vmatmul.mubr.f32.gmra.mxu0 %v1199
        %v1201 = vpop.f32.mrf.mxu0
        %v1202 = vadd.f32 %v821, %v1201
        %v1203 = vpop.f32.mrf.mxu0
        %1204 = vmatprep.mubr.f32.mxu0 0.0
        %v1205 = vand.u32 %v579, 4294901760
        %1206 = vmatmul.mubr.f32.gmra.mxu0 %v1205
        %v1207 = vpop.f32.mrf.mxu0
        %v1208 = vadd.f32 %v831, %v1207
        %v1209 = vpop.f32.mrf.mxu0
        %1210 = vmatprep.mubr.f32.mxu0 0.0
        %v1211 = vand.u32 %v582, 4294901760
        %1212 = vmatmul.mubr.f32.gmra.mxu0 %v1211
        %v1213 = vpop.f32.mrf.mxu0
        %v1214 = vadd.f32 %v841, %v1213
        %v1215 = vpop.f32.mrf.mxu0
        %1216 = vmatprep.mubr.f32.mxu0 0.0
        %v1217 = vand.u32 %v585, 4294901760
        %1218 = vmatmul.mubr.f32.gmra.mxu0 %v1217
        %v1219 = vpop.f32.mrf.mxu0
        %v1220 = vadd.f32 %v851, %v1219
        %v1221 = vpop.f32.mrf.mxu0
        %1222 = vmatprep.mubr.f32.mxu0 0.0
        %v1223 = vand.u32 %v588, 4294901760
        %1224 = vmatmul.mubr.f32.gmra.mxu0 %v1223
        %v1225 = vpop.f32.mrf.mxu0
        %v1226 = vadd.f32 %v861, %v1225
        %v1227 = vpop.f32.mrf.mxu0
        %1228 = vmatprep.mubr.f32.mxu0 0.0
        %v1229 = vand.u32 %v591, 4294901760
        %1230 = vmatmul.mubr.f32.gmra.mxu0 %v1229
        %v1231 = vpop.f32.mrf.mxu0
        %v1232 = vadd.f32 %v871, %v1231
        %v1233 = vpop.f32.mrf.mxu0
        %1234 = vmatprep.mubr.f32.mxu0 0.0
        %v1235 = vand.u32 %v594, 4294901760
        %1236 = vmatmul.mubr.f32.gmra.mxu0 %v1235
        %v1237 = vpop.f32.mrf.mxu0
        %v1238 = vadd.f32 %v881, %v1237
        %v1239 = vpop.f32.mrf.mxu0
        %1240 = vmatprep.mubr.f32.mxu0 0.0
        %v1241 = vand.u32 %v597, 4294901760
        %1242 = vmatmul.mubr.f32.gmra.mxu0 %v1241
        %v1243 = vpop.f32.mrf.mxu0
        %v1244 = vadd.f32 %v891, %v1243
        %v1245 = vpop.f32.mrf.mxu0
        %1246 = vmatprep.mubr.f32.mxu0 0.0
        %v1247 = vand.u32 %v600, 4294901760
        %1248 = vmatmul.mubr.f32.gmra.mxu0 %v1247
        %v1249 = vpop.f32.mrf.mxu0
        %v1250 = vadd.f32 %v901, %v1249
        %v1251 = vpop.f32.mrf.mxu0
        %1252 = vmatprep.mubr.f32.mxu0 0.0
        %v1253 = vand.u32 %v603, 4294901760
        %1254 = vmatmul.mubr.f32.gmra.mxu0 %v1253
        %v1255 = vpop.f32.mrf.mxu0
        %v1256 = vadd.f32 %v911, %v1255
        %v1257 = vpop.f32.mrf.mxu0
        %1258 = vmatprep.mubr.f32.mxu0 0.0
        %v1259 = vand.u32 %v606, 4294901760
        %1260 = vmatmul.mubr.f32.gmra.mxu0 %v1259
        %v1261 = vpop.f32.mrf.mxu0
        %v1262 = vadd.f32 %v921, %v1261
        %v1263 = vpop.f32.mrf.mxu0
        %1264 = vmatprep.mubr.f32.mxu0 0.0
        %v1265 = vand.u32 %v609, 4294901760
        %1266 = vmatmul.mubr.f32.gmra.mxu0 %v1265
        %v1267 = vpop.f32.mrf.mxu0
        %v1268 = vadd.f32 %v931, %v1267
        %v1269 = vpop.f32.mrf.mxu0
        %1270 = vmatprep.mubr.f32.mxu0 0.0
        %v1271 = vand.u32 %v612, 4294901760
        %1272 = vmatmul.mubr.f32.gmra.mxu0 %v1271
        %v1273 = vpop.f32.mrf.mxu0
        %v1274 = vadd.f32 %v941, %v1273
        %v1275 = vpop.f32.mrf.mxu0
        %1276 = vmatprep.mubr.f32.mxu0 0.0
        %v1277 = vand.u32 %v615, 4294901760
        %1278 = vmatmul.mubr.f32.gmra.mxu0 %v1277
        %v1279 = vpop.f32.mrf.mxu0
        %v1280 = vadd.f32 %v951, %v1279
        %v1281 = vpop.f32.mrf.mxu0
        %1282 = vmatprep.mubr.f32.mxu0 0.0
        %v1283 = vand.u32 %v618, 4294901760
        %1284 = vmatmul.mubr.f32.gmra.mxu0 %v1283
        %v1285 = vpop.f32.mrf.mxu0
        %v1286 = vadd.f32 %v961, %v1285
        %v1287 = vpop.f32.mrf.mxu0
        %1288 = vmatprep.mubr.f32.mxu0 0.0
        %v1289 = vand.u32 %v621, 4294901760
        %1290 = vmatmul.mubr.f32.gmra.mxu0 %v1289
        %v1291 = vpop.f32.mrf.mxu0
        %v1292 = vadd.f32 %v971, %v1291
        %v1293 = vpop.f32.mrf.mxu0
        %1294 = vmatprep.mubr.f32.mxu0 0.0
        %v1295 = vand.u32 %v624, 4294901760
        %1296 = vmatmul.mubr.f32.gmra.mxu0 %v1295
        %v1297 = vpop.f32.mrf.mxu0
        %v1298 = vadd.f32 %v981, %v1297
        %v1299 = vpop.f32.mrf.mxu0
        %1300 = vmatprep.mubr.f32.mxu0 0.0
        %v1301 = vand.u32 %v627, 4294901760
        %1302 = vmatmul.mubr.f32.gmra.mxu0 %v1301
        %v1303 = vpop.f32.mrf.mxu0
        %v1304 = vadd.f32 %v991, %v1303
        %v1305 = vpop.f32.mrf.mxu0
        %1306 = vmatprep.mubr.f32.mxu0 0.0
        %v1307 = vand.u32 %v630, 4294901760
        %1308 = vmatmul.mubr.f32.gmra.mxu0 %v1307
        %v1309 = vpop.f32.mrf.mxu0
        %v1310 = vadd.f32 %v1001, %v1309
        %v1311 = vpop.f32.mrf.mxu0
        %1312 = vmatprep.mubr.f32.mxu0 0.0
        %v1313 = vand.u32 %v633, 4294901760
        %1314 = vmatmul.mubr.f32.gmra.mxu0 %v1313
        %v1315 = vpop.f32.mrf.mxu0
        %v1316 = vadd.f32 %v1011, %v1315
        %v1317 = vpop.f32.mrf.mxu0
        %1318 = vmatprep.mubr.f32.mxu0 0.0
        %v1319 = vand.u32 %v636, 4294901760
        %1320 = vmatmul.mubr.f32.gmra.mxu0 %v1319
        %v1321 = vpop.f32.mrf.mxu0
        %v1322 = vadd.f32 %v1021, %v1321
        %v1323 = vpop.f32.mrf.mxu0
        %1324 = vmatprep.mubr.f32.mxu0 0.0
        %v1325 = vand.u32 %v639, 4294901760
        %1326 = vmatmul.mubr.f32.gmra.mxu0 %v1325
        %v1327 = vpop.f32.mrf.mxu0
        %v1328 = vadd.f32 %v1031, %v1327
        %v1329 = vpop.f32.mrf.mxu0
        %1330 = vdwg.mxu0
        %1331 = vmatprep.subr.mxu0 0.0
        %1332 = vmatpush1.msra.mxu0 0.0
        %1333 = vmatprep.subr.mxu0 0.0
        %1334 = vmatpush1.msra.mxu0 0.0
        %1335 = vmatprep.subr.mxu0 0.0
        %1336 = vmatpush1.msra.mxu0 0.0
        %1337 = vmatprep.subr.mxu0 0.0
        %1338 = vmatpush1.msra.mxu0 0.0
        %1339 = vmatprep.subr.mxu0 0.0
        %1340 = vmatpush1.msra.mxu0 0.0
        %1341 = vmatprep.subr.mxu0 0.0
        %1342 = vmatpush1.msra.mxu0 0.0
        %1343 = vmatprep.subr.mxu0 0.0
        %1344 = vmatpush1.msra.mxu0 0.0
        %1345 = vmatprep.subr.mxu0 0.0
        %1346 = vmatpush1.msra.mxu0 0.0
        %1347 = vmatprep.subr.mxu0 0.0
        %v1348 = vand.u32 %v511, 4294901760
        %v1349 = vsub.f32 %v511, %v1348
        %1350 = vmatpush1.msra.mxu0 %v1349
        %1351 = vmatprep.subr.mxu0 0.0
        %v1352 = vand.u32 %v510, 4294901760
        %v1353 = vsub.f32 %v510, %v1352
        %1354 = vmatpush1.msra.mxu0 %v1353
        %1355 = vmatprep.subr.mxu0 0.0
        %v1356 = vand.u32 %v509, 4294901760
        %v1357 = vsub.f32 %v509, %v1356
        %1358 = vmatpush1.msra.mxu0 %v1357
        %1359 = vmatprep.subr.mxu0 0.0
        %v1360 = vand.u32 %v508, 4294901760
        %v1361 = vsub.f32 %v508, %v1360
        %1362 = vmatpush1.msra.mxu0 %v1361
        %1363 = vmatprep.subr.mxu0 0.0
        %v1364 = vand.u32 %v507, 4294901760
        %v1365 = vsub.f32 %v507, %v1364
        %1366 = vmatpush1.msra.mxu0 %v1365
        %1367 = vmatprep.subr.mxu0 0.0
        %v1368 = vand.u32 %v506, 4294901760
        %v1369 = vsub.f32 %v506, %v1368
        %1370 = vmatpush1.msra.mxu0 %v1369
        %1371 = vmatprep.subr.mxu0 0.0
        %v1372 = vand.u32 %v505, 4294901760
        %v1373 = vsub.f32 %v505, %v1372
        %1374 = vmatpush1.msra.mxu0 %v1373
        %1375 = vmatprep.subr.mxu0 0.0
        %v1376 = vand.u32 %v504, 4294901760
        %v1377 = vsub.f32 %v504, %v1376
        %1378 = vmatpush1.msra.mxu0 %v1377
        %1379 = vmatprep.subr.mxu0 0.0
        %1380 = vmatpush2.msra.mxu0 0.0
        %1381 = vmatprep.subr.mxu0 0.0
        %1382 = vmatpush2.msra.mxu0 0.0
        %1383 = vmatprep.subr.mxu0 0.0
        %1384 = vmatpush2.msra.mxu0 0.0
        %1385 = vmatprep.subr.mxu0 0.0
        %1386 = vmatpush2.msra.mxu0 0.0
        %1387 = vmatprep.subr.mxu0 0.0
        %1388 = vmatpush2.msra.mxu0 0.0
        %1389 = vmatprep.subr.mxu0 0.0
        %1390 = vmatpush2.msra.mxu0 0.0
        %1391 = vmatprep.subr.mxu0 0.0
        %1392 = vmatpush2.msra.mxu0 0.0
        %1393 = vmatprep.subr.mxu0 0.0
        %1394 = vmatpush2.msra.mxu0 0.0
        %1395 = vmatprep.subr.mxu0 0.0
        %1396 = vmatpush2.msra.mxu0 0.0
        %1397 = vmatprep.subr.mxu0 0.0
        %1398 = vmatpush2.msra.mxu0 0.0
        %1399 = vmatprep.subr.mxu0 0.0
        %1400 = vmatpush2.msra.mxu0 0.0
        %1401 = vmatprep.subr.mxu0 0.0
        %1402 = vmatpush2.msra.mxu0 0.0
        %1403 = vmatprep.subr.mxu0 0.0
        %1404 = vmatpush2.msra.mxu0 0.0
        %1405 = vmatprep.subr.mxu0 0.0
        %1406 = vmatpush2.msra.mxu0 0.0
        %1407 = vmatprep.subr.mxu0 0.0
        %1408 = vmatpush2.msra.mxu0 0.0
        %1409 = vmatprep.subr.mxu0 0.0
        %1410 = vmatpush2.msra.mxu0 0.0
        %1411 = vmatprep.mubr.f32.mxu0 0.0
        %v1412 = vand.u32 %v546, 4294901760
        %v1413 = vsub.f32 %v546, %v1412
        %1414 = vmatmul.mubr.f32.gmra.mxu0 %v1413
        %v1415 = vpop.f32.mrf.mxu0
        %v1416 = vadd.f32 %v1142, %v1415
        %v1417 = vpop.f32.mrf.mxu0
        %1418 = vmatprep.mubr.f32.mxu0 0.0
        %v1419 = vand.u32 %v549, 4294901760
        %v1420 = vsub.f32 %v549, %v1419
        %1421 = vmatmul.mubr.f32.gmra.mxu0 %v1420
        %v1422 = vpop.f32.mrf.mxu0
        %v1423 = vadd.f32 %v1148, %v1422
        %v1424 = vpop.f32.mrf.mxu0
        %1425 = vmatprep.mubr.f32.mxu0 0.0
        %v1426 = vand.u32 %v552, 4294901760
        %v1427 = vsub.f32 %v552, %v1426
        %1428 = vmatmul.mubr.f32.gmra.mxu0 %v1427
        %v1429 = vpop.f32.mrf.mxu0
        %v1430 = vadd.f32 %v1154, %v1429
        %v1431 = vpop.f32.mrf.mxu0
        %1432 = vmatprep.mubr.f32.mxu0 0.0
        %v1433 = vand.u32 %v555, 4294901760
        %v1434 = vsub.f32 %v555, %v1433
        %1435 = vmatmul.mubr.f32.gmra.mxu0 %v1434
        %v1436 = vpop.f32.mrf.mxu0
        %v1437 = vadd.f32 %v1160, %v1436
        %v1438 = vpop.f32.mrf.mxu0
        %1439 = vmatprep.mubr.f32.mxu0 0.0
        %v1440 = vand.u32 %v558, 4294901760
        %v1441 = vsub.f32 %v558, %v1440
        %1442 = vmatmul.mubr.f32.gmra.mxu0 %v1441
        %v1443 = vpop.f32.mrf.mxu0
        %v1444 = vadd.f32 %v1166, %v1443
        %v1445 = vpop.f32.mrf.mxu0
        %1446 = vmatprep.mubr.f32.mxu0 0.0
        %v1447 = vand.u32 %v561, 4294901760
        %v1448 = vsub.f32 %v561, %v1447
        %1449 = vmatmul.mubr.f32.gmra.mxu0 %v1448
        %v1450 = vpop.f32.mrf.mxu0
        %v1451 = vadd.f32 %v1172, %v1450
        %v1452 = vpop.f32.mrf.mxu0
        %1453 = vmatprep.mubr.f32.mxu0 0.0
        %v1454 = vand.u32 %v564, 4294901760
        %v1455 = vsub.f32 %v564, %v1454
        %1456 = vmatmul.mubr.f32.gmra.mxu0 %v1455
        %v1457 = vpop.f32.mrf.mxu0
        %v1458 = vadd.f32 %v1178, %v1457
        %v1459 = vpop.f32.mrf.mxu0
        %1460 = vmatprep.mubr.f32.mxu0 0.0
        %v1461 = vand.u32 %v567, 4294901760
        %v1462 = vsub.f32 %v567, %v1461
        %1463 = vmatmul.mubr.f32.gmra.mxu0 %v1462
        %v1464 = vpop.f32.mrf.mxu0
        %v1465 = vadd.f32 %v1184, %v1464
        %v1466 = vpop.f32.mrf.mxu0
        %1467 = vmatprep.mubr.f32.mxu0 0.0
        %v1468 = vand.u32 %v570, 4294901760
        %v1469 = vsub.f32 %v570, %v1468
        %1470 = vmatmul.mubr.f32.gmra.mxu0 %v1469
        %v1471 = vpop.f32.mrf.mxu0
        %v1472 = vadd.f32 %v1190, %v1471
        %v1473 = vpop.f32.mrf.mxu0
        %1474 = vmatprep.mubr.f32.mxu0 0.0
        %v1475 = vand.u32 %v573, 4294901760
        %v1476 = vsub.f32 %v573, %v1475
        %1477 = vmatmul.mubr.f32.gmra.mxu0 %v1476
        %v1478 = vpop.f32.mrf.mxu0
        %v1479 = vadd.f32 %v1196, %v1478
        %v1480 = vpop.f32.mrf.mxu0
        %1481 = vmatprep.mubr.f32.mxu0 0.0
        %v1482 = vand.u32 %v576, 4294901760
        %v1483 = vsub.f32 %v576, %v1482
        %1484 = vmatmul.mubr.f32.gmra.mxu0 %v1483
        %v1485 = vpop.f32.mrf.mxu0
        %v1486 = vadd.f32 %v1202, %v1485
        %v1487 = vpop.f32.mrf.mxu0
        %1488 = vmatprep.mubr.f32.mxu0 0.0
        %v1489 = vand.u32 %v579, 4294901760
        %v1490 = vsub.f32 %v579, %v1489
        %1491 = vmatmul.mubr.f32.gmra.mxu0 %v1490
        %v1492 = vpop.f32.mrf.mxu0
        %v1493 = vadd.f32 %v1208, %v1492
        %v1494 = vpop.f32.mrf.mxu0
        %1495 = vmatprep.mubr.f32.mxu0 0.0
        %v1496 = vand.u32 %v582, 4294901760
        %v1497 = vsub.f32 %v582, %v1496
        %1498 = vmatmul.mubr.f32.gmra.mxu0 %v1497
        %v1499 = vpop.f32.mrf.mxu0
        %v1500 = vadd.f32 %v1214, %v1499
        %v1501 = vpop.f32.mrf.mxu0
        %1502 = vmatprep.mubr.f32.mxu0 0.0
        %v1503 = vand.u32 %v585, 4294901760
        %v1504 = vsub.f32 %v585, %v1503
        %1505 = vmatmul.mubr.f32.gmra.mxu0 %v1504
        %v1506 = vpop.f32.mrf.mxu0
        %v1507 = vadd.f32 %v1220, %v1506
        %v1508 = vpop.f32.mrf.mxu0
        %1509 = vmatprep.mubr.f32.mxu0 0.0
        %v1510 = vand.u32 %v588, 4294901760
        %v1511 = vsub.f32 %v588, %v1510
        %1512 = vmatmul.mubr.f32.gmra.mxu0 %v1511
        %v1513 = vpop.f32.mrf.mxu0
        %v1514 = vadd.f32 %v1226, %v1513
        %v1515 = vpop.f32.mrf.mxu0
        %1516 = vmatprep.mubr.f32.mxu0 0.0
        %v1517 = vand.u32 %v591, 4294901760
        %v1518 = vsub.f32 %v591, %v1517
        %1519 = vmatmul.mubr.f32.gmra.mxu0 %v1518
        %v1520 = vpop.f32.mrf.mxu0
        %v1521 = vadd.f32 %v1232, %v1520
        %v1522 = vpop.f32.mrf.mxu0
        %1523 = vmatprep.mubr.f32.mxu0 0.0
        %v1524 = vand.u32 %v594, 4294901760
        %v1525 = vsub.f32 %v594, %v1524
        %1526 = vmatmul.mubr.f32.gmra.mxu0 %v1525
        %v1527 = vpop.f32.mrf.mxu0
        %v1528 = vadd.f32 %v1238, %v1527
        %v1529 = vpop.f32.mrf.mxu0
        %1530 = vmatprep.mubr.f32.mxu0 0.0
        %v1531 = vand.u32 %v597, 4294901760
        %v1532 = vsub.f32 %v597, %v1531
        %1533 = vmatmul.mubr.f32.gmra.mxu0 %v1532
        %v1534 = vpop.f32.mrf.mxu0
        %v1535 = vadd.f32 %v1244, %v1534
        %v1536 = vpop.f32.mrf.mxu0
        %1537 = vmatprep.mubr.f32.mxu0 0.0
        %v1538 = vand.u32 %v600, 4294901760
        %v1539 = vsub.f32 %v600, %v1538
        %1540 = vmatmul.mubr.f32.gmra.mxu0 %v1539
        %v1541 = vpop.f32.mrf.mxu0
        %v1542 = vadd.f32 %v1250, %v1541
        %v1543 = vpop.f32.mrf.mxu0
        %1544 = vmatprep.mubr.f32.mxu0 0.0
        %v1545 = vand.u32 %v603, 4294901760
        %v1546 = vsub.f32 %v603, %v1545
        %1547 = vmatmul.mubr.f32.gmra.mxu0 %v1546
        %v1548 = vpop.f32.mrf.mxu0
        %v1549 = vadd.f32 %v1256, %v1548
        %v1550 = vpop.f32.mrf.mxu0
        %1551 = vmatprep.mubr.f32.mxu0 0.0
        %v1552 = vand.u32 %v606, 4294901760
        %v1553 = vsub.f32 %v606, %v1552
        %1554 = vmatmul.mubr.f32.gmra.mxu0 %v1553
        %v1555 = vpop.f32.mrf.mxu0
        %v1556 = vadd.f32 %v1262, %v1555
        %v1557 = vpop.f32.mrf.mxu0
        %1558 = vmatprep.mubr.f32.mxu0 0.0
        %v1559 = vand.u32 %v609, 4294901760
        %v1560 = vsub.f32 %v609, %v1559
        %1561 = vmatmul.mubr.f32.gmra.mxu0 %v1560
        %v1562 = vpop.f32.mrf.mxu0
        %v1563 = vadd.f32 %v1268, %v1562
        %v1564 = vpop.f32.mrf.mxu0
        %1565 = vmatprep.mubr.f32.mxu0 0.0
        %v1566 = vand.u32 %v612, 4294901760
        %v1567 = vsub.f32 %v612, %v1566
        %1568 = vmatmul.mubr.f32.gmra.mxu0 %v1567
        %v1569 = vpop.f32.mrf.mxu0
        %v1570 = vadd.f32 %v1274, %v1569
        %v1571 = vpop.f32.mrf.mxu0
        %1572 = vmatprep.mubr.f32.mxu0 0.0
        %v1573 = vand.u32 %v615, 4294901760
        %v1574 = vsub.f32 %v615, %v1573
        %1575 = vmatmul.mubr.f32.gmra.mxu0 %v1574
        %v1576 = vpop.f32.mrf.mxu0
        %v1577 = vadd.f32 %v1280, %v1576
        %v1578 = vpop.f32.mrf.mxu0
        %1579 = vmatprep.mubr.f32.mxu0 0.0
        %v1580 = vand.u32 %v618, 4294901760
        %v1581 = vsub.f32 %v618, %v1580
        %1582 = vmatmul.mubr.f32.gmra.mxu0 %v1581
        %v1583 = vpop.f32.mrf.mxu0
        %v1584 = vadd.f32 %v1286, %v1583
        %v1585 = vpop.f32.mrf.mxu0
        %1586 = vmatprep.mubr.f32.mxu0 0.0
        %v1587 = vand.u32 %v621, 4294901760
        %v1588 = vsub.f32 %v621, %v1587
        %1589 = vmatmul.mubr.f32.gmra.mxu0 %v1588
        %v1590 = vpop.f32.mrf.mxu0
        %v1591 = vadd.f32 %v1292, %v1590
        %v1592 = vpop.f32.mrf.mxu0
        %1593 = vmatprep.mubr.f32.mxu0 0.0
        %v1594 = vand.u32 %v624, 4294901760
        %v1595 = vsub.f32 %v624, %v1594
        %1596 = vmatmul.mubr.f32.gmra.mxu0 %v1595
        %v1597 = vpop.f32.mrf.mxu0
        %v1598 = vadd.f32 %v1298, %v1597
        %v1599 = vpop.f32.mrf.mxu0
        %1600 = vmatprep.mubr.f32.mxu0 0.0
        %v1601 = vand.u32 %v627, 4294901760
        %v1602 = vsub.f32 %v627, %v1601
        %1603 = vmatmul.mubr.f32.gmra.mxu0 %v1602
        %v1604 = vpop.f32.mrf.mxu0
        %v1605 = vadd.f32 %v1304, %v1604
        %v1606 = vpop.f32.mrf.mxu0
        %1607 = vmatprep.mubr.f32.mxu0 0.0
        %v1608 = vand.u32 %v630, 4294901760
        %v1609 = vsub.f32 %v630, %v1608
        %1610 = vmatmul.mubr.f32.gmra.mxu0 %v1609
        %v1611 = vpop.f32.mrf.mxu0
        %v1612 = vadd.f32 %v1310, %v1611
        %v1613 = vpop.f32.mrf.mxu0
        %1614 = vmatprep.mubr.f32.mxu0 0.0
        %v1615 = vand.u32 %v633, 4294901760
        %v1616 = vsub.f32 %v633, %v1615
        %1617 = vmatmul.mubr.f32.gmra.mxu0 %v1616
        %v1618 = vpop.f32.mrf.mxu0
        %v1619 = vadd.f32 %v1316, %v1618
        %v1620 = vpop.f32.mrf.mxu0
        %1621 = vmatprep.mubr.f32.mxu0 0.0
        %v1622 = vand.u32 %v636, 4294901760
        %v1623 = vsub.f32 %v636, %v1622
        %1624 = vmatmul.mubr.f32.gmra.mxu0 %v1623
        %v1625 = vpop.f32.mrf.mxu0
        %v1626 = vadd.f32 %v1322, %v1625
        %v1627 = vpop.f32.mrf.mxu0
        %1628 = vmatprep.mubr.f32.mxu0 0.0
        %v1629 = vand.u32 %v639, 4294901760
        %v1630 = vsub.f32 %v639, %v1629
        %1631 = vmatmul.mubr.f32.gmra.mxu0 %v1630
        %v1632 = vpop.f32.mrf.mxu0
        %v1633 = vadd.f32 %v1328, %v1632
        %v1634 = vpop.f32.mrf.mxu0
        %1635 = vdwg.mxu0
        %1636 = vmatprep.subr.mxu0 0.0
        %1637 = vmatpush1.msra.mxu0 0.0
        %1638 = vmatprep.subr.mxu0 0.0
        %1639 = vmatpush1.msra.mxu0 0.0
        %1640 = vmatprep.subr.mxu0 0.0
        %1641 = vmatpush1.msra.mxu0 0.0
        %1642 = vmatprep.subr.mxu0 0.0
        %1643 = vmatpush1.msra.mxu0 0.0
        %1644 = vmatprep.subr.mxu0 0.0
        %1645 = vmatpush1.msra.mxu0 0.0
        %1646 = vmatprep.subr.mxu0 0.0
        %1647 = vmatpush1.msra.mxu0 0.0
        %1648 = vmatprep.subr.mxu0 0.0
        %1649 = vmatpush1.msra.mxu0 0.0
        %1650 = vmatprep.subr.mxu0 0.0
        %1651 = vmatpush1.msra.mxu0 0.0
        %1652 = vmatprep.subr.mxu0 0.0
        %v1653 = vand.u32 %v511, 4294901760
        %1654 = vmatpush1.msra.mxu0 %v1653
        %1655 = vmatprep.subr.mxu0 0.0
        %v1656 = vand.u32 %v510, 4294901760
        %1657 = vmatpush1.msra.mxu0 %v1656
        %1658 = vmatprep.subr.mxu0 0.0
        %v1659 = vand.u32 %v509, 4294901760
        %1660 = vmatpush1.msra.mxu0 %v1659
        %1661 = vmatprep.subr.mxu0 0.0
        %v1662 = vand.u32 %v508, 4294901760
        %1663 = vmatpush1.msra.mxu0 %v1662
        %1664 = vmatprep.subr.mxu0 0.0
        %v1665 = vand.u32 %v507, 4294901760
        %1666 = vmatpush1.msra.mxu0 %v1665
        %1667 = vmatprep.subr.mxu0 0.0
        %v1668 = vand.u32 %v506, 4294901760
        %1669 = vmatpush1.msra.mxu0 %v1668
        %1670 = vmatprep.subr.mxu0 0.0
        %v1671 = vand.u32 %v505, 4294901760
        %1672 = vmatpush1.msra.mxu0 %v1671
        %1673 = vmatprep.subr.mxu0 0.0
        %v1674 = vand.u32 %v504, 4294901760
        %1675 = vmatpush1.msra.mxu0 %v1674
        %1676 = vmatprep.subr.mxu0 0.0
        %1677 = vmatpush2.msra.mxu0 0.0
        %1678 = vmatprep.subr.mxu0 0.0
        %1679 = vmatpush2.msra.mxu0 0.0
        %1680 = vmatprep.subr.mxu0 0.0
        %1681 = vmatpush2.msra.mxu0 0.0
        %1682 = vmatprep.subr.mxu0 0.0
        %1683 = vmatpush2.msra.mxu0 0.0
        %1684 = vmatprep.subr.mxu0 0.0
        %1685 = vmatpush2.msra.mxu0 0.0
        %1686 = vmatprep.subr.mxu0 0.0
        %1687 = vmatpush2.msra.mxu0 0.0
        %1688 = vmatprep.subr.mxu0 0.0
        %1689 = vmatpush2.msra.mxu0 0.0
        %1690 = vmatprep.subr.mxu0 0.0
        %1691 = vmatpush2.msra.mxu0 0.0
        %1692 = vmatprep.subr.mxu0 0.0
        %1693 = vmatpush2.msra.mxu0 0.0
        %1694 = vmatprep.subr.mxu0 0.0
        %1695 = vmatpush2.msra.mxu0 0.0
        %1696 = vmatprep.subr.mxu0 0.0
        %1697 = vmatpush2.msra.mxu0 0.0
        %1698 = vmatprep.subr.mxu0 0.0
        %1699 = vmatpush2.msra.mxu0 0.0
        %1700 = vmatprep.subr.mxu0 0.0
        %1701 = vmatpush2.msra.mxu0 0.0
        %1702 = vmatprep.subr.mxu0 0.0
        %1703 = vmatpush2.msra.mxu0 0.0
        %1704 = vmatprep.subr.mxu0 0.0
        %1705 = vmatpush2.msra.mxu0 0.0
        %1706 = vmatprep.subr.mxu0 0.0
        %1707 = vmatpush2.msra.mxu0 0.0
        %1708 = vmatprep.mubr.f32.mxu0 0.0
        %v1709 = vand.u32 %v546, 4294901760
        %v1710 = vsub.f32 %v546, %v1709
        %v1711 = vand.u32 %v1710, 4294901760
        %1712 = vmatmul.mubr.f32.gmra.mxu0 %v1711
        %v1713 = vpop.f32.mrf.mxu0
        %v1714 = vadd.f32 %v1416, %v1713
        %v1715 = vpop.f32.mrf.mxu0
        %1716 = vmatprep.mubr.f32.mxu0 0.0
        %v1717 = vand.u32 %v549, 4294901760
        %v1718 = vsub.f32 %v549, %v1717
        %v1719 = vand.u32 %v1718, 4294901760
        %1720 = vmatmul.mubr.f32.gmra.mxu0 %v1719
        %v1721 = vpop.f32.mrf.mxu0
        %v1722 = vadd.f32 %v1423, %v1721
        %v1723 = vpop.f32.mrf.mxu0
        %1724 = vmatprep.mubr.f32.mxu0 0.0
        %v1725 = vand.u32 %v552, 4294901760
        %v1726 = vsub.f32 %v552, %v1725
        %v1727 = vand.u32 %v1726, 4294901760
        %1728 = vmatmul.mubr.f32.gmra.mxu0 %v1727
        %v1729 = vpop.f32.mrf.mxu0
        %v1730 = vadd.f32 %v1430, %v1729
        %v1731 = vpop.f32.mrf.mxu0
        %1732 = vmatprep.mubr.f32.mxu0 0.0
        %v1733 = vand.u32 %v555, 4294901760
        %v1734 = vsub.f32 %v555, %v1733
        %v1735 = vand.u32 %v1734, 4294901760
        %1736 = vmatmul.mubr.f32.gmra.mxu0 %v1735
        %v1737 = vpop.f32.mrf.mxu0
        %v1738 = vadd.f32 %v1437, %v1737
        %v1739 = vpop.f32.mrf.mxu0
        %1740 = vmatprep.mubr.f32.mxu0 0.0
        %v1741 = vand.u32 %v558, 4294901760
        %v1742 = vsub.f32 %v558, %v1741
        %v1743 = vand.u32 %v1742, 4294901760
        %1744 = vmatmul.mubr.f32.gmra.mxu0 %v1743
        %v1745 = vpop.f32.mrf.mxu0
        %v1746 = vadd.f32 %v1444, %v1745
        %v1747 = vpop.f32.mrf.mxu0
        %1748 = vmatprep.mubr.f32.mxu0 0.0
        %v1749 = vand.u32 %v561, 4294901760
        %v1750 = vsub.f32 %v561, %v1749
        %v1751 = vand.u32 %v1750, 4294901760
        %1752 = vmatmul.mubr.f32.gmra.mxu0 %v1751
        %v1753 = vpop.f32.mrf.mxu0
        %v1754 = vadd.f32 %v1451, %v1753
        %v1755 = vpop.f32.mrf.mxu0
        %1756 = vmatprep.mubr.f32.mxu0 0.0
        %v1757 = vand.u32 %v564, 4294901760
        %v1758 = vsub.f32 %v564, %v1757
        %v1759 = vand.u32 %v1758, 4294901760
        %1760 = vmatmul.mubr.f32.gmra.mxu0 %v1759
        %v1761 = vpop.f32.mrf.mxu0
        %v1762 = vadd.f32 %v1458, %v1761
        %v1763 = vpop.f32.mrf.mxu0
        %1764 = vmatprep.mubr.f32.mxu0 0.0
        %v1765 = vand.u32 %v567, 4294901760
        %v1766 = vsub.f32 %v567, %v1765
        %v1767 = vand.u32 %v1766, 4294901760
        %1768 = vmatmul.mubr.f32.gmra.mxu0 %v1767
        %v1769 = vpop.f32.mrf.mxu0
        %v1770 = vadd.f32 %v1465, %v1769
        %v1771 = vpop.f32.mrf.mxu0
        %1772 = vmatprep.mubr.f32.mxu0 0.0
        %v1773 = vand.u32 %v570, 4294901760
        %v1774 = vsub.f32 %v570, %v1773
        %v1775 = vand.u32 %v1774, 4294901760
        %1776 = vmatmul.mubr.f32.gmra.mxu0 %v1775
        %v1777 = vpop.f32.mrf.mxu0
        %v1778 = vadd.f32 %v1472, %v1777
        %v1779 = vpop.f32.mrf.mxu0
        %1780 = vmatprep.mubr.f32.mxu0 0.0
        %v1781 = vand.u32 %v573, 4294901760
        %v1782 = vsub.f32 %v573, %v1781
        %v1783 = vand.u32 %v1782, 4294901760
        %1784 = vmatmul.mubr.f32.gmra.mxu0 %v1783
        %v1785 = vpop.f32.mrf.mxu0
        %v1786 = vadd.f32 %v1479, %v1785
        %v1787 = vpop.f32.mrf.mxu0
        %1788 = vmatprep.mubr.f32.mxu0 0.0
        %v1789 = vand.u32 %v576, 4294901760
        %v1790 = vsub.f32 %v576, %v1789
        %v1791 = vand.u32 %v1790, 4294901760
        %1792 = vmatmul.mubr.f32.gmra.mxu0 %v1791
        %v1793 = vpop.f32.mrf.mxu0
        %v1794 = vadd.f32 %v1486, %v1793
        %v1795 = vpop.f32.mrf.mxu0
        %1796 = vmatprep.mubr.f32.mxu0 0.0
        %v1797 = vand.u32 %v579, 4294901760
        %v1798 = vsub.f32 %v579, %v1797
        %v1799 = vand.u32 %v1798, 4294901760
        %1800 = vmatmul.mubr.f32.gmra.mxu0 %v1799
        %v1801 = vpop.f32.mrf.mxu0
        %v1802 = vadd.f32 %v1493, %v1801
        %v1803 = vpop.f32.mrf.mxu0
        %1804 = vmatprep.mubr.f32.mxu0 0.0
        %v1805 = vand.u32 %v582, 4294901760
        %v1806 = vsub.f32 %v582, %v1805
        %v1807 = vand.u32 %v1806, 4294901760
        %1808 = vmatmul.mubr.f32.gmra.mxu0 %v1807
        %v1809 = vpop.f32.mrf.mxu0
        %v1810 = vadd.f32 %v1500, %v1809
        %v1811 = vpop.f32.mrf.mxu0
        %1812 = vmatprep.mubr.f32.mxu0 0.0
        %v1813 = vand.u32 %v585, 4294901760
        %v1814 = vsub.f32 %v585, %v1813
        %v1815 = vand.u32 %v1814, 4294901760
        %1816 = vmatmul.mubr.f32.gmra.mxu0 %v1815
        %v1817 = vpop.f32.mrf.mxu0
        %v1818 = vadd.f32 %v1507, %v1817
        %v1819 = vpop.f32.mrf.mxu0
        %1820 = vmatprep.mubr.f32.mxu0 0.0
        %v1821 = vand.u32 %v588, 4294901760
        %v1822 = vsub.f32 %v588, %v1821
        %v1823 = vand.u32 %v1822, 4294901760
        %1824 = vmatmul.mubr.f32.gmra.mxu0 %v1823
        %v1825 = vpop.f32.mrf.mxu0
        %v1826 = vadd.f32 %v1514, %v1825
        %v1827 = vpop.f32.mrf.mxu0
        %1828 = vmatprep.mubr.f32.mxu0 0.0
        %v1829 = vand.u32 %v591, 4294901760
        %v1830 = vsub.f32 %v591, %v1829
        %v1831 = vand.u32 %v1830, 4294901760
        %1832 = vmatmul.mubr.f32.gmra.mxu0 %v1831
        %v1833 = vpop.f32.mrf.mxu0
        %v1834 = vadd.f32 %v1521, %v1833
        %v1835 = vpop.f32.mrf.mxu0
        %1836 = vmatprep.mubr.f32.mxu0 0.0
        %v1837 = vand.u32 %v594, 4294901760
        %v1838 = vsub.f32 %v594, %v1837
        %v1839 = vand.u32 %v1838, 4294901760
        %1840 = vmatmul.mubr.f32.gmra.mxu0 %v1839
        %v1841 = vpop.f32.mrf.mxu0
        %v1842 = vadd.f32 %v1528, %v1841
        %v1843 = vpop.f32.mrf.mxu0
        %1844 = vmatprep.mubr.f32.mxu0 0.0
        %v1845 = vand.u32 %v597, 4294901760
        %v1846 = vsub.f32 %v597, %v1845
        %v1847 = vand.u32 %v1846, 4294901760
        %1848 = vmatmul.mubr.f32.gmra.mxu0 %v1847
        %v1849 = vpop.f32.mrf.mxu0
        %v1850 = vadd.f32 %v1535, %v1849
        %v1851 = vpop.f32.mrf.mxu0
        %1852 = vmatprep.mubr.f32.mxu0 0.0
        %v1853 = vand.u32 %v600, 4294901760
        %v1854 = vsub.f32 %v600, %v1853
        %v1855 = vand.u32 %v1854, 4294901760
        %1856 = vmatmul.mubr.f32.gmra.mxu0 %v1855
        %v1857 = vpop.f32.mrf.mxu0
        %v1858 = vadd.f32 %v1542, %v1857
        %v1859 = vpop.f32.mrf.mxu0
        %1860 = vmatprep.mubr.f32.mxu0 0.0
        %v1861 = vand.u32 %v603, 4294901760
        %v1862 = vsub.f32 %v603, %v1861
        %v1863 = vand.u32 %v1862, 4294901760
        %1864 = vmatmul.mubr.f32.gmra.mxu0 %v1863
        %v1865 = vpop.f32.mrf.mxu0
        %v1866 = vadd.f32 %v1549, %v1865
        %v1867 = vpop.f32.mrf.mxu0
        %1868 = vmatprep.mubr.f32.mxu0 0.0
        %v1869 = vand.u32 %v606, 4294901760
        %v1870 = vsub.f32 %v606, %v1869
        %v1871 = vand.u32 %v1870, 4294901760
        %1872 = vmatmul.mubr.f32.gmra.mxu0 %v1871
        %v1873 = vpop.f32.mrf.mxu0
        %v1874 = vadd.f32 %v1556, %v1873
        %v1875 = vpop.f32.mrf.mxu0
        %1876 = vmatprep.mubr.f32.mxu0 0.0
        %v1877 = vand.u32 %v609, 4294901760
        %v1878 = vsub.f32 %v609, %v1877
        %v1879 = vand.u32 %v1878, 4294901760
        %1880 = vmatmul.mubr.f32.gmra.mxu0 %v1879
        %v1881 = vpop.f32.mrf.mxu0
        %v1882 = vadd.f32 %v1563, %v1881
        %v1883 = vpop.f32.mrf.mxu0
        %1884 = vmatprep.mubr.f32.mxu0 0.0
        %v1885 = vand.u32 %v612, 4294901760
        %v1886 = vsub.f32 %v612, %v1885
        %v1887 = vand.u32 %v1886, 4294901760
        %1888 = vmatmul.mubr.f32.gmra.mxu0 %v1887
        %v1889 = vpop.f32.mrf.mxu0
        %v1890 = vadd.f32 %v1570, %v1889
        %v1891 = vpop.f32.mrf.mxu0
        %1892 = vmatprep.mubr.f32.mxu0 0.0
        %v1893 = vand.u32 %v615, 4294901760
        %v1894 = vsub.f32 %v615, %v1893
        %v1895 = vand.u32 %v1894, 4294901760
        %1896 = vmatmul.mubr.f32.gmra.mxu0 %v1895
        %v1897 = vpop.f32.mrf.mxu0
        %v1898 = vadd.f32 %v1577, %v1897
        %v1899 = vpop.f32.mrf.mxu0
        %1900 = vmatprep.mubr.f32.mxu0 0.0
        %v1901 = vand.u32 %v618, 4294901760
        %v1902 = vsub.f32 %v618, %v1901
        %v1903 = vand.u32 %v1902, 4294901760
        %1904 = vmatmul.mubr.f32.gmra.mxu0 %v1903
        %v1905 = vpop.f32.mrf.mxu0
        %v1906 = vadd.f32 %v1584, %v1905
        %v1907 = vpop.f32.mrf.mxu0
        %1908 = vmatprep.mubr.f32.mxu0 0.0
        %v1909 = vand.u32 %v621, 4294901760
        %v1910 = vsub.f32 %v621, %v1909
        %v1911 = vand.u32 %v1910, 4294901760
        %1912 = vmatmul.mubr.f32.gmra.mxu0 %v1911
        %v1913 = vpop.f32.mrf.mxu0
        %v1914 = vadd.f32 %v1591, %v1913
        %v1915 = vpop.f32.mrf.mxu0
        %1916 = vmatprep.mubr.f32.mxu0 0.0
        %v1917 = vand.u32 %v624, 4294901760
        %v1918 = vsub.f32 %v624, %v1917
        %v1919 = vand.u32 %v1918, 4294901760
        %1920 = vmatmul.mubr.f32.gmra.mxu0 %v1919
        %v1921 = vpop.f32.mrf.mxu0
        %v1922 = vadd.f32 %v1598, %v1921
        %v1923 = vpop.f32.mrf.mxu0
        %1924 = vmatprep.mubr.f32.mxu0 0.0
        %v1925 = vand.u32 %v627, 4294901760
        %v1926 = vsub.f32 %v627, %v1925
        %v1927 = vand.u32 %v1926, 4294901760
        %1928 = vmatmul.mubr.f32.gmra.mxu0 %v1927
        %v1929 = vpop.f32.mrf.mxu0
        %v1930 = vadd.f32 %v1605, %v1929
        %v1931 = vpop.f32.mrf.mxu0
        %1932 = vmatprep.mubr.f32.mxu0 0.0
        %v1933 = vand.u32 %v630, 4294901760
        %v1934 = vsub.f32 %v630, %v1933
        %v1935 = vand.u32 %v1934, 4294901760
        %1936 = vmatmul.mubr.f32.gmra.mxu0 %v1935
        %v1937 = vpop.f32.mrf.mxu0
        %v1938 = vadd.f32 %v1612, %v1937
        %v1939 = vpop.f32.mrf.mxu0
        %1940 = vmatprep.mubr.f32.mxu0 0.0
        %v1941 = vand.u32 %v633, 4294901760
        %v1942 = vsub.f32 %v633, %v1941
        %v1943 = vand.u32 %v1942, 4294901760
        %1944 = vmatmul.mubr.f32.gmra.mxu0 %v1943
        %v1945 = vpop.f32.mrf.mxu0
        %v1946 = vadd.f32 %v1619, %v1945
        %v1947 = vpop.f32.mrf.mxu0
        %1948 = vmatprep.mubr.f32.mxu0 0.0
        %v1949 = vand.u32 %v636, 4294901760
        %v1950 = vsub.f32 %v636, %v1949
        %v1951 = vand.u32 %v1950, 4294901760
        %1952 = vmatmul.mubr.f32.gmra.mxu0 %v1951
        %v1953 = vpop.f32.mrf.mxu0
        %v1954 = vadd.f32 %v1626, %v1953
        %v1955 = vpop.f32.mrf.mxu0
        %1956 = vmatprep.mubr.f32.mxu0 0.0
        %v1957 = vand.u32 %v639, 4294901760
        %v1958 = vsub.f32 %v639, %v1957
        %v1959 = vand.u32 %v1958, 4294901760
        %1960 = vmatmul.mubr.f32.gmra.mxu0 %v1959
        %v1961 = vpop.f32.mrf.mxu0
        %v1962 = vadd.f32 %v1633, %v1961
        %v1963 = vpop.f32.mrf.mxu0
        %1964 = vdwg.mxu0
        %1965 = vmatprep.subr.mxu0 0.0
        %1966 = vmatpush1.msra.mxu0 0.0
        %1967 = vmatprep.subr.mxu0 0.0
        %1968 = vmatpush1.msra.mxu0 0.0
        %1969 = vmatprep.subr.mxu0 0.0
        %1970 = vmatpush1.msra.mxu0 0.0
        %1971 = vmatprep.subr.mxu0 0.0
        %1972 = vmatpush1.msra.mxu0 0.0
        %1973 = vmatprep.subr.mxu0 0.0
        %1974 = vmatpush1.msra.mxu0 0.0
        %1975 = vmatprep.subr.mxu0 0.0
        %1976 = vmatpush1.msra.mxu0 0.0
        %1977 = vmatprep.subr.mxu0 0.0
        %1978 = vmatpush1.msra.mxu0 0.0
        %1979 = vmatprep.subr.mxu0 0.0
        %1980 = vmatpush1.msra.mxu0 0.0
        %1981 = vmatprep.subr.mxu0 0.0
        %v1982 = vand.u32 %v511, 4294901760
        %v1983 = vsub.f32 %v511, %v1982
        %v1984 = vand.u32 %v1983, 4294901760
        %1985 = vmatpush1.msra.mxu0 %v1984
        %1986 = vmatprep.subr.mxu0 0.0
        %v1987 = vand.u32 %v510, 4294901760
        %v1988 = vsub.f32 %v510, %v1987
        %v1989 = vand.u32 %v1988, 4294901760
        %1990 = vmatpush1.msra.mxu0 %v1989
        %1991 = vmatprep.subr.mxu0 0.0
        %v1992 = vand.u32 %v509, 4294901760
        %v1993 = vsub.f32 %v509, %v1992
        %v1994 = vand.u32 %v1993, 4294901760
        %1995 = vmatpush1.msra.mxu0 %v1994
        %1996 = vmatprep.subr.mxu0 0.0
        %v1997 = vand.u32 %v508, 4294901760
        %v1998 = vsub.f32 %v508, %v1997
        %v1999 = vand.u32 %v1998, 4294901760
        %2000 = vmatpush1.msra.mxu0 %v1999
        %2001 = vmatprep.subr.mxu0 0.0
        %v2002 = vand.u32 %v507, 4294901760
        %v2003 = vsub.f32 %v507, %v2002
        %v2004 = vand.u32 %v2003, 4294901760
        %2005 = vmatpush1.msra.mxu0 %v2004
        %2006 = vmatprep.subr.mxu0 0.0
        %v2007 = vand.u32 %v506, 4294901760
        %v2008 = vsub.f32 %v506, %v2007
        %v2009 = vand.u32 %v2008, 4294901760
        %2010 = vmatpush1.msra.mxu0 %v2009
        %2011 = vmatprep.subr.mxu0 0.0
        %v2012 = vand.u32 %v505, 4294901760
        %v2013 = vsub.f32 %v505, %v2012
        %v2014 = vand.u32 %v2013, 4294901760
        %2015 = vmatpush1.msra.mxu0 %v2014
        %2016 = vmatprep.subr.mxu0 0.0
        %v2017 = vand.u32 %v504, 4294901760
        %v2018 = vsub.f32 %v504, %v2017
        %v2019 = vand.u32 %v2018, 4294901760
        %2020 = vmatpush1.msra.mxu0 %v2019
        %2021 = vmatprep.subr.mxu0 0.0
        %2022 = vmatpush2.msra.mxu0 0.0
        %2023 = vmatprep.subr.mxu0 0.0
        %2024 = vmatpush2.msra.mxu0 0.0
        %2025 = vmatprep.subr.mxu0 0.0
        %2026 = vmatpush2.msra.mxu0 0.0
        %2027 = vmatprep.subr.mxu0 0.0
        %2028 = vmatpush2.msra.mxu0 0.0
        %2029 = vmatprep.subr.mxu0 0.0
        %2030 = vmatpush2.msra.mxu0 0.0
        %2031 = vmatprep.subr.mxu0 0.0
        %2032 = vmatpush2.msra.mxu0 0.0
        %2033 = vmatprep.subr.mxu0 0.0
        %2034 = vmatpush2.msra.mxu0 0.0
        %2035 = vmatprep.subr.mxu0 0.0
        %2036 = vmatpush2.msra.mxu0 0.0
        %2037 = vmatprep.subr.mxu0 0.0
        %2038 = vmatpush2.msra.mxu0 0.0
        %2039 = vmatprep.subr.mxu0 0.0
        %2040 = vmatpush2.msra.mxu0 0.0
        %2041 = vmatprep.subr.mxu0 0.0
        %2042 = vmatpush2.msra.mxu0 0.0
        %2043 = vmatprep.subr.mxu0 0.0
        %2044 = vmatpush2.msra.mxu0 0.0
        %2045 = vmatprep.subr.mxu0 0.0
        %2046 = vmatpush2.msra.mxu0 0.0
        %2047 = vmatprep.subr.mxu0 0.0
        %2048 = vmatpush2.msra.mxu0 0.0
        %2049 = vmatprep.subr.mxu0 0.0
        %2050 = vmatpush2.msra.mxu0 0.0
        %2051 = vmatprep.subr.mxu0 0.0
        %2052 = vmatpush2.msra.mxu0 0.0
        %2053 = vmatprep.mubr.f32.mxu0 0.0
        %v2054 = vand.u32 %v546, 4294901760
        %2055 = vmatmul.mubr.f32.gmra.mxu0 %v2054
        %v2056 = vpop.f32.mrf.mxu0
        %v2057 = vadd.f32 %v1714, %v2056
        %v2058 = vpop.f32.mrf.mxu0
        %2059 = vmatprep.mubr.f32.mxu0 0.0
        %v2060 = vand.u32 %v549, 4294901760
        %2061 = vmatmul.mubr.f32.gmra.mxu0 %v2060
        %v2062 = vpop.f32.mrf.mxu0
        %v2063 = vadd.f32 %v1722, %v2062
        %v2064 = vpop.f32.mrf.mxu0
        %2065 = vmatprep.mubr.f32.mxu0 0.0
        %v2066 = vand.u32 %v552, 4294901760
        %2067 = vmatmul.mubr.f32.gmra.mxu0 %v2066
        %v2068 = vpop.f32.mrf.mxu0
        %v2069 = vadd.f32 %v1730, %v2068
        %v2070 = vpop.f32.mrf.mxu0
        %2071 = vmatprep.mubr.f32.mxu0 0.0
        %v2072 = vand.u32 %v555, 4294901760
        %2073 = vmatmul.mubr.f32.gmra.mxu0 %v2072
        %v2074 = vpop.f32.mrf.mxu0
        %v2075 = vadd.f32 %v1738, %v2074
        %v2076 = vpop.f32.mrf.mxu0
        %2077 = vmatprep.mubr.f32.mxu0 0.0
        %v2078 = vand.u32 %v558, 4294901760
        %2079 = vmatmul.mubr.f32.gmra.mxu0 %v2078
        %v2080 = vpop.f32.mrf.mxu0
        %v2081 = vadd.f32 %v1746, %v2080
        %v2082 = vpop.f32.mrf.mxu0
        %2083 = vmatprep.mubr.f32.mxu0 0.0
        %v2084 = vand.u32 %v561, 4294901760
        %2085 = vmatmul.mubr.f32.gmra.mxu0 %v2084
        %v2086 = vpop.f32.mrf.mxu0
        %v2087 = vadd.f32 %v1754, %v2086
        %v2088 = vpop.f32.mrf.mxu0
        %2089 = vmatprep.mubr.f32.mxu0 0.0
        %v2090 = vand.u32 %v564, 4294901760
        %2091 = vmatmul.mubr.f32.gmra.mxu0 %v2090
        %v2092 = vpop.f32.mrf.mxu0
        %v2093 = vadd.f32 %v1762, %v2092
        %v2094 = vpop.f32.mrf.mxu0
        %2095 = vmatprep.mubr.f32.mxu0 0.0
        %v2096 = vand.u32 %v567, 4294901760
        %2097 = vmatmul.mubr.f32.gmra.mxu0 %v2096
        %v2098 = vpop.f32.mrf.mxu0
        %v2099 = vadd.f32 %v1770, %v2098
        %v2100 = vpop.f32.mrf.mxu0
        %2101 = vmatprep.mubr.f32.mxu0 0.0
        %v2102 = vand.u32 %v570, 4294901760
        %2103 = vmatmul.mubr.f32.gmra.mxu0 %v2102
        %v2104 = vpop.f32.mrf.mxu0
        %v2105 = vadd.f32 %v1778, %v2104
        %v2106 = vpop.f32.mrf.mxu0
        %2107 = vmatprep.mubr.f32.mxu0 0.0
        %v2108 = vand.u32 %v573, 4294901760
        %2109 = vmatmul.mubr.f32.gmra.mxu0 %v2108
        %v2110 = vpop.f32.mrf.mxu0
        %v2111 = vadd.f32 %v1786, %v2110
        %v2112 = vpop.f32.mrf.mxu0
        %2113 = vmatprep.mubr.f32.mxu0 0.0
        %v2114 = vand.u32 %v576, 4294901760
        %2115 = vmatmul.mubr.f32.gmra.mxu0 %v2114
        %v2116 = vpop.f32.mrf.mxu0
        %v2117 = vadd.f32 %v1794, %v2116
        %v2118 = vpop.f32.mrf.mxu0
        %2119 = vmatprep.mubr.f32.mxu0 0.0
        %v2120 = vand.u32 %v579, 4294901760
        %2121 = vmatmul.mubr.f32.gmra.mxu0 %v2120
        %v2122 = vpop.f32.mrf.mxu0
        %v2123 = vadd.f32 %v1802, %v2122
        %v2124 = vpop.f32.mrf.mxu0
        %2125 = vmatprep.mubr.f32.mxu0 0.0
        %v2126 = vand.u32 %v582, 4294901760
        %2127 = vmatmul.mubr.f32.gmra.mxu0 %v2126
        %v2128 = vpop.f32.mrf.mxu0
        %v2129 = vadd.f32 %v1810, %v2128
        %v2130 = vpop.f32.mrf.mxu0
        %2131 = vmatprep.mubr.f32.mxu0 0.0
        %v2132 = vand.u32 %v585, 4294901760
        %2133 = vmatmul.mubr.f32.gmra.mxu0 %v2132
        %v2134 = vpop.f32.mrf.mxu0
        %v2135 = vadd.f32 %v1818, %v2134
        %v2136 = vpop.f32.mrf.mxu0
        %2137 = vmatprep.mubr.f32.mxu0 0.0
        %v2138 = vand.u32 %v588, 4294901760
        %2139 = vmatmul.mubr.f32.gmra.mxu0 %v2138
        %v2140 = vpop.f32.mrf.mxu0
        %v2141 = vadd.f32 %v1826, %v2140
        %v2142 = vpop.f32.mrf.mxu0
        %2143 = vmatprep.mubr.f32.mxu0 0.0
        %v2144 = vand.u32 %v591, 4294901760
        %2145 = vmatmul.mubr.f32.gmra.mxu0 %v2144
        %v2146 = vpop.f32.mrf.mxu0
        %v2147 = vadd.f32 %v1834, %v2146
        %v2148 = vpop.f32.mrf.mxu0
        %2149 = vmatprep.mubr.f32.mxu0 0.0
        %v2150 = vand.u32 %v594, 4294901760
        %2151 = vmatmul.mubr.f32.gmra.mxu0 %v2150
        %v2152 = vpop.f32.mrf.mxu0
        %v2153 = vadd.f32 %v1842, %v2152
        %v2154 = vpop.f32.mrf.mxu0
        %2155 = vmatprep.mubr.f32.mxu0 0.0
        %v2156 = vand.u32 %v597, 4294901760
        %2157 = vmatmul.mubr.f32.gmra.mxu0 %v2156
        %v2158 = vpop.f32.mrf.mxu0
        %v2159 = vadd.f32 %v1850, %v2158
        %v2160 = vpop.f32.mrf.mxu0
        %2161 = vmatprep.mubr.f32.mxu0 0.0
        %v2162 = vand.u32 %v600, 4294901760
        %2163 = vmatmul.mubr.f32.gmra.mxu0 %v2162
        %v2164 = vpop.f32.mrf.mxu0
        %v2165 = vadd.f32 %v1858, %v2164
        %v2166 = vpop.f32.mrf.mxu0
        %2167 = vmatprep.mubr.f32.mxu0 0.0
        %v2168 = vand.u32 %v603, 4294901760
        %2169 = vmatmul.mubr.f32.gmra.mxu0 %v2168
        %v2170 = vpop.f32.mrf.mxu0
        %v2171 = vadd.f32 %v1866, %v2170
        %v2172 = vpop.f32.mrf.mxu0
        %2173 = vmatprep.mubr.f32.mxu0 0.0
        %v2174 = vand.u32 %v606, 4294901760
        %2175 = vmatmul.mubr.f32.gmra.mxu0 %v2174
        %v2176 = vpop.f32.mrf.mxu0
        %v2177 = vadd.f32 %v1874, %v2176
        %v2178 = vpop.f32.mrf.mxu0
        %2179 = vmatprep.mubr.f32.mxu0 0.0
        %v2180 = vand.u32 %v609, 4294901760
        %2181 = vmatmul.mubr.f32.gmra.mxu0 %v2180
        %v2182 = vpop.f32.mrf.mxu0
        %v2183 = vadd.f32 %v1882, %v2182
        %v2184 = vpop.f32.mrf.mxu0
        %2185 = vmatprep.mubr.f32.mxu0 0.0
        %v2186 = vand.u32 %v612, 4294901760
        %2187 = vmatmul.mubr.f32.gmra.mxu0 %v2186
        %v2188 = vpop.f32.mrf.mxu0
        %v2189 = vadd.f32 %v1890, %v2188
        %v2190 = vpop.f32.mrf.mxu0
        %2191 = vmatprep.mubr.f32.mxu0 0.0
        %v2192 = vand.u32 %v615, 4294901760
        %2193 = vmatmul.mubr.f32.gmra.mxu0 %v2192
        %v2194 = vpop.f32.mrf.mxu0
        %v2195 = vadd.f32 %v1898, %v2194
        %v2196 = vpop.f32.mrf.mxu0
        %2197 = vmatprep.mubr.f32.mxu0 0.0
        %v2198 = vand.u32 %v618, 4294901760
        %2199 = vmatmul.mubr.f32.gmra.mxu0 %v2198
        %v2200 = vpop.f32.mrf.mxu0
        %v2201 = vadd.f32 %v1906, %v2200
        %v2202 = vpop.f32.mrf.mxu0
        %2203 = vmatprep.mubr.f32.mxu0 0.0
        %v2204 = vand.u32 %v621, 4294901760
        %2205 = vmatmul.mubr.f32.gmra.mxu0 %v2204
        %v2206 = vpop.f32.mrf.mxu0
        %v2207 = vadd.f32 %v1914, %v2206
        %v2208 = vpop.f32.mrf.mxu0
        %2209 = vmatprep.mubr.f32.mxu0 0.0
        %v2210 = vand.u32 %v624, 4294901760
        %2211 = vmatmul.mubr.f32.gmra.mxu0 %v2210
        %v2212 = vpop.f32.mrf.mxu0
        %v2213 = vadd.f32 %v1922, %v2212
        %v2214 = vpop.f32.mrf.mxu0
        %2215 = vmatprep.mubr.f32.mxu0 0.0
        %v2216 = vand.u32 %v627, 4294901760
        %2217 = vmatmul.mubr.f32.gmra.mxu0 %v2216
        %v2218 = vpop.f32.mrf.mxu0
        %v2219 = vadd.f32 %v1930, %v2218
        %v2220 = vpop.f32.mrf.mxu0
        %2221 = vmatprep.mubr.f32.mxu0 0.0
        %v2222 = vand.u32 %v630, 4294901760
        %2223 = vmatmul.mubr.f32.gmra.mxu0 %v2222
        %v2224 = vpop.f32.mrf.mxu0
        %v2225 = vadd.f32 %v1938, %v2224
        %v2226 = vpop.f32.mrf.mxu0
        %2227 = vmatprep.mubr.f32.mxu0 0.0
        %v2228 = vand.u32 %v633, 4294901760
        %2229 = vmatmul.mubr.f32.gmra.mxu0 %v2228
        %v2230 = vpop.f32.mrf.mxu0
        %v2231 = vadd.f32 %v1946, %v2230
        %v2232 = vpop.f32.mrf.mxu0
        %2233 = vmatprep.mubr.f32.mxu0 0.0
        %v2234 = vand.u32 %v636, 4294901760
        %2235 = vmatmul.mubr.f32.gmra.mxu0 %v2234
        %v2236 = vpop.f32.mrf.mxu0
        %v2237 = vadd.f32 %v1954, %v2236
        %v2238 = vpop.f32.mrf.mxu0
        %2239 = vmatprep.mubr.f32.mxu0 0.0
        %v2240 = vand.u32 %v639, 4294901760
        %2241 = vmatmul.mubr.f32.gmra.mxu0 %v2240
        %v2242 = vpop.f32.mrf.mxu0
        %v2243 = vadd.f32 %v1962, %v2242
        %v2244 = vpop.f32.mrf.mxu0
        %2245 = vdwg.mxu0
        %2246 = vmatprep.subr.mxu0 0.0
        %2247 = vmatpush1.msra.mxu0 0.0
        %2248 = vmatprep.subr.mxu0 0.0
        %2249 = vmatpush1.msra.mxu0 0.0
        %2250 = vmatprep.subr.mxu0 0.0
        %2251 = vmatpush1.msra.mxu0 0.0
        %2252 = vmatprep.subr.mxu0 0.0
        %2253 = vmatpush1.msra.mxu0 0.0
        %2254 = vmatprep.subr.mxu0 0.0
        %2255 = vmatpush1.msra.mxu0 0.0
        %2256 = vmatprep.subr.mxu0 0.0
        %2257 = vmatpush1.msra.mxu0 0.0
        %2258 = vmatprep.subr.mxu0 0.0
        %2259 = vmatpush1.msra.mxu0 0.0
        %2260 = vmatprep.subr.mxu0 0.0
        %2261 = vmatpush1.msra.mxu0 0.0
        %2262 = vmatprep.subr.mxu0 0.0
        %v2263 = vand.u32 %v511, 4294901760
        %2264 = vmatpush1.msra.mxu0 %v2263
        %2265 = vmatprep.subr.mxu0 0.0
        %v2266 = vand.u32 %v510, 4294901760
        %2267 = vmatpush1.msra.mxu0 %v2266
        %2268 = vmatprep.subr.mxu0 0.0
        %v2269 = vand.u32 %v509, 4294901760
        %2270 = vmatpush1.msra.mxu0 %v2269
        %2271 = vmatprep.subr.mxu0 0.0
        %v2272 = vand.u32 %v508, 4294901760
        %2273 = vmatpush1.msra.mxu0 %v2272
        %2274 = vmatprep.subr.mxu0 0.0
        %v2275 = vand.u32 %v507, 4294901760
        %2276 = vmatpush1.msra.mxu0 %v2275
        %2277 = vmatprep.subr.mxu0 0.0
        %v2278 = vand.u32 %v506, 4294901760
        %2279 = vmatpush1.msra.mxu0 %v2278
        %2280 = vmatprep.subr.mxu0 0.0
        %v2281 = vand.u32 %v505, 4294901760
        %2282 = vmatpush1.msra.mxu0 %v2281
        %2283 = vmatprep.subr.mxu0 0.0
        %v2284 = vand.u32 %v504, 4294901760
        %2285 = vmatpush1.msra.mxu0 %v2284
        %2286 = vmatprep.subr.mxu0 0.0
        %2287 = vmatpush2.msra.mxu0 0.0
        %2288 = vmatprep.subr.mxu0 0.0
        %2289 = vmatpush2.msra.mxu0 0.0
        %2290 = vmatprep.subr.mxu0 0.0
        %2291 = vmatpush2.msra.mxu0 0.0
        %2292 = vmatprep.subr.mxu0 0.0
        %2293 = vmatpush2.msra.mxu0 0.0
        %2294 = vmatprep.subr.mxu0 0.0
        %2295 = vmatpush2.msra.mxu0 0.0
        %2296 = vmatprep.subr.mxu0 0.0
        %2297 = vmatpush2.msra.mxu0 0.0
        %2298 = vmatprep.subr.mxu0 0.0
        %2299 = vmatpush2.msra.mxu0 0.0
        %2300 = vmatprep.subr.mxu0 0.0
        %2301 = vmatpush2.msra.mxu0 0.0
        %2302 = vmatprep.subr.mxu0 0.0
        %2303 = vmatpush2.msra.mxu0 0.0
        %2304 = vmatprep.subr.mxu0 0.0
        %2305 = vmatpush2.msra.mxu0 0.0
        %2306 = vmatprep.subr.mxu0 0.0
        %2307 = vmatpush2.msra.mxu0 0.0
        %2308 = vmatprep.subr.mxu0 0.0
        %2309 = vmatpush2.msra.mxu0 0.0
        %2310 = vmatprep.subr.mxu0 0.0
        %2311 = vmatpush2.msra.mxu0 0.0
        %2312 = vmatprep.subr.mxu0 0.0
        %2313 = vmatpush2.msra.mxu0 0.0
        %2314 = vmatprep.subr.mxu0 0.0
        %2315 = vmatpush2.msra.mxu0 0.0
        %2316 = vmatprep.subr.mxu0 0.0
        %2317 = vmatpush2.msra.mxu0 0.0
        %2318 = vmatprep.mubr.f32.mxu0 0.0
        %v2319 = vand.u32 %v546, 4294901760
        %2320 = vmatmul.mubr.f32.gmra.mxu0 %v2319
        %v2321 = vpop.f32.mrf.mxu0
        %v2322 = vadd.f32 %v2057, %v2321
        %v2323 = vpop.f32.mrf.mxu0
        %2324 = vmatprep.mubr.f32.mxu0 0.0
        %v2325 = vand.u32 %v549, 4294901760
        %2326 = vmatmul.mubr.f32.gmra.mxu0 %v2325
        %v2327 = vpop.f32.mrf.mxu0
        %v2328 = vadd.f32 %v2063, %v2327
        %v2329 = vpop.f32.mrf.mxu0
        %2330 = vmatprep.mubr.f32.mxu0 0.0
        %v2331 = vand.u32 %v552, 4294901760
        %2332 = vmatmul.mubr.f32.gmra.mxu0 %v2331
        %v2333 = vpop.f32.mrf.mxu0
        %v2334 = vadd.f32 %v2069, %v2333
        %v2335 = vpop.f32.mrf.mxu0
        %2336 = vmatprep.mubr.f32.mxu0 0.0
        %v2337 = vand.u32 %v555, 4294901760
        %2338 = vmatmul.mubr.f32.gmra.mxu0 %v2337
        %v2339 = vpop.f32.mrf.mxu0
        %v2340 = vadd.f32 %v2075, %v2339
        %v2341 = vpop.f32.mrf.mxu0
        %2342 = vmatprep.mubr.f32.mxu0 0.0
        %v2343 = vand.u32 %v558, 4294901760
        %2344 = vmatmul.mubr.f32.gmra.mxu0 %v2343
        %v2345 = vpop.f32.mrf.mxu0
        %v2346 = vadd.f32 %v2081, %v2345
        %v2347 = vpop.f32.mrf.mxu0
        %2348 = vmatprep.mubr.f32.mxu0 0.0
        %v2349 = vand.u32 %v561, 4294901760
        %2350 = vmatmul.mubr.f32.gmra.mxu0 %v2349
        %v2351 = vpop.f32.mrf.mxu0
        %v2352 = vadd.f32 %v2087, %v2351
        %v2353 = vpop.f32.mrf.mxu0
        %2354 = vmatprep.mubr.f32.mxu0 0.0
        %v2355 = vand.u32 %v564, 4294901760
        %2356 = vmatmul.mubr.f32.gmra.mxu0 %v2355
        %v2357 = vpop.f32.mrf.mxu0
        %v2358 = vadd.f32 %v2093, %v2357
        %v2359 = vpop.f32.mrf.mxu0
        %2360 = vmatprep.mubr.f32.mxu0 0.0
        %v2361 = vand.u32 %v567, 4294901760
        %2362 = vmatmul.mubr.f32.gmra.mxu0 %v2361
        %v2363 = vpop.f32.mrf.mxu0
        %v2364 = vadd.f32 %v2099, %v2363
        %v2365 = vpop.f32.mrf.mxu0
        %2366 = vmatprep.mubr.f32.mxu0 0.0
        %v2367 = vand.u32 %v570, 4294901760
        %2368 = vmatmul.mubr.f32.gmra.mxu0 %v2367
        %v2369 = vpop.f32.mrf.mxu0
        %v2370 = vadd.f32 %v2105, %v2369
        %v2371 = vpop.f32.mrf.mxu0
        %2372 = vmatprep.mubr.f32.mxu0 0.0
        %v2373 = vand.u32 %v573, 4294901760
        %2374 = vmatmul.mubr.f32.gmra.mxu0 %v2373
        %v2375 = vpop.f32.mrf.mxu0
        %v2376 = vadd.f32 %v2111, %v2375
        %v2377 = vpop.f32.mrf.mxu0
        %2378 = vmatprep.mubr.f32.mxu0 0.0
        %v2379 = vand.u32 %v576, 4294901760
        %2380 = vmatmul.mubr.f32.gmra.mxu0 %v2379
        %v2381 = vpop.f32.mrf.mxu0
        %v2382 = vadd.f32 %v2117, %v2381
        %v2383 = vpop.f32.mrf.mxu0
        %2384 = vmatprep.mubr.f32.mxu0 0.0
        %v2385 = vand.u32 %v579, 4294901760
        %2386 = vmatmul.mubr.f32.gmra.mxu0 %v2385
        %v2387 = vpop.f32.mrf.mxu0
        %v2388 = vadd.f32 %v2123, %v2387
        %v2389 = vpop.f32.mrf.mxu0
        %2390 = vmatprep.mubr.f32.mxu0 0.0
        %v2391 = vand.u32 %v582, 4294901760
        %2392 = vmatmul.mubr.f32.gmra.mxu0 %v2391
        %v2393 = vpop.f32.mrf.mxu0
        %v2394 = vadd.f32 %v2129, %v2393
        %v2395 = vpop.f32.mrf.mxu0
        %2396 = vmatprep.mubr.f32.mxu0 0.0
        %v2397 = vand.u32 %v585, 4294901760
        %2398 = vmatmul.mubr.f32.gmra.mxu0 %v2397
        %v2399 = vpop.f32.mrf.mxu0
        %v2400 = vadd.f32 %v2135, %v2399
        %v2401 = vpop.f32.mrf.mxu0
        %2402 = vmatprep.mubr.f32.mxu0 0.0
        %v2403 = vand.u32 %v588, 4294901760
        %2404 = vmatmul.mubr.f32.gmra.mxu0 %v2403
        %v2405 = vpop.f32.mrf.mxu0
        %v2406 = vadd.f32 %v2141, %v2405
        %v2407 = vpop.f32.mrf.mxu0
        %2408 = vmatprep.mubr.f32.mxu0 0.0
        %v2409 = vand.u32 %v591, 4294901760
        %2410 = vmatmul.mubr.f32.gmra.mxu0 %v2409
        %v2411 = vpop.f32.mrf.mxu0
        %v2412 = vadd.f32 %v2147, %v2411
        %v2413 = vpop.f32.mrf.mxu0
        %2414 = vmatprep.mubr.f32.mxu0 0.0
        %v2415 = vand.u32 %v594, 4294901760
        %2416 = vmatmul.mubr.f32.gmra.mxu0 %v2415
        %v2417 = vpop.f32.mrf.mxu0
        %v2418 = vadd.f32 %v2153, %v2417
        %v2419 = vpop.f32.mrf.mxu0
        %2420 = vmatprep.mubr.f32.mxu0 0.0
        %v2421 = vand.u32 %v597, 4294901760
        %2422 = vmatmul.mubr.f32.gmra.mxu0 %v2421
        %v2423 = vpop.f32.mrf.mxu0
        %v2424 = vadd.f32 %v2159, %v2423
        %v2425 = vpop.f32.mrf.mxu0
        %2426 = vmatprep.mubr.f32.mxu0 0.0
        %v2427 = vand.u32 %v600, 4294901760
        %2428 = vmatmul.mubr.f32.gmra.mxu0 %v2427
        %v2429 = vpop.f32.mrf.mxu0
        %v2430 = vadd.f32 %v2165, %v2429
        %v2431 = vpop.f32.mrf.mxu0
        %2432 = vmatprep.mubr.f32.mxu0 0.0
        %v2433 = vand.u32 %v603, 4294901760
        %2434 = vmatmul.mubr.f32.gmra.mxu0 %v2433
        %v2435 = vpop.f32.mrf.mxu0
        %v2436 = vadd.f32 %v2171, %v2435
        %v2437 = vpop.f32.mrf.mxu0
        %2438 = vmatprep.mubr.f32.mxu0 0.0
        %v2439 = vand.u32 %v606, 4294901760
        %2440 = vmatmul.mubr.f32.gmra.mxu0 %v2439
        %v2441 = vpop.f32.mrf.mxu0
        %v2442 = vadd.f32 %v2177, %v2441
        %v2443 = vpop.f32.mrf.mxu0
        %2444 = vmatprep.mubr.f32.mxu0 0.0
        %v2445 = vand.u32 %v609, 4294901760
        %2446 = vmatmul.mubr.f32.gmra.mxu0 %v2445
        %v2447 = vpop.f32.mrf.mxu0
        %v2448 = vadd.f32 %v2183, %v2447
        %v2449 = vpop.f32.mrf.mxu0
        %2450 = vmatprep.mubr.f32.mxu0 0.0
        %v2451 = vand.u32 %v612, 4294901760
        %2452 = vmatmul.mubr.f32.gmra.mxu0 %v2451
        %v2453 = vpop.f32.mrf.mxu0
        %v2454 = vadd.f32 %v2189, %v2453
        %v2455 = vpop.f32.mrf.mxu0
        %2456 = vmatprep.mubr.f32.mxu0 0.0
        %v2457 = vand.u32 %v615, 4294901760
        %2458 = vmatmul.mubr.f32.gmra.mxu0 %v2457
        %v2459 = vpop.f32.mrf.mxu0
        %v2460 = vadd.f32 %v2195, %v2459
        %v2461 = vpop.f32.mrf.mxu0
        %2462 = vmatprep.mubr.f32.mxu0 0.0
        %v2463 = vand.u32 %v618, 4294901760
        %2464 = vmatmul.mubr.f32.gmra.mxu0 %v2463
        %v2465 = vpop.f32.mrf.mxu0
        %v2466 = vadd.f32 %v2201, %v2465
        %v2467 = vpop.f32.mrf.mxu0
        %2468 = vmatprep.mubr.f32.mxu0 0.0
        %v2469 = vand.u32 %v621, 4294901760
        %2470 = vmatmul.mubr.f32.gmra.mxu0 %v2469
        %v2471 = vpop.f32.mrf.mxu0
        %v2472 = vadd.f32 %v2207, %v2471
        %v2473 = vpop.f32.mrf.mxu0
        %2474 = vmatprep.mubr.f32.mxu0 0.0
        %v2475 = vand.u32 %v624, 4294901760
        %2476 = vmatmul.mubr.f32.gmra.mxu0 %v2475
        %v2477 = vpop.f32.mrf.mxu0
        %v2478 = vadd.f32 %v2213, %v2477
        %v2479 = vpop.f32.mrf.mxu0
        %2480 = vmatprep.mubr.f32.mxu0 0.0
        %v2481 = vand.u32 %v627, 4294901760
        %2482 = vmatmul.mubr.f32.gmra.mxu0 %v2481
        %v2483 = vpop.f32.mrf.mxu0
        %v2484 = vadd.f32 %v2219, %v2483
        %v2485 = vpop.f32.mrf.mxu0
        %2486 = vmatprep.mubr.f32.mxu0 0.0
        %v2487 = vand.u32 %v630, 4294901760
        %2488 = vmatmul.mubr.f32.gmra.mxu0 %v2487
        %v2489 = vpop.f32.mrf.mxu0
        %v2490 = vadd.f32 %v2225, %v2489
        %v2491 = vpop.f32.mrf.mxu0
        %2492 = vmatprep.mubr.f32.mxu0 0.0
        %v2493 = vand.u32 %v633, 4294901760
        %2494 = vmatmul.mubr.f32.gmra.mxu0 %v2493
        %v2495 = vpop.f32.mrf.mxu0
        %v2496 = vadd.f32 %v2231, %v2495
        %v2497 = vpop.f32.mrf.mxu0
        %2498 = vmatprep.mubr.f32.mxu0 0.0
        %v2499 = vand.u32 %v636, 4294901760
        %2500 = vmatmul.mubr.f32.gmra.mxu0 %v2499
        %v2501 = vpop.f32.mrf.mxu0
        %v2502 = vadd.f32 %v2237, %v2501
        %v2503 = vpop.f32.mrf.mxu0
        %2504 = vmatprep.mubr.f32.mxu0 0.0
        %v2505 = vand.u32 %v639, 4294901760
        %2506 = vmatmul.mubr.f32.gmra.mxu0 %v2505
        %v2507 = vpop.f32.mrf.mxu0
        %v2508 = vadd.f32 %v2243, %v2507
        %v2509 = vpop.f32.mrf.mxu0
        %2510 = vdwg.mxu0
        %v2511 = vld [vmem:[%s276] sm:$0x1]
        %v2512 = vld [vmem:[%s276 + $0x1] sm:$0x1]
        %v2513 = vmul.f32 %v2511, 8.0
        %v2514 = vmul.f32 %v2512, 8.0
        %v2515 = vsub.f32 %v2513, 0.5
        %v2516 = vsub.f32 %v2514, 0.5
        %v2517 = vfloor.f32 %v2515
        %v2518 = vfloor.f32 %v2516
        %v2519 = vadd.f32 %v2517, 0.0
        %v2520 = vadd.f32 %v2518, 0.0
        %v2521 = vadd.f32 %v2519, 0.5
        %v2522 = vadd.f32 %v2520, 0.5
        %v2523 = vsub.f32 %v2521, %v2513
        %v2524 = vsub.f32 %v2522, %v2514
        %v2525 = vand.u32 2147483647, %v2523
        %v2526 = vand.u32 2147483647, %v2524
        %v2527 = vsub.f32 1.0, %v2525
        %v2528 = vsub.f32 1.0, %v2526
        %v2529 = vmax.f32 %v2527, 0.0
        %v2530 = vmax.f32 %v2528, 0.0
        %v2531 = vcvt.f32.s32.to.zero.pseudo %v2519
        %v2532 = vcvt.f32.s32.to.zero.pseudo %v2520
        %vm2533 = vcmp.gt.s32.totalorder %v2531, 0
        %v2534 = vsel %vm2533, %v2531, 0
        %vm2535 = vcmp.gt.s32.totalorder %v2532, 0
        %v2536 = vsel %vm2535, %v2532, 0
        %vm2537 = vcmp.lt.s32.totalorder %v2534, 7
        %v2538 = vsel %vm2537, %v2534, 7
        %vm2539 = vcmp.lt.s32.totalorder %v2536, 7
        %v2540 = vsel %vm2539, %v2536, 7
        %v2541 = vlaneseq
        %v2542 = vshrl.u32 %v2541, 7
        %v2543 = vsub.s32 0, %v2542
        %v2544 = vrot.slane %v2538, %v2543
        %v2545 = vlaneseq
        %v2546 = vshrl.u32 %v2545, 7
        %v2547 = vsub.s32 0, %v2546
        %v2548 = vrot.slane %v2540, %v2547
        %vm2549 = vcmp.eq.s32.totalorder %v2544, %v321
        %vm2550 = vcmp.eq.s32.totalorder %v2548, %v321
        %v2553 = vlaneseq
        %v2554 = vshrl.u32 %v2553, 7
        %v2555 = vsub.s32 0, %v2554
        %v2556 = vrot.slane %v2529, %v2555
        %v2557 = vlaneseq
        %v2558 = vshrl.u32 %v2557, 7
        %v2559 = vsub.s32 0, %v2558
        %v2560 = vrot.slane %v2530, %v2559
        %v2563 = vsel %vm2549, %v2556, 0.0
        %v2564 = vsel %vm2550, %v2560, 0.0
        %v2565 = vadd.f32 %v2563, 0.0
        %v2566 = vadd.f32 %v2564, 0.0
        %v2567 = vadd.f32 %v2517, 1.0
        %v2568 = vadd.f32 %v2518, 1.0
        %v2569 = vadd.f32 %v2567, 0.5
        %v2570 = vadd.f32 %v2568, 0.5
        %v2571 = vsub.f32 %v2569, %v2513
        %v2572 = vsub.f32 %v2570, %v2514
        %v2573 = vand.u32 2147483647, %v2571
        %v2574 = vand.u32 2147483647, %v2572
        %v2575 = vsub.f32 1.0, %v2573
        %v2576 = vsub.f32 1.0, %v2574
        %v2577 = vmax.f32 %v2575, 0.0
        %v2578 = vmax.f32 %v2576, 0.0
        %v2579 = vcvt.f32.s32.to.zero.pseudo %v2567
        %v2580 = vcvt.f32.s32.to.zero.pseudo %v2568
        %vm2581 = vcmp.gt.s32.totalorder %v2579, 0
        %v2582 = vsel %vm2581, %v2579, 0
        %vm2583 = vcmp.gt.s32.totalorder %v2580, 0
        %v2584 = vsel %vm2583, %v2580, 0
        %vm2585 = vcmp.lt.s32.totalorder %v2582, 7
        %v2586 = vsel %vm2585, %v2582, 7
        %vm2587 = vcmp.lt.s32.totalorder %v2584, 7
        %v2588 = vsel %vm2587, %v2584, 7
        %v2589 = vlaneseq
        %v2590 = vshrl.u32 %v2589, 7
        %v2591 = vsub.s32 0, %v2590
        %v2592 = vrot.slane %v2586, %v2591
        %v2593 = vlaneseq
        %v2594 = vshrl.u32 %v2593, 7
        %v2595 = vsub.s32 0, %v2594
        %v2596 = vrot.slane %v2588, %v2595
        %vm2597 = vcmp.eq.s32.totalorder %v2592, %v321
        %vm2598 = vcmp.eq.s32.totalorder %v2596, %v321
        %v2601 = vlaneseq
        %v2602 = vshrl.u32 %v2601, 7
        %v2603 = vsub.s32 0, %v2602
        %v2604 = vrot.slane %v2577, %v2603
        %v2605 = vlaneseq
        %v2606 = vshrl.u32 %v2605, 7
        %v2607 = vsub.s32 0, %v2606
        %v2608 = vrot.slane %v2578, %v2607
        %v2611 = vsel %vm2597, %v2604, 0.0
        %v2612 = vsel %vm2598, %v2608, 0.0
        %v2613 = vadd.f32 %v2565, %v2611
        %v2614 = vadd.f32 %v2566, %v2612
        %v2615 = vlaneseq
        %v2616 = vshrl.u32 %v2615, 7
        %v2617 = vsub.s32 0, %v2616
        %v2618 = vrot.slane %v2613, %v2617
        %v2619 = vlaneseq
        %v2620 = vshrl.u32 %v2619, 7
        %v2621 = vsub.s32 0, %v2620
        %v2622 = vrot.slane %v2614, %v2621
        %v2623 = vmul.f32 %v2322, %v2618
        %v2624 = vmul.f32 %v2328, %v2618
        %v2625 = vmul.f32 %v2418, %v2622
        %v2626 = vmul.f32 %v2424, %v2622
        %v2627 = vlaneseq
        %v2628 = vshrl.u32 %v2627, 7
        %v2629 = vsub.s32 1, %v2628
        %v2630 = vrot.slane %v2613, %v2629
        %v2631 = vlaneseq
        %v2632 = vshrl.u32 %v2631, 7
        %v2633 = vsub.s32 1, %v2632
        %v2634 = vrot.slane %v2614, %v2633
        %v2635 = vmul.f32 %v2334, %v2630
        %v2636 = vmul.f32 %v2340, %v2630
        %v2637 = vmul.f32 %v2430, %v2634
        %v2638 = vmul.f32 %v2436, %v2634
        %v2639 = vadd.f32 %v2623, %v2635
        %v2640 = vadd.f32 %v2624, %v2636
        %v2641 = vadd.f32 %v2625, %v2637
        %v2642 = vadd.f32 %v2626, %v2638
        %v2643 = vlaneseq
        %v2644 = vshrl.u32 %v2643, 7
        %v2645 = vsub.s32 2, %v2644
        %v2646 = vrot.slane %v2613, %v2645
        %v2647 = vlaneseq
        %v2648 = vshrl.u32 %v2647, 7
        %v2649 = vsub.s32 2, %v2648
        %v2650 = vrot.slane %v2614, %v2649
        %v2651 = vmul.f32 %v2346, %v2646
        %v2652 = vmul.f32 %v2352, %v2646
        %v2653 = vmul.f32 %v2442, %v2650
        %v2654 = vmul.f32 %v2448, %v2650
        %v2655 = vadd.f32 %v2639, %v2651
        %v2656 = vadd.f32 %v2640, %v2652
        %v2657 = vadd.f32 %v2641, %v2653
        %v2658 = vadd.f32 %v2642, %v2654
        %v2659 = vlaneseq
        %v2660 = vshrl.u32 %v2659, 7
        %v2661 = vsub.s32 3, %v2660
        %v2662 = vrot.slane %v2613, %v2661
        %v2663 = vlaneseq
        %v2664 = vshrl.u32 %v2663, 7
        %v2665 = vsub.s32 3, %v2664
        %v2666 = vrot.slane %v2614, %v2665
        %v2667 = vmul.f32 %v2358, %v2662
        %v2668 = vmul.f32 %v2364, %v2662
        %v2669 = vmul.f32 %v2454, %v2666
        %v2670 = vmul.f32 %v2460, %v2666
        %v2671 = vadd.f32 %v2655, %v2667
        %v2672 = vadd.f32 %v2656, %v2668
        %v2673 = vadd.f32 %v2657, %v2669
        %v2674 = vadd.f32 %v2658, %v2670
        %v2675 = vlaneseq
        %v2676 = vshrl.u32 %v2675, 7
        %v2677 = vsub.s32 4, %v2676
        %v2678 = vrot.slane %v2613, %v2677
        %v2679 = vlaneseq
        %v2680 = vshrl.u32 %v2679, 7
        %v2681 = vsub.s32 4, %v2680
        %v2682 = vrot.slane %v2614, %v2681
        %v2683 = vmul.f32 %v2370, %v2678
        %v2684 = vmul.f32 %v2376, %v2678
        %v2685 = vmul.f32 %v2466, %v2682
        %v2686 = vmul.f32 %v2472, %v2682
        %v2687 = vadd.f32 %v2671, %v2683
        %v2688 = vadd.f32 %v2672, %v2684
        %v2689 = vadd.f32 %v2673, %v2685
        %v2690 = vadd.f32 %v2674, %v2686
        %v2691 = vlaneseq
        %v2692 = vshrl.u32 %v2691, 7
        %v2693 = vsub.s32 5, %v2692
        %v2694 = vrot.slane %v2613, %v2693
        %v2695 = vlaneseq
        %v2696 = vshrl.u32 %v2695, 7
        %v2697 = vsub.s32 5, %v2696
        %v2698 = vrot.slane %v2614, %v2697
        %v2699 = vmul.f32 %v2382, %v2694
        %v2700 = vmul.f32 %v2388, %v2694
        %v2701 = vmul.f32 %v2478, %v2698
        %v2702 = vmul.f32 %v2484, %v2698
        %v2703 = vadd.f32 %v2687, %v2699
        %v2704 = vadd.f32 %v2688, %v2700
        %v2705 = vadd.f32 %v2689, %v2701
        %v2706 = vadd.f32 %v2690, %v2702
        %v2707 = vlaneseq
        %v2708 = vshrl.u32 %v2707, 7
        %v2709 = vsub.s32 6, %v2708
        %v2710 = vrot.slane %v2613, %v2709
        %v2711 = vlaneseq
        %v2712 = vshrl.u32 %v2711, 7
        %v2713 = vsub.s32 6, %v2712
        %v2714 = vrot.slane %v2614, %v2713
        %v2715 = vmul.f32 %v2394, %v2710
        %v2716 = vmul.f32 %v2400, %v2710
        %v2717 = vmul.f32 %v2490, %v2714
        %v2718 = vmul.f32 %v2496, %v2714
        %v2719 = vadd.f32 %v2703, %v2715
        %v2720 = vadd.f32 %v2704, %v2716
        %v2721 = vadd.f32 %v2705, %v2717
        %v2722 = vadd.f32 %v2706, %v2718
        %v2723 = vlaneseq
        %v2724 = vshrl.u32 %v2723, 7
        %v2725 = vsub.s32 7, %v2724
        %v2726 = vrot.slane %v2613, %v2725
        %v2727 = vlaneseq
        %v2728 = vshrl.u32 %v2727, 7
        %v2729 = vsub.s32 7, %v2728
        %v2730 = vrot.slane %v2614, %v2729
        %v2731 = vmul.f32 %v2406, %v2726
        %v2732 = vmul.f32 %v2412, %v2726
        %v2733 = vmul.f32 %v2502, %v2730
        %v2734 = vmul.f32 %v2508, %v2730
        %v2735 = vadd.f32 %v2719, %v2731
        %v2736 = vadd.f32 %v2720, %v2732
        %v2737 = vadd.f32 %v2721, %v2733
        %v2738 = vadd.f32 %v2722, %v2734
        %v2739 = vld [vmem:[%s283] sm:$0xf]
        %v2740 = vld [vmem:[%s283 + $0x4] sm:$0xf]
        %v2745 = vcombine.high %v2735, %v2735
        %v2746 = vcombine.high %v2736, %v2736
        %v2747 = vcombine.high %v2737, %v2737
        %v2748 = vcombine.high %v2738, %v2738
        %v2753 = vmul.f32 %v2735, %v2739
        %v2754 = vmul.f32 %v2745, %v2739
        %v2755 = vmul.f32 %v2736, %v2739
        %v2756 = vmul.f32 %v2746, %v2739
        %v2757 = vmul.f32 %v2737, %v2740
        %v2758 = vmul.f32 %v2747, %v2740
        %v2759 = vmul.f32 %v2738, %v2740
        %v2760 = vmul.f32 %v2748, %v2740
        %vm2761 = vcmask 1043456
        %v2762 = vsel %vm2761, %v2753, 0.0
        %v2763 = vrot.slane %v2762, 4
        %v2764 = vadd.f32 %v2762, %v2763
        %v2765 = vrot.slane %v2764, 2
        %v2766 = vadd.f32 %v2764, %v2765
        %v2767 = vrot.slane %v2766, 1
        %v2768 = vadd.f32 %v2766, %v2767
        %v2769 = vsel %vm2761, %v2754, 0.0
        %v2770 = vrot.slane %v2769, 4
        %v2771 = vadd.f32 %v2769, %v2770
        %v2772 = vrot.slane %v2771, 2
        %v2773 = vadd.f32 %v2771, %v2772
        %v2774 = vrot.slane %v2773, 1
        %v2775 = vadd.f32 %v2773, %v2774
        %v2776 = vsel %vm2761, %v2755, 0.0
        %v2777 = vrot.slane %v2776, 4
        %v2778 = vadd.f32 %v2776, %v2777
        %v2779 = vrot.slane %v2778, 2
        %v2780 = vadd.f32 %v2778, %v2779
        %v2781 = vrot.slane %v2780, 1
        %v2782 = vadd.f32 %v2780, %v2781
        %v2783 = vsel %vm2761, %v2756, 0.0
        %v2784 = vrot.slane %v2783, 4
        %v2785 = vadd.f32 %v2783, %v2784
        %v2786 = vrot.slane %v2785, 2
        %v2787 = vadd.f32 %v2785, %v2786
        %v2788 = vrot.slane %v2787, 1
        %v2789 = vadd.f32 %v2787, %v2788
        %v2790 = vsel %vm2761, %v2757, 0.0
        %v2791 = vrot.slane %v2790, 4
        %v2792 = vadd.f32 %v2790, %v2791
        %v2793 = vrot.slane %v2792, 2
        %v2794 = vadd.f32 %v2792, %v2793
        %v2795 = vrot.slane %v2794, 1
        %v2796 = vadd.f32 %v2794, %v2795
        %v2797 = vsel %vm2761, %v2758, 0.0
        %v2798 = vrot.slane %v2797, 4
        %v2799 = vadd.f32 %v2797, %v2798
        %v2800 = vrot.slane %v2799, 2
        %v2801 = vadd.f32 %v2799, %v2800
        %v2802 = vrot.slane %v2801, 1
        %v2803 = vadd.f32 %v2801, %v2802
        %v2804 = vsel %vm2761, %v2759, 0.0
        %v2805 = vrot.slane %v2804, 4
        %v2806 = vadd.f32 %v2804, %v2805
        %v2807 = vrot.slane %v2806, 2
        %v2808 = vadd.f32 %v2806, %v2807
        %v2809 = vrot.slane %v2808, 1
        %v2810 = vadd.f32 %v2808, %v2809
        %v2811 = vsel %vm2761, %v2760, 0.0
        %v2812 = vrot.slane %v2811, 4
        %v2813 = vadd.f32 %v2811, %v2812
        %v2814 = vrot.slane %v2813, 2
        %v2815 = vadd.f32 %v2813, %v2814
        %v2816 = vrot.slane %v2815, 1
        %v2817 = vadd.f32 %v2815, %v2816
        %vm2826 = vcmask 1041409
        %v2827 = vsel %vm2826, %v2775, %v2768
        %vm2828 = vcmask 1042434
        %v2829 = vsel %vm2828, %v2782, %v2827
        %vm2830 = vcmask 1043459
        %v2831 = vsel %vm2830, %v2789, %v2829
        %v2832 = vsel %vm2826, %v2803, %v2796
        %v2833 = vsel %vm2828, %v2810, %v2832
        %v2834 = vsel %vm2830, %v2817, %v2833
        %2837 = vst [vmem:[%s313] sm:$0xf] %v2831
        %2838 = vst [vmem:[%s313 + $0x4] sm:$0xf] %v2834
        %s2839 = sand.u32 %s125, 1
        %s2840 = scalar_lea.sflag [#allocation5], %s2839
        %s2841 = sand.u32 %s125, 1
        %s2842 = smul.addr %s2841, 8
        %s2843 = scalar_lea.vmem [#allocation4], %s2842
        // Predicated region
        $region112: #{tpu_custom_call.1} parent=102 // pred_check
          %p2844 = pneg %p135
        $region113: #{tpu_custom_call.1} parent=102 // pred_check_branch
          %2846 = sbr.rel (%p2844) target = $region115
        $region114: #{tpu_custom_call.1} parent=102 // pred_region
          %s2848 = ssub.s32 128, 128
          %2849 = vsyncadd %s2840, %s2848
          %s2850 = smul.addr %s18, 64
          %s2851 = scalar_lea.hbm %s4, %s2850
          %s2852 = sshll.u32 %s2843, 4
          %s2853 = int_to_ptr.vmem [resolvable:$true] %s2852
          %2858 = dma.vmem_to_hbm [thread:$0]  %s2853, 128, %s2851, %s2840, 64, 128, 4
        $region115: #{tpu_custom_call.1} parent=102 // pred_fallthru
          _
      $region103: #{tpu_custom_call.1} parent=5 // pred_fallthru
        _
      %p2859 = scmp.le.s32.totalorder 2, %s13
      // Predicated region
      $region116: #{tpu_custom_call.1} parent=5 // pred_check
        %p2860 = pneg %p2859
      $region117: #{tpu_custom_call.1} parent=5 // pred_check_branch
        %2862 = sbr.rel (%p2860) target = $region119
      $region118: #{tpu_custom_call.1} parent=5 // pred_region
        %s2863 = ssub.s32 %s13, 2
        // Predicated region
        $region120: #{tpu_custom_call.1} parent=118 // pred_check
          %p2864 = pneg %p141
        $region121: #{tpu_custom_call.1} parent=118 // pred_check_branch
          %2866 = sbr.rel (%p2864) target = $region123
        $region122: #{tpu_custom_call.1} parent=118 // pred_region
          %s2867 = sand.u32 %s126, 1
          %s2868 = scalar_lea.sflag [#allocation5], %s2867
          %s2869 = sand.u32 %s126, 1
          %s2870 = smul.addr %s2869, 8
          %s2871 = scalar_lea.vmem [#allocation4], %s2870
          %2872 = dma.done %s2868, 128
        $region123: #{tpu_custom_call.1} parent=118 // pred_fallthru
          _
      $region119: #{tpu_custom_call.1} parent=5 // pred_fallthru
        _
    $region6: #{tpu_custom_call.1} parent=1 // loop_footer
      %s17 = sadd.s32 1, %s13
    $region7: #{tpu_custom_call.1} parent=1 // loop_footer_branch
      %12 = sbr.rel target = $region3
    $region8: #{tpu_custom_call.1} parent=1 // loop_exit
      _
    %2873 = vsyncpa [#allocation5], 1
    %s2874 = scalar_lea.sflag [#allocation5], 1
    %2875 = vsyncpa %s2874, 1

</llo_original>
